<compile_context>
chip_gen: v7x
topology: tpu7x:2x2x1
jax: 0.10.0
libtpu: 0.0.40
codegen_flags: <defaults>
</compile_context>

<pallas_src>
import math

import jax
import jax.numpy as jnp
from jax.experimental import pallas as pl
from jax.experimental.pallas import tpu as pltpu

NUM_HEADS = 2


def _round_up(x, m):
    return (x + m - 1) // m * m


def attention_node_kernel(
    x_ref,        # [S, D, TB] bf16  messages, batch on lanes
    tfl_ref,      # [D, TB]    bf16  time_features[-1]
    nbias_ref,    # [S, TB]    f32   additive score bias (-1e30 where padded; key-0 unmask applied)
    inval_ref,    # [1, TB]    f32   1.0 where the node has no valid neighbors
    wq_ref, bq_ref,        # [D, D] bf16 (1/sqrt(dh) folded in), [D, 1] f32
    wk_ref,                # [D, D] bf16  (k bias dropped: constant over keys -> softmax-invariant)
    wv_ref,                # [D, D] bf16  (v bias folded into bof)
    wof_ref, bof_ref,      # [D, D] bf16 = (Wo @ Wfc1a)^T, [D, 1] f32 = ((bv@Wo + bo) @ Wfc1a)^T
    wfc1b_ref, bfc1_ref,   # [D, D] bf16 = Wfc1b^T, [D, 1] f32
    wfc2_ref, bfc2_ref,    # [D, D] bf16 = Wfc2^T,  [D, 1] f32
    out_ref,      # [D, TB]    f32
):
    S, D, TB = x_ref.shape
    dh = D // NUM_HEADS

    last_msg = x_ref[S - 1]                                       # [D, TB] bf16  (messages[-1])
    # query = (messages + time_features)[-1]; scaling pre-folded into wq/bq.
    q_in = last_msg + tfl_ref[...]                                # bf16
    q_t = jnp.dot(wq_ref[...], q_in,
                  preferred_element_type=jnp.float32) + bq_ref[...]     # [D, TB] f32

    nbias = nbias_ref[...]                                        # [S, TB] f32

    # ---- scores: per-key-step K projection on the MXU, per-head dh reduce on the VPU ----
    rows = [[] for _ in range(NUM_HEADS)]
    for s in range(S):                                            # static unroll (S small)
        k_s = jnp.dot(wk_ref[...], x_ref[s],
                      preferred_element_type=jnp.float32)         # [D, TB] f32
        prod = q_t * k_s
        for h in range(NUM_HEADS):
            rows[h].append(jnp.sum(prod[h * dh:(h + 1) * dh], axis=0, keepdims=True))  # [1, TB]

    attns = []
    for h in range(NUM_HEADS):
        scores = jnp.concatenate(rows[h], axis=0) + nbias         # [S, TB] f32
        m = jnp.max(scores, axis=0, keepdims=True)                # finite: key 0 of all-padded rows unmasked
        p = jnp.exp(scores - m)
        l = jnp.sum(p, axis=0, keepdims=True)
        attns.append(p * pl.reciprocal(l, approx=True))           # [S, TB]

    # ---- context: per-key-step V projection on the MXU, weighted accumulate on the VPU ----
    ctx_h = [jnp.zeros((dh, TB), jnp.float32) for _ in range(NUM_HEADS)]
    for s in range(S):
        v_s = jnp.dot(wv_ref[...], x_ref[s],
                      preferred_element_type=jnp.float32)         # [D, TB] f32
        for h in range(NUM_HEADS):
            ctx_h[h] = ctx_h[h] + attns[h][s:s + 1, :] * v_s[h * dh:(h + 1) * dh]
    ctx = jnp.concatenate(ctx_h, axis=0)                          # [D, TB] f32 (head concat = row stack)

    # ---- out-proj folded into fc1a; MergeLayer: fc2(relu(fc1a(attn_out) + fc1b(messages[-1]) + b)) ----
    t1 = jnp.dot(wof_ref[...], ctx.astype(jnp.bfloat16),
                 preferred_element_type=jnp.float32) + bof_ref[...]
    # attn_output.masked_fill(invalid_neighborhood_mask, 0): row masking commutes with fc1a.
    t1 = jnp.where(inval_ref[...] > 0.5, 0.0, t1)
    t2 = jnp.dot(wfc1b_ref[...], last_msg,
                 preferred_element_type=jnp.float32) + bfc1_ref[...]
    h1 = jnp.maximum(t1 + t2, 0.0)
    out = jnp.dot(wfc2_ref[...], h1.astype(jnp.bfloat16),
                  preferred_element_type=jnp.float32) + bfc2_ref[...]
    out_ref[...] = out.astype(out_ref.dtype)                      # [D, TB]: lane-dense store


def attention_node_forward(messages, time_features, neighbors_padding_mask, params, *, block_b=512):
    """messages/time_features: [S, B, D] f32; neighbors_padding_mask: [B, S] bool. Returns [B, D] f32."""
    S, B, D = messages.shape
    assert D % NUM_HEADS == 0, "embed dim must be divisible by num_heads"

    # --- wrapper-side preprocessing (single fused cast+transpose pass over messages) ---
    x_t = jnp.transpose(messages, (0, 2, 1)).astype(jnp.bfloat16)                 # [S, D, B]
    tfl_t = jnp.transpose(time_features[S - 1]).astype(jnp.bfloat16)              # [D, B] (only row used)

    mask = neighbors_padding_mask.astype(jnp.bool_)                               # [B, S], True = padded
    invalid = jnp.all(mask, axis=1)                                               # [B]
    # neighbors_padding_mask[invalid, 0] = False  (functional equivalent of the in-place write)
    eff_mask = mask.at[:, 0].set(jnp.where(invalid, False, mask[:, 0]))
    neg_bias = jnp.where(eff_mask, jnp.float32(-1e30), jnp.float32(0.0)).T        # [S, B]
    invalid_f = invalid.astype(jnp.float32)[None, :]                              # [1, B]

    # --- batch tiling: TB multiple of 128 (lane width); keep >=2 grid steps on v7x when possible ---
    TB = min(_round_up(max(block_b, 128), 128), _round_up(B, 128))
    Bp = _round_up(B, TB)
    pad = Bp - B
    if pad:
        x_t = jnp.pad(x_t, ((0, 0), (0, 0), (0, pad)))
        tfl_t = jnp.pad(tfl_t, ((0, 0), (0, pad)))
        neg_bias = jnp.pad(neg_bias, ((0, 0), (0, pad)))   # padded columns stay unmasked -> finite garbage
        invalid_f = jnp.pad(invalid_f, ((0, 0), (0, pad)))

    weight_args = (
        params["wq_t"], params["bq_t"], params["wk_t"], params["wv_t"],
        params["wof_t"], params["bof_t"], params["wfc1b_t"], params["bfc1_t"],
        params["wfc2_t"], params["bfc2_t"],
    )
    args = (x_t, tfl_t, neg_bias, invalid_f) + weight_args

    def resident(a):  # constant index map: weight block never changes -> stays VMEM-resident
        return pl.BlockSpec(a.shape, lambda i, nd=a.ndim: (0,) * nd)

    in_specs = [
        pl.BlockSpec((S, D, TB), lambda i: (0, 0, i)),   # messages tile (batch on lanes)
        pl.BlockSpec((D, TB), lambda i: (0, i)),          # time_features[-1] tile
        pl.BlockSpec((S, TB), lambda i: (0, i)),          # additive score-bias tile
        pl.BlockSpec((1, TB), lambda i: (0, i)),          # invalid-row flags
    ] + [resident(a) for a in weight_args]

    out_t = pl.pallas_call(
        attention_node_kernel,
        out_shape=jax.ShapeDtypeStruct((D, Bp), jnp.float32),     # lane-dense transposed output
        grid=(Bp // TB,),
        in_specs=in_specs,
        out_specs=pl.BlockSpec((D, TB), lambda i: (0, i)),
        compiler_params=pltpu.CompilerParams(dimension_semantics=("parallel",)),
    )(*args)

    out = jnp.transpose(out_t)                                    # [Bp, D]
    return out[:B] if pad else out


def make_raw_params(key, d):
    """f32 parameters in the math orientation of the PyTorch module (weights pre-rounded to the bf16 grid)."""
    ks = jax.random.split(key, 13)
    s = 0.1

    def w(k, shape):
        return (s * jax.random.normal(k, shape, jnp.float32)).astype(jnp.bfloat16).astype(jnp.float32)

    def b(k, shape):
        return 0.05 * jax.random.normal(k, shape, jnp.float32)

    return {
        "Wq": w(ks[0], (d, d)), "bq": b(ks[1], (d,)),
        "Wk": w(ks[2], (d, d)), "bk": b(ks[3], (d,)),
        "Wv": w(ks[4], (d, d)), "bv": b(ks[5], (d,)),
        "Wo": w(ks[6], (d, d)), "bo": b(ks[7], (d,)),
        "Wfc1a": w(ks[8], (d, d)), "Wfc1b": w(ks[9], (d, d)), "bfc1": b(ks[10], (d,)),
        "Wfc2": w(ks[11], (d, d)), "bfc2": b(ks[12], (d,)),
    }


def pack_params(raw):
    """Static preprocessing: transpose to the lane-major kernel layout, fold scale / Wo / biases, cast bf16."""
    f32, bf16 = jnp.float32, jnp.bfloat16
    d = raw["Wq"].shape[0]
    scale = 1.0 / math.sqrt(d // NUM_HEADS)
    col = lambda v: v.astype(f32).reshape(-1, 1)
    w_of = raw["Wo"] @ raw["Wfc1a"]                               # Wo folded into the attn half of fc1 (exact)
    b_of = (raw["bv"] @ raw["Wo"] + raw["bo"]) @ raw["Wfc1a"]     # v / out-proj biases folded too
    return {
        "wq_t": (scale * raw["Wq"]).T.astype(bf16), "bq_t": col(scale * raw["bq"]),
        "wk_t": raw["Wk"].T.astype(bf16),   # bk dropped: constant over keys -> softmax-invariant
        "wv_t": raw["Wv"].T.astype(bf16),
        "wof_t": w_of.T.astype(bf16), "bof_t": col(b_of),
        "wfc1b_t": raw["Wfc1b"].T.astype(bf16), "bfc1_t": col(raw["bfc1"]),
        "wfc2_t": raw["Wfc2"].T.astype(bf16), "bfc2_t": col(raw["bfc2"]),
    }


def reference_forward(messages, time_features, neighbors_padding_mask, raw):
    """Pure-JAX mirror of the PyTorch module (f32), used only for a tolerance check."""
    S, B, D = messages.shape
    dh = D // NUM_HEADS
    scale = 1.0 / math.sqrt(dh)
    msgs = messages.astype(jnp.float32)
    q_in = msgs[-1] + time_features[-1].astype(jnp.float32)                  # [B, D]

    mask = neighbors_padding_mask.astype(jnp.bool_)
    invalid = jnp.all(mask, axis=1, keepdims=True)                           # [B, 1]
    mask = mask.at[:, 0].set(jnp.where(invalid[:, 0], False, mask[:, 0]))

    q = (q_in @ raw["Wq"] + raw["bq"]) * scale                               # [B, D]
    k = msgs @ raw["Wk"] + raw["bk"]                                         # [S, B, D]
    v = msgs @ raw["Wv"] + raw["bv"]                                         # [S, B, D]
    heads = []
    for h in range(NUM_HEADS):
        sl = slice(h * dh, (h + 1) * dh)
        scores = jnp.einsum("bd,sbd->bs", q[:, sl], k[:, :, sl])             # [B, S]
        scores = jnp.where(mask, -jnp.inf, scores)
        attn = jax.nn.softmax(scores, axis=-1)
        heads.append(jnp.einsum("bs,sbd->bd", attn, v[:, :, sl]))
    ctx = jnp.concatenate(heads, axis=-1)                                    # [B, D]
    attn_out = ctx @ raw["Wo"] + raw["bo"]
    attn_out = jnp.where(invalid, 0.0, attn_out)
    h1 = jax.nn.relu(attn_out @ raw["Wfc1a"] + msgs[-1] @ raw["Wfc1b"] + raw["bfc1"])
    return h1 @ raw["Wfc2"] + raw["bfc2"]


if __name__ == "__main__":
    S, B, D = 8, 250, 32   # seq (num messages), batch (num nodes, non multiple of 128), n_node_features
    key = jax.random.PRNGKey(0)
    k_msg, k_tf, k_par = jax.random.split(key, 3)

    messages = jax.random.normal(k_msg, (S, B, D), jnp.float32)
    time_features = jax.random.normal(k_tf, (S, B, D), jnp.float32)

    # padding mask [B, S]: True = padded. Node 3 fully padded (exercises invalid-neighborhood path).
    mask = jnp.zeros((B, S), jnp.bool_)
    mask = mask.at[:, S // 2:].set(True)
    mask = mask.at[3, :].set(True)

    raw = make_raw_params(k_par, D)
    params = pack_params(raw)

    out = attention_node_forward(messages, time_features, mask, params, block_b=128)  # 2 grid steps
    out = jax.block_until_ready(out)
    assert out.shape == (B, D)
    assert bool(jnp.all(jnp.isfinite(out)))

    # tolerance check against a pure-JAX mirror of the module, using the same bf16-rounded inputs.
    msgs_r = messages.astype(jnp.bfloat16).astype(jnp.float32)
    tf_r = time_features.astype(jnp.bfloat16).astype(jnp.float32)
    ref = reference_forward(msgs_r, tf_r, mask, raw)
    err = float(jnp.max(jnp.abs(out - ref)))
    assert err < 8e-2, f"max abs error vs reference: {err}"
    print("KERNEL_OK")
</pallas_src>

<mosaic_0001>
module attributes {stable_mosaic.version = 11 : i64} {
  func.func @attention_node_kernel(%arg0: i32, %arg1: memref<8x32x128xbf16, #tpu.memory_space<vmem>>, %arg2: memref<32x128xbf16, #tpu.memory_space<vmem>>, %arg3: memref<8x128xf32, #tpu.memory_space<vmem>>, %arg4: memref<1x128xf32, #tpu.memory_space<vmem>>, %arg5: memref<32x32xbf16, #tpu.memory_space<vmem>>, %arg6: memref<32x1xf32, #tpu.memory_space<vmem>>, %arg7: memref<32x32xbf16, #tpu.memory_space<vmem>>, %arg8: memref<32x32xbf16, #tpu.memory_space<vmem>>, %arg9: memref<32x32xbf16, #tpu.memory_space<vmem>>, %arg10: memref<32x1xf32, #tpu.memory_space<vmem>>, %arg11: memref<32x32xbf16, #tpu.memory_space<vmem>>, %arg12: memref<32x1xf32, #tpu.memory_space<vmem>>, %arg13: memref<32x32xbf16, #tpu.memory_space<vmem>>, %arg14: memref<32x1xf32, #tpu.memory_space<vmem>>, %arg15: memref<32x128xf32, #tpu.memory_space<vmem>>) attributes {dimension_semantics = [#tpu.dimension_semantics<parallel>], iteration_bounds = array<i64: 2>, scalar_prefetch = 0 : i64, scratch_operands = 0 : i64, tpu.core_type = #tpu.core_type<tc>, window_params = [{transform_indices = @transform_0, window_bounds = array<i64: 8, 32, 128>}, {transform_indices = @transform_1, window_bounds = array<i64: 32, 128>}, {transform_indices = @transform_2, window_bounds = array<i64: 8, 128>}, {transform_indices = @transform_3, window_bounds = array<i64: 1, 128>}, {pipeline_mode = #tpu.pipeline_mode<synchronous>, transform_indices = @transform_4, window_bounds = array<i64: 32, 32>}, {pipeline_mode = #tpu.pipeline_mode<synchronous>, transform_indices = @transform_5, window_bounds = array<i64: 32, 1>}, {pipeline_mode = #tpu.pipeline_mode<synchronous>, transform_indices = @transform_6, window_bounds = array<i64: 32, 32>}, {pipeline_mode = #tpu.pipeline_mode<synchronous>, transform_indices = @transform_7, window_bounds = array<i64: 32, 32>}, {pipeline_mode = #tpu.pipeline_mode<synchronous>, transform_indices = @transform_8, window_bounds = array<i64: 32, 32>}, {pipeline_mode = #tpu.pipeline_mode<synchronous>, transform_indices = @transform_9, window_bounds = array<i64: 32, 1>}, {pipeline_mode = #tpu.pipeline_mode<synchronous>, transform_indices = @transform_10, window_bounds = array<i64: 32, 32>}, {pipeline_mode = #tpu.pipeline_mode<synchronous>, transform_indices = @transform_11, window_bounds = array<i64: 32, 1>}, {pipeline_mode = #tpu.pipeline_mode<synchronous>, transform_indices = @transform_12, window_bounds = array<i64: 32, 32>}, {pipeline_mode = #tpu.pipeline_mode<synchronous>, transform_indices = @transform_13, window_bounds = array<i64: 32, 1>}, {transform_indices = @transform_14, window_bounds = array<i64: 32, 128>}]} {
    %c7 = arith.constant 7 : index
    %c0 = arith.constant 0 : index
    %c0_0 = arith.constant 0 : index
    %0 = vector.load %arg1[%c7, %c0, %c0_0] : memref<8x32x128xbf16, #tpu.memory_space<vmem>>, vector<1x32x128xbf16>
    %1 = vector.shape_cast %0 : vector<1x32x128xbf16> to vector<32x128xbf16>
    %c0_1 = arith.constant 0 : index
    %c0_2 = arith.constant 0 : index
    %2 = vector.load %arg2[%c0_1, %c0_2] : memref<32x128xbf16, #tpu.memory_space<vmem>>, vector<32x128xbf16>
    %3 = arith.addf %1, %2 : vector<32x128xbf16>
    %c0_3 = arith.constant 0 : index
    %c0_4 = arith.constant 0 : index
    %4 = vector.load %arg5[%c0_3, %c0_4] : memref<32x32xbf16, #tpu.memory_space<vmem>>, vector<32x32xbf16>
    %cst = arith.constant dense<0.000000e+00> : vector<32x128xf32>
    %5 = tpu.matmul %4, %3, %cst {dimension_numbers = #tpu.dot_dimension_numbers<[1], [0], [0], [1], [0, 0, 1, 1], [], []>} : vector<32x32xbf16>, vector<32x128xbf16>, vector<32x128xf32> -> vector<32x128xf32>
    %c0_5 = arith.constant 0 : index
    %c0_6 = arith.constant 0 : index
    %6 = vector.load %arg6[%c0_5, %c0_6] : memref<32x1xf32, #tpu.memory_space<vmem>>, vector<32x1xf32>
    %7 = vector.broadcast %6 : vector<32x1xf32> to vector<32x128xf32>
    %8 = arith.addf %5, %7 : vector<32x128xf32>
    %c0_7 = arith.constant 0 : index
    %c0_8 = arith.constant 0 : index
    %9 = vector.load %arg3[%c0_7, %c0_8] : memref<8x128xf32, #tpu.memory_space<vmem>>, vector<8x128xf32>
    %c0_9 = arith.constant 0 : index
    %c0_10 = arith.constant 0 : index
    %10 = vector.load %arg7[%c0_9, %c0_10] : memref<32x32xbf16, #tpu.memory_space<vmem>>, vector<32x32xbf16>
    %c0_11 = arith.constant 0 : index
    %c0_12 = arith.constant 0 : index
    %c0_13 = arith.constant 0 : index
    %11 = vector.load %arg1[%c0_11, %c0_12, %c0_13] : memref<8x32x128xbf16, #tpu.memory_space<vmem>>, vector<1x32x128xbf16>
    %12 = vector.shape_cast %11 : vector<1x32x128xbf16> to vector<32x128xbf16>
    %cst_14 = arith.constant dense<0.000000e+00> : vector<32x128xf32>
    %13 = tpu.matmul %10, %12, %cst_14 {dimension_numbers = #tpu.dot_dimension_numbers<[1], [0], [0], [1], [0, 0, 1, 1], [], []>} : vector<32x32xbf16>, vector<32x128xbf16>, vector<32x128xf32> -> vector<32x128xf32>
    %14 = arith.mulf %8, %13 : vector<32x128xf32>
    %15 = vector.extract_strided_slice %14 {offsets = [0, 0], sizes = [16, 128], strides = [1, 1]} : vector<32x128xf32> to vector<16x128xf32>
    %cst_15 = arith.constant dense<0.000000e+00> : vector<128xf32>
    %16 = vector.multi_reduction <add>, %15, %cst_15 [0] : vector<16x128xf32> to vector<128xf32>
    %17 = vector.shape_cast %16 : vector<128xf32> to vector<1x128xf32>
    %18 = vector.extract_strided_slice %14 {offsets = [16, 0], sizes = [16, 128], strides = [1, 1]} : vector<32x128xf32> to vector<16x128xf32>
    %cst_16 = arith.constant dense<0.000000e+00> : vector<128xf32>
    %19 = vector.multi_reduction <add>, %18, %cst_16 [0] : vector<16x128xf32> to vector<128xf32>
    %20 = vector.shape_cast %19 : vector<128xf32> to vector<1x128xf32>
    %c0_17 = arith.constant 0 : index
    %c0_18 = arith.constant 0 : index
    %21 = vector.load %arg7[%c0_17, %c0_18] : memref<32x32xbf16, #tpu.memory_space<vmem>>, vector<32x32xbf16>
    %c1 = arith.constant 1 : index
    %c0_19 = arith.constant 0 : index
    %c0_20 = arith.constant 0 : index
    %22 = vector.load %arg1[%c1, %c0_19, %c0_20] : memref<8x32x128xbf16, #tpu.memory_space<vmem>>, vector<1x32x128xbf16>
    %23 = vector.shape_cast %22 : vector<1x32x128xbf16> to vector<32x128xbf16>
    %cst_21 = arith.constant dense<0.000000e+00> : vector<32x128xf32>
    %24 = tpu.matmul %21, %23, %cst_21 {dimension_numbers = #tpu.dot_dimension_numbers<[1], [0], [0], [1], [0, 0, 1, 1], [], []>} : vector<32x32xbf16>, vector<32x128xbf16>, vector<32x128xf32> -> vector<32x128xf32>
    %25 = arith.mulf %8, %24 : vector<32x128xf32>
    %26 = vector.extract_strided_slice %25 {offsets = [0, 0], sizes = [16, 128], strides = [1, 1]} : vector<32x128xf32> to vector<16x128xf32>
    %cst_22 = arith.constant dense<0.000000e+00> : vector<128xf32>
    %27 = vector.multi_reduction <add>, %26, %cst_22 [0] : vector<16x128xf32> to vector<128xf32>
    %28 = vector.shape_cast %27 : vector<128xf32> to vector<1x128xf32>
    %29 = vector.extract_strided_slice %25 {offsets = [16, 0], sizes = [16, 128], strides = [1, 1]} : vector<32x128xf32> to vector<16x128xf32>
    %cst_23 = arith.constant dense<0.000000e+00> : vector<128xf32>
    %30 = vector.multi_reduction <add>, %29, %cst_23 [0] : vector<16x128xf32> to vector<128xf32>
    %31 = vector.shape_cast %30 : vector<128xf32> to vector<1x128xf32>
    %c0_24 = arith.constant 0 : index
    %c0_25 = arith.constant 0 : index
    %32 = vector.load %arg7[%c0_24, %c0_25] : memref<32x32xbf16, #tpu.memory_space<vmem>>, vector<32x32xbf16>
    %c2 = arith.constant 2 : index
    %c0_26 = arith.constant 0 : index
    %c0_27 = arith.constant 0 : index
    %33 = vector.load %arg1[%c2, %c0_26, %c0_27] : memref<8x32x128xbf16, #tpu.memory_space<vmem>>, vector<1x32x128xbf16>
    %34 = vector.shape_cast %33 : vector<1x32x128xbf16> to vector<32x128xbf16>
    %cst_28 = arith.constant dense<0.000000e+00> : vector<32x128xf32>
    %35 = tpu.matmul %32, %34, %cst_28 {dimension_numbers = #tpu.dot_dimension_numbers<[1], [0], [0], [1], [0, 0, 1, 1], [], []>} : vector<32x32xbf16>, vector<32x128xbf16>, vector<32x128xf32> -> vector<32x128xf32>
    %36 = arith.mulf %8, %35 : vector<32x128xf32>
    %37 = vector.extract_strided_slice %36 {offsets = [0, 0], sizes = [16, 128], strides = [1, 1]} : vector<32x128xf32> to vector<16x128xf32>
    %cst_29 = arith.constant dense<0.000000e+00> : vector<128xf32>
    %38 = vector.multi_reduction <add>, %37, %cst_29 [0] : vector<16x128xf32> to vector<128xf32>
    %39 = vector.shape_cast %38 : vector<128xf32> to vector<1x128xf32>
    %40 = vector.extract_strided_slice %36 {offsets = [16, 0], sizes = [16, 128], strides = [1, 1]} : vector<32x128xf32> to vector<16x128xf32>
    %cst_30 = arith.constant dense<0.000000e+00> : vector<128xf32>
    %41 = vector.multi_reduction <add>, %40, %cst_30 [0] : vector<16x128xf32> to vector<128xf32>
    %42 = vector.shape_cast %41 : vector<128xf32> to vector<1x128xf32>
    %c0_31 = arith.constant 0 : index
    %c0_32 = arith.constant 0 : index
    %43 = vector.load %arg7[%c0_31, %c0_32] : memref<32x32xbf16, #tpu.memory_space<vmem>>, vector<32x32xbf16>
    %c3 = arith.constant 3 : index
    %c0_33 = arith.constant 0 : index
    %c0_34 = arith.constant 0 : index
    %44 = vector.load %arg1[%c3, %c0_33, %c0_34] : memref<8x32x128xbf16, #tpu.memory_space<vmem>>, vector<1x32x128xbf16>
    %45 = vector.shape_cast %44 : vector<1x32x128xbf16> to vector<32x128xbf16>
    %cst_35 = arith.constant dense<0.000000e+00> : vector<32x128xf32>
    %46 = tpu.matmul %43, %45, %cst_35 {dimension_numbers = #tpu.dot_dimension_numbers<[1], [0], [0], [1], [0, 0, 1, 1], [], []>} : vector<32x32xbf16>, vector<32x128xbf16>, vector<32x128xf32> -> vector<32x128xf32>
    %47 = arith.mulf %8, %46 : vector<32x128xf32>
    %48 = vector.extract_strided_slice %47 {offsets = [0, 0], sizes = [16, 128], strides = [1, 1]} : vector<32x128xf32> to vector<16x128xf32>
    %cst_36 = arith.constant dense<0.000000e+00> : vector<128xf32>
    %49 = vector.multi_reduction <add>, %48, %cst_36 [0] : vector<16x128xf32> to vector<128xf32>
    %50 = vector.shape_cast %49 : vector<128xf32> to vector<1x128xf32>
    %51 = vector.extract_strided_slice %47 {offsets = [16, 0], sizes = [16, 128], strides = [1, 1]} : vector<32x128xf32> to vector<16x128xf32>
    %cst_37 = arith.constant dense<0.000000e+00> : vector<128xf32>
    %52 = vector.multi_reduction <add>, %51, %cst_37 [0] : vector<16x128xf32> to vector<128xf32>
    %53 = vector.shape_cast %52 : vector<128xf32> to vector<1x128xf32>
    %c0_38 = arith.constant 0 : index
    %c0_39 = arith.constant 0 : index
    %54 = vector.load %arg7[%c0_38, %c0_39] : memref<32x32xbf16, #tpu.memory_space<vmem>>, vector<32x32xbf16>
    %c4 = arith.constant 4 : index
    %c0_40 = arith.constant 0 : index
    %c0_41 = arith.constant 0 : index
    %55 = vector.load %arg1[%c4, %c0_40, %c0_41] : memref<8x32x128xbf16, #tpu.memory_space<vmem>>, vector<1x32x128xbf16>
    %56 = vector.shape_cast %55 : vector<1x32x128xbf16> to vector<32x128xbf16>
    %cst_42 = arith.constant dense<0.000000e+00> : vector<32x128xf32>
    %57 = tpu.matmul %54, %56, %cst_42 {dimension_numbers = #tpu.dot_dimension_numbers<[1], [0], [0], [1], [0, 0, 1, 1], [], []>} : vector<32x32xbf16>, vector<32x128xbf16>, vector<32x128xf32> -> vector<32x128xf32>
    %58 = arith.mulf %8, %57 : vector<32x128xf32>
    %59 = vector.extract_strided_slice %58 {offsets = [0, 0], sizes = [16, 128], strides = [1, 1]} : vector<32x128xf32> to vector<16x128xf32>
    %cst_43 = arith.constant dense<0.000000e+00> : vector<128xf32>
    %60 = vector.multi_reduction <add>, %59, %cst_43 [0] : vector<16x128xf32> to vector<128xf32>
    %61 = vector.shape_cast %60 : vector<128xf32> to vector<1x128xf32>
    %62 = vector.extract_strided_slice %58 {offsets = [16, 0], sizes = [16, 128], strides = [1, 1]} : vector<32x128xf32> to vector<16x128xf32>
    %cst_44 = arith.constant dense<0.000000e+00> : vector<128xf32>
    %63 = vector.multi_reduction <add>, %62, %cst_44 [0] : vector<16x128xf32> to vector<128xf32>
    %64 = vector.shape_cast %63 : vector<128xf32> to vector<1x128xf32>
    %c0_45 = arith.constant 0 : index
    %c0_46 = arith.constant 0 : index
    %65 = vector.load %arg7[%c0_45, %c0_46] : memref<32x32xbf16, #tpu.memory_space<vmem>>, vector<32x32xbf16>
    %c5 = arith.constant 5 : index
    %c0_47 = arith.constant 0 : index
    %c0_48 = arith.constant 0 : index
    %66 = vector.load %arg1[%c5, %c0_47, %c0_48] : memref<8x32x128xbf16, #tpu.memory_space<vmem>>, vector<1x32x128xbf16>
    %67 = vector.shape_cast %66 : vector<1x32x128xbf16> to vector<32x128xbf16>
    %cst_49 = arith.constant dense<0.000000e+00> : vector<32x128xf32>
    %68 = tpu.matmul %65, %67, %cst_49 {dimension_numbers = #tpu.dot_dimension_numbers<[1], [0], [0], [1], [0, 0, 1, 1], [], []>} : vector<32x32xbf16>, vector<32x128xbf16>, vector<32x128xf32> -> vector<32x128xf32>
    %69 = arith.mulf %8, %68 : vector<32x128xf32>
    %70 = vector.extract_strided_slice %69 {offsets = [0, 0], sizes = [16, 128], strides = [1, 1]} : vector<32x128xf32> to vector<16x128xf32>
    %cst_50 = arith.constant dense<0.000000e+00> : vector<128xf32>
    %71 = vector.multi_reduction <add>, %70, %cst_50 [0] : vector<16x128xf32> to vector<128xf32>
    %72 = vector.shape_cast %71 : vector<128xf32> to vector<1x128xf32>
    %73 = vector.extract_strided_slice %69 {offsets = [16, 0], sizes = [16, 128], strides = [1, 1]} : vector<32x128xf32> to vector<16x128xf32>
    %cst_51 = arith.constant dense<0.000000e+00> : vector<128xf32>
    %74 = vector.multi_reduction <add>, %73, %cst_51 [0] : vector<16x128xf32> to vector<128xf32>
    %75 = vector.shape_cast %74 : vector<128xf32> to vector<1x128xf32>
    %c0_52 = arith.constant 0 : index
    %c0_53 = arith.constant 0 : index
    %76 = vector.load %arg7[%c0_52, %c0_53] : memref<32x32xbf16, #tpu.memory_space<vmem>>, vector<32x32xbf16>
    %c6 = arith.constant 6 : index
    %c0_54 = arith.constant 0 : index
    %c0_55 = arith.constant 0 : index
    %77 = vector.load %arg1[%c6, %c0_54, %c0_55] : memref<8x32x128xbf16, #tpu.memory_space<vmem>>, vector<1x32x128xbf16>
    %78 = vector.shape_cast %77 : vector<1x32x128xbf16> to vector<32x128xbf16>
    %cst_56 = arith.constant dense<0.000000e+00> : vector<32x128xf32>
    %79 = tpu.matmul %76, %78, %cst_56 {dimension_numbers = #tpu.dot_dimension_numbers<[1], [0], [0], [1], [0, 0, 1, 1], [], []>} : vector<32x32xbf16>, vector<32x128xbf16>, vector<32x128xf32> -> vector<32x128xf32>
    %80 = arith.mulf %8, %79 : vector<32x128xf32>
    %81 = vector.extract_strided_slice %80 {offsets = [0, 0], sizes = [16, 128], strides = [1, 1]} : vector<32x128xf32> to vector<16x128xf32>
    %cst_57 = arith.constant dense<0.000000e+00> : vector<128xf32>
    %82 = vector.multi_reduction <add>, %81, %cst_57 [0] : vector<16x128xf32> to vector<128xf32>
    %83 = vector.shape_cast %82 : vector<128xf32> to vector<1x128xf32>
    %84 = vector.extract_strided_slice %80 {offsets = [16, 0], sizes = [16, 128], strides = [1, 1]} : vector<32x128xf32> to vector<16x128xf32>
    %cst_58 = arith.constant dense<0.000000e+00> : vector<128xf32>
    %85 = vector.multi_reduction <add>, %84, %cst_58 [0] : vector<16x128xf32> to vector<128xf32>
    %86 = vector.shape_cast %85 : vector<128xf32> to vector<1x128xf32>
    %c0_59 = arith.constant 0 : index
    %c0_60 = arith.constant 0 : index
    %87 = vector.load %arg7[%c0_59, %c0_60] : memref<32x32xbf16, #tpu.memory_space<vmem>>, vector<32x32xbf16>
    %c7_61 = arith.constant 7 : index
    %c0_62 = arith.constant 0 : index
    %c0_63 = arith.constant 0 : index
    %88 = vector.load %arg1[%c7_61, %c0_62, %c0_63] : memref<8x32x128xbf16, #tpu.memory_space<vmem>>, vector<1x32x128xbf16>
    %89 = vector.shape_cast %88 : vector<1x32x128xbf16> to vector<32x128xbf16>
    %cst_64 = arith.constant dense<0.000000e+00> : vector<32x128xf32>
    %90 = tpu.matmul %87, %89, %cst_64 {dimension_numbers = #tpu.dot_dimension_numbers<[1], [0], [0], [1], [0, 0, 1, 1], [], []>} : vector<32x32xbf16>, vector<32x128xbf16>, vector<32x128xf32> -> vector<32x128xf32>
    %91 = arith.mulf %8, %90 : vector<32x128xf32>
    %92 = vector.extract_strided_slice %91 {offsets = [0, 0], sizes = [16, 128], strides = [1, 1]} : vector<32x128xf32> to vector<16x128xf32>
    %cst_65 = arith.constant dense<0.000000e+00> : vector<128xf32>
    %93 = vector.multi_reduction <add>, %92, %cst_65 [0] : vector<16x128xf32> to vector<128xf32>
    %94 = vector.shape_cast %93 : vector<128xf32> to vector<1x128xf32>
    %95 = vector.extract_strided_slice %91 {offsets = [16, 0], sizes = [16, 128], strides = [1, 1]} : vector<32x128xf32> to vector<16x128xf32>
    %cst_66 = arith.constant dense<0.000000e+00> : vector<128xf32>
    %96 = vector.multi_reduction <add>, %95, %cst_66 [0] : vector<16x128xf32> to vector<128xf32>
    %97 = vector.shape_cast %96 : vector<128xf32> to vector<1x128xf32>
    %98 = tpu.concatenate %17, %28, %39, %50, %61, %72, %83, %94 in 0 : vector<1x128xf32>, vector<1x128xf32>, vector<1x128xf32>, vector<1x128xf32>, vector<1x128xf32>, vector<1x128xf32>, vector<1x128xf32>, vector<1x128xf32> -> vector<8x128xf32>
    %99 = arith.addf %98, %9 : vector<8x128xf32>
    %cst_67 = arith.constant dense<0xFF800000> : vector<128xf32>
    %100 = vector.multi_reduction <maximumf>, %99, %cst_67 [0] : vector<8x128xf32> to vector<128xf32>
    %101 = vector.shape_cast %100 : vector<128xf32> to vector<1x128xf32>
    %102 = vector.broadcast %101 : vector<1x128xf32> to vector<8x128xf32>
    %103 = arith.subf %99, %102 : vector<8x128xf32>
    %104 = math.exp %103 : vector<8x128xf32>
    %cst_68 = arith.constant dense<0.000000e+00> : vector<128xf32>
    %105 = vector.multi_reduction <add>, %104, %cst_68 [0] : vector<8x128xf32> to vector<128xf32>
    %106 = vector.shape_cast %105 : vector<128xf32> to vector<1x128xf32>
    %107 = tpu.reciprocal %106 {approx = true} : vector<1x128xf32> -> vector<1x128xf32>
    %108 = vector.broadcast %107 : vector<1x128xf32> to vector<8x128xf32>
    %109 = arith.mulf %104, %108 : vector<8x128xf32>
    %110 = tpu.concatenate %20, %31, %42, %53, %64, %75, %86, %97 in 0 : vector<1x128xf32>, vector<1x128xf32>, vector<1x128xf32>, vector<1x128xf32>, vector<1x128xf32>, vector<1x128xf32>, vector<1x128xf32>, vector<1x128xf32> -> vector<8x128xf32>
    %111 = arith.addf %110, %9 : vector<8x128xf32>
    %cst_69 = arith.constant dense<0xFF800000> : vector<128xf32>
    %112 = vector.multi_reduction <maximumf>, %111, %cst_69 [0] : vector<8x128xf32> to vector<128xf32>
    %113 = vector.shape_cast %112 : vector<128xf32> to vector<1x128xf32>
    %114 = vector.broadcast %113 : vector<1x128xf32> to vector<8x128xf32>
    %115 = arith.subf %111, %114 : vector<8x128xf32>
    %116 = math.exp %115 : vector<8x128xf32>
    %cst_70 = arith.constant dense<0.000000e+00> : vector<128xf32>
    %117 = vector.multi_reduction <add>, %116, %cst_70 [0] : vector<8x128xf32> to vector<128xf32>
    %118 = vector.shape_cast %117 : vector<128xf32> to vector<1x128xf32>
    %119 = tpu.reciprocal %118 {approx = true} : vector<1x128xf32> -> vector<1x128xf32>
    %120 = vector.broadcast %119 : vector<1x128xf32> to vector<8x128xf32>
    %121 = arith.mulf %116, %120 : vector<8x128xf32>
    %cst_71 = arith.constant 0.000000e+00 : f32
    %122 = vector.broadcast %cst_71 : f32 to vector<16x128xf32>
    %cst_72 = arith.constant 0.000000e+00 : f32
    %123 = vector.broadcast %cst_72 : f32 to vector<16x128xf32>
    %c0_73 = arith.constant 0 : index
    %c0_74 = arith.constant 0 : index
    %124 = vector.load %arg8[%c0_73, %c0_74] : memref<32x32xbf16, #tpu.memory_space<vmem>>, vector<32x32xbf16>
    %c0_75 = arith.constant 0 : index
    %c0_76 = arith.constant 0 : index
    %c0_77 = arith.constant 0 : index
    %125 = vector.load %arg1[%c0_75, %c0_76, %c0_77] : memref<8x32x128xbf16, #tpu.memory_space<vmem>>, vector<1x32x128xbf16>
    %126 = vector.shape_cast %125 : vector<1x32x128xbf16> to vector<32x128xbf16>
    %cst_78 = arith.constant dense<0.000000e+00> : vector<32x128xf32>
    %127 = tpu.matmul %124, %126, %cst_78 {dimension_numbers = #tpu.dot_dimension_numbers<[1], [0], [0], [1], [0, 0, 1, 1], [], []>} : vector<32x32xbf16>, vector<32x128xbf16>, vector<32x128xf32> -> vector<32x128xf32>
    %128 = vector.extract_strided_slice %109 {offsets = [0, 0], sizes = [1, 128], strides = [1, 1]} : vector<8x128xf32> to vector<1x128xf32>
    %129 = vector.extract_strided_slice %127 {offsets = [0, 0], sizes = [16, 128], strides = [1, 1]} : vector<32x128xf32> to vector<16x128xf32>
    %130 = vector.broadcast %128 : vector<1x128xf32> to vector<16x128xf32>
    %131 = arith.mulf %130, %129 : vector<16x128xf32>
    %132 = arith.addf %122, %131 : vector<16x128xf32>
    %133 = vector.extract_strided_slice %121 {offsets = [0, 0], sizes = [1, 128], strides = [1, 1]} : vector<8x128xf32> to vector<1x128xf32>
    %134 = vector.extract_strided_slice %127 {offsets = [16, 0], sizes = [16, 128], strides = [1, 1]} : vector<32x128xf32> to vector<16x128xf32>
    %135 = vector.broadcast %133 : vector<1x128xf32> to vector<16x128xf32>
    %136 = arith.mulf %135, %134 : vector<16x128xf32>
    %137 = arith.addf %123, %136 : vector<16x128xf32>
    %c0_79 = arith.constant 0 : index
    %c0_80 = arith.constant 0 : index
    %138 = vector.load %arg8[%c0_79, %c0_80] : memref<32x32xbf16, #tpu.memory_space<vmem>>, vector<32x32xbf16>
    %c1_81 = arith.constant 1 : index
    %c0_82 = arith.constant 0 : index
    %c0_83 = arith.constant 0 : index
    %139 = vector.load %arg1[%c1_81, %c0_82, %c0_83] : memref<8x32x128xbf16, #tpu.memory_space<vmem>>, vector<1x32x128xbf16>
    %140 = vector.shape_cast %139 : vector<1x32x128xbf16> to vector<32x128xbf16>
    %cst_84 = arith.constant dense<0.000000e+00> : vector<32x128xf32>
    %141 = tpu.matmul %138, %140, %cst_84 {dimension_numbers = #tpu.dot_dimension_numbers<[1], [0], [0], [1], [0, 0, 1, 1], [], []>} : vector<32x32xbf16>, vector<32x128xbf16>, vector<32x128xf32> -> vector<32x128xf32>
    %142 = vector.extract_strided_slice %109 {offsets = [1, 0], sizes = [1, 128], strides = [1, 1]} : vector<8x128xf32> to vector<1x128xf32>
    %143 = vector.extract_strided_slice %141 {offsets = [0, 0], sizes = [16, 128], strides = [1, 1]} : vector<32x128xf32> to vector<16x128xf32>
    %144 = vector.broadcast %142 : vector<1x128xf32> to vector<16x128xf32>
    %145 = arith.mulf %144, %143 : vector<16x128xf32>
    %146 = arith.addf %132, %145 : vector<16x128xf32>
    %147 = vector.extract_strided_slice %121 {offsets = [1, 0], sizes = [1, 128], strides = [1, 1]} : vector<8x128xf32> to vector<1x128xf32>
    %148 = vector.extract_strided_slice %141 {offsets = [16, 0], sizes = [16, 128], strides = [1, 1]} : vector<32x128xf32> to vector<16x128xf32>
    %149 = vector.broadcast %147 : vector<1x128xf32> to vector<16x128xf32>
    %150 = arith.mulf %149, %148 : vector<16x128xf32>
    %151 = arith.addf %137, %150 : vector<16x128xf32>
    %c0_85 = arith.constant 0 : index
    %c0_86 = arith.constant 0 : index
    %152 = vector.load %arg8[%c0_85, %c0_86] : memref<32x32xbf16, #tpu.memory_space<vmem>>, vector<32x32xbf16>
    %c2_87 = arith.constant 2 : index
    %c0_88 = arith.constant 0 : index
    %c0_89 = arith.constant 0 : index
    %153 = vector.load %arg1[%c2_87, %c0_88, %c0_89] : memref<8x32x128xbf16, #tpu.memory_space<vmem>>, vector<1x32x128xbf16>
    %154 = vector.shape_cast %153 : vector<1x32x128xbf16> to vector<32x128xbf16>
    %cst_90 = arith.constant dense<0.000000e+00> : vector<32x128xf32>
    %155 = tpu.matmul %152, %154, %cst_90 {dimension_numbers = #tpu.dot_dimension_numbers<[1], [0], [0], [1], [0, 0, 1, 1], [], []>} : vector<32x32xbf16>, vector<32x128xbf16>, vector<32x128xf32> -> vector<32x128xf32>
    %156 = vector.extract_strided_slice %109 {offsets = [2, 0], sizes = [1, 128], strides = [1, 1]} : vector<8x128xf32> to vector<1x128xf32>
    %157 = vector.extract_strided_slice %155 {offsets = [0, 0], sizes = [16, 128], strides = [1, 1]} : vector<32x128xf32> to vector<16x128xf32>
    %158 = vector.broadcast %156 : vector<1x128xf32> to vector<16x128xf32>
    %159 = arith.mulf %158, %157 : vector<16x128xf32>
    %160 = arith.addf %146, %159 : vector<16x128xf32>
    %161 = vector.extract_strided_slice %121 {offsets = [2, 0], sizes = [1, 128], strides = [1, 1]} : vector<8x128xf32> to vector<1x128xf32>
    %162 = vector.extract_strided_slice %155 {offsets = [16, 0], sizes = [16, 128], strides = [1, 1]} : vector<32x128xf32> to vector<16x128xf32>
    %163 = vector.broadcast %161 : vector<1x128xf32> to vector<16x128xf32>
    %164 = arith.mulf %163, %162 : vector<16x128xf32>
    %165 = arith.addf %151, %164 : vector<16x128xf32>
    %c0_91 = arith.constant 0 : index
    %c0_92 = arith.constant 0 : index
    %166 = vector.load %arg8[%c0_91, %c0_92] : memref<32x32xbf16, #tpu.memory_space<vmem>>, vector<32x32xbf16>
    %c3_93 = arith.constant 3 : index
    %c0_94 = arith.constant 0 : index
    %c0_95 = arith.constant 0 : index
    %167 = vector.load %arg1[%c3_93, %c0_94, %c0_95] : memref<8x32x128xbf16, #tpu.memory_space<vmem>>, vector<1x32x128xbf16>
    %168 = vector.shape_cast %167 : vector<1x32x128xbf16> to vector<32x128xbf16>
    %cst_96 = arith.constant dense<0.000000e+00> : vector<32x128xf32>
    %169 = tpu.matmul %166, %168, %cst_96 {dimension_numbers = #tpu.dot_dimension_numbers<[1], [0], [0], [1], [0, 0, 1, 1], [], []>} : vector<32x32xbf16>, vector<32x128xbf16>, vector<32x128xf32> -> vector<32x128xf32>
    %170 = vector.extract_strided_slice %109 {offsets = [3, 0], sizes = [1, 128], strides = [1, 1]} : vector<8x128xf32> to vector<1x128xf32>
    %171 = vector.extract_strided_slice %169 {offsets = [0, 0], sizes = [16, 128], strides = [1, 1]} : vector<32x128xf32> to vector<16x128xf32>
    %172 = vector.broadcast %170 : vector<1x128xf32> to vector<16x128xf32>
    %173 = arith.mulf %172, %171 : vector<16x128xf32>
    %174 = arith.addf %160, %173 : vector<16x128xf32>
    %175 = vector.extract_strided_slice %121 {offsets = [3, 0], sizes = [1, 128], strides = [1, 1]} : vector<8x128xf32> to vector<1x128xf32>
    %176 = vector.extract_strided_slice %169 {offsets = [16, 0], sizes = [16, 128], strides = [1, 1]} : vector<32x128xf32> to vector<16x128xf32>
    %177 = vector.broadcast %175 : vector<1x128xf32> to vector<16x128xf32>
    %178 = arith.mulf %177, %176 : vector<16x128xf32>
    %179 = arith.addf %165, %178 : vector<16x128xf32>
    %c0_97 = arith.constant 0 : index
    %c0_98 = arith.constant 0 : index
    %180 = vector.load %arg8[%c0_97, %c0_98] : memref<32x32xbf16, #tpu.memory_space<vmem>>, vector<32x32xbf16>
    %c4_99 = arith.constant 4 : index
    %c0_100 = arith.constant 0 : index
    %c0_101 = arith.constant 0 : index
    %181 = vector.load %arg1[%c4_99, %c0_100, %c0_101] : memref<8x32x128xbf16, #tpu.memory_space<vmem>>, vector<1x32x128xbf16>
    %182 = vector.shape_cast %181 : vector<1x32x128xbf16> to vector<32x128xbf16>
    %cst_102 = arith.constant dense<0.000000e+00> : vector<32x128xf32>
    %183 = tpu.matmul %180, %182, %cst_102 {dimension_numbers = #tpu.dot_dimension_numbers<[1], [0], [0], [1], [0, 0, 1, 1], [], []>} : vector<32x32xbf16>, vector<32x128xbf16>, vector<32x128xf32> -> vector<32x128xf32>
    %184 = vector.extract_strided_slice %109 {offsets = [4, 0], sizes = [1, 128], strides = [1, 1]} : vector<8x128xf32> to vector<1x128xf32>
    %185 = vector.extract_strided_slice %183 {offsets = [0, 0], sizes = [16, 128], strides = [1, 1]} : vector<32x128xf32> to vector<16x128xf32>
    %186 = vector.broadcast %184 : vector<1x128xf32> to vector<16x128xf32>
    %187 = arith.mulf %186, %185 : vector<16x128xf32>
    %188 = arith.addf %174, %187 : vector<16x128xf32>
    %189 = vector.extract_strided_slice %121 {offsets = [4, 0], sizes = [1, 128], strides = [1, 1]} : vector<8x128xf32> to vector<1x128xf32>
    %190 = vector.extract_strided_slice %183 {offsets = [16, 0], sizes = [16, 128], strides = [1, 1]} : vector<32x128xf32> to vector<16x128xf32>
    %191 = vector.broadcast %189 : vector<1x128xf32> to vector<16x128xf32>
    %192 = arith.mulf %191, %190 : vector<16x128xf32>
    %193 = arith.addf %179, %192 : vector<16x128xf32>
    %c0_103 = arith.constant 0 : index
    %c0_104 = arith.constant 0 : index
    %194 = vector.load %arg8[%c0_103, %c0_104] : memref<32x32xbf16, #tpu.memory_space<vmem>>, vector<32x32xbf16>
    %c5_105 = arith.constant 5 : index
    %c0_106 = arith.constant 0 : index
    %c0_107 = arith.constant 0 : index
    %195 = vector.load %arg1[%c5_105, %c0_106, %c0_107] : memref<8x32x128xbf16, #tpu.memory_space<vmem>>, vector<1x32x128xbf16>
    %196 = vector.shape_cast %195 : vector<1x32x128xbf16> to vector<32x128xbf16>
    %cst_108 = arith.constant dense<0.000000e+00> : vector<32x128xf32>
    %197 = tpu.matmul %194, %196, %cst_108 {dimension_numbers = #tpu.dot_dimension_numbers<[1], [0], [0], [1], [0, 0, 1, 1], [], []>} : vector<32x32xbf16>, vector<32x128xbf16>, vector<32x128xf32> -> vector<32x128xf32>
    %198 = vector.extract_strided_slice %109 {offsets = [5, 0], sizes = [1, 128], strides = [1, 1]} : vector<8x128xf32> to vector<1x128xf32>
    %199 = vector.extract_strided_slice %197 {offsets = [0, 0], sizes = [16, 128], strides = [1, 1]} : vector<32x128xf32> to vector<16x128xf32>
    %200 = vector.broadcast %198 : vector<1x128xf32> to vector<16x128xf32>
    %201 = arith.mulf %200, %199 : vector<16x128xf32>
    %202 = arith.addf %188, %201 : vector<16x128xf32>
    %203 = vector.extract_strided_slice %121 {offsets = [5, 0], sizes = [1, 128], strides = [1, 1]} : vector<8x128xf32> to vector<1x128xf32>
    %204 = vector.extract_strided_slice %197 {offsets = [16, 0], sizes = [16, 128], strides = [1, 1]} : vector<32x128xf32> to vector<16x128xf32>
    %205 = vector.broadcast %203 : vector<1x128xf32> to vector<16x128xf32>
    %206 = arith.mulf %205, %204 : vector<16x128xf32>
    %207 = arith.addf %193, %206 : vector<16x128xf32>
    %c0_109 = arith.constant 0 : index
    %c0_110 = arith.constant 0 : index
    %208 = vector.load %arg8[%c0_109, %c0_110] : memref<32x32xbf16, #tpu.memory_space<vmem>>, vector<32x32xbf16>
    %c6_111 = arith.constant 6 : index
    %c0_112 = arith.constant 0 : index
    %c0_113 = arith.constant 0 : index
    %209 = vector.load %arg1[%c6_111, %c0_112, %c0_113] : memref<8x32x128xbf16, #tpu.memory_space<vmem>>, vector<1x32x128xbf16>
    %210 = vector.shape_cast %209 : vector<1x32x128xbf16> to vector<32x128xbf16>
    %cst_114 = arith.constant dense<0.000000e+00> : vector<32x128xf32>
    %211 = tpu.matmul %208, %210, %cst_114 {dimension_numbers = #tpu.dot_dimension_numbers<[1], [0], [0], [1], [0, 0, 1, 1], [], []>} : vector<32x32xbf16>, vector<32x128xbf16>, vector<32x128xf32> -> vector<32x128xf32>
    %212 = vector.extract_strided_slice %109 {offsets = [6, 0], sizes = [1, 128], strides = [1, 1]} : vector<8x128xf32> to vector<1x128xf32>
    %213 = vector.extract_strided_slice %211 {offsets = [0, 0], sizes = [16, 128], strides = [1, 1]} : vector<32x128xf32> to vector<16x128xf32>
    %214 = vector.broadcast %212 : vector<1x128xf32> to vector<16x128xf32>
    %215 = arith.mulf %214, %213 : vector<16x128xf32>
    %216 = arith.addf %202, %215 : vector<16x128xf32>
    %217 = vector.extract_strided_slice %121 {offsets = [6, 0], sizes = [1, 128], strides = [1, 1]} : vector<8x128xf32> to vector<1x128xf32>
    %218 = vector.extract_strided_slice %211 {offsets = [16, 0], sizes = [16, 128], strides = [1, 1]} : vector<32x128xf32> to vector<16x128xf32>
    %219 = vector.broadcast %217 : vector<1x128xf32> to vector<16x128xf32>
    %220 = arith.mulf %219, %218 : vector<16x128xf32>
    %221 = arith.addf %207, %220 : vector<16x128xf32>
    %c0_115 = arith.constant 0 : index
    %c0_116 = arith.constant 0 : index
    %222 = vector.load %arg8[%c0_115, %c0_116] : memref<32x32xbf16, #tpu.memory_space<vmem>>, vector<32x32xbf16>
    %c7_117 = arith.constant 7 : index
    %c0_118 = arith.constant 0 : index
    %c0_119 = arith.constant 0 : index
    %223 = vector.load %arg1[%c7_117, %c0_118, %c0_119] : memref<8x32x128xbf16, #tpu.memory_space<vmem>>, vector<1x32x128xbf16>
    %224 = vector.shape_cast %223 : vector<1x32x128xbf16> to vector<32x128xbf16>
    %cst_120 = arith.constant dense<0.000000e+00> : vector<32x128xf32>
    %225 = tpu.matmul %222, %224, %cst_120 {dimension_numbers = #tpu.dot_dimension_numbers<[1], [0], [0], [1], [0, 0, 1, 1], [], []>} : vector<32x32xbf16>, vector<32x128xbf16>, vector<32x128xf32> -> vector<32x128xf32>
    %226 = vector.extract_strided_slice %109 {offsets = [7, 0], sizes = [1, 128], strides = [1, 1]} : vector<8x128xf32> to vector<1x128xf32>
    %227 = vector.extract_strided_slice %225 {offsets = [0, 0], sizes = [16, 128], strides = [1, 1]} : vector<32x128xf32> to vector<16x128xf32>
    %228 = vector.broadcast %226 : vector<1x128xf32> to vector<16x128xf32>
    %229 = arith.mulf %228, %227 : vector<16x128xf32>
    %230 = arith.addf %216, %229 : vector<16x128xf32>
    %231 = vector.extract_strided_slice %121 {offsets = [7, 0], sizes = [1, 128], strides = [1, 1]} : vector<8x128xf32> to vector<1x128xf32>
    %232 = vector.extract_strided_slice %225 {offsets = [16, 0], sizes = [16, 128], strides = [1, 1]} : vector<32x128xf32> to vector<16x128xf32>
    %233 = vector.broadcast %231 : vector<1x128xf32> to vector<16x128xf32>
    %234 = arith.mulf %233, %232 : vector<16x128xf32>
    %235 = arith.addf %221, %234 : vector<16x128xf32>
    %236 = tpu.concatenate %230, %235 in 0 : vector<16x128xf32>, vector<16x128xf32> -> vector<32x128xf32>
    %c0_121 = arith.constant 0 : index
    %c0_122 = arith.constant 0 : index
    %237 = vector.load %arg9[%c0_121, %c0_122] : memref<32x32xbf16, #tpu.memory_space<vmem>>, vector<32x32xbf16>
    %238 = arith.truncf %236 : vector<32x128xf32> to vector<32x128xbf16>
    %cst_123 = arith.constant dense<0.000000e+00> : vector<32x128xf32>
    %239 = tpu.matmul %237, %238, %cst_123 {dimension_numbers = #tpu.dot_dimension_numbers<[1], [0], [0], [1], [0, 0, 1, 1], [], []>} : vector<32x32xbf16>, vector<32x128xbf16>, vector<32x128xf32> -> vector<32x128xf32>
    %c0_124 = arith.constant 0 : index
    %c0_125 = arith.constant 0 : index
    %240 = vector.load %arg10[%c0_124, %c0_125] : memref<32x1xf32, #tpu.memory_space<vmem>>, vector<32x1xf32>
    %241 = vector.broadcast %240 : vector<32x1xf32> to vector<32x128xf32>
    %242 = arith.addf %239, %241 : vector<32x128xf32>
    %c0_126 = arith.constant 0 : index
    %c0_127 = arith.constant 0 : index
    %243 = vector.load %arg4[%c0_126, %c0_127] : memref<1x128xf32, #tpu.memory_space<vmem>>, vector<1x128xf32>
    %cst_128 = arith.constant 5.000000e-01 : f32
    %244 = vector.broadcast %cst_128 : f32 to vector<1x128xf32>
    %245 = arith.cmpf ogt, %243, %244 : vector<1x128xf32>
    %cst_129 = arith.constant 0.000000e+00 : f32
    %246 = vector.shape_cast %245 : vector<1x128xi1> to vector<1x128xi1>
    %247 = vector.broadcast %246 : vector<1x128xi1> to vector<32x128xi1>
    %248 = vector.broadcast %cst_129 : f32 to vector<32x128xf32>
    %249 = arith.select %247, %248, %242 : vector<32x128xi1>, vector<32x128xf32>
    %c0_130 = arith.constant 0 : index
    %c0_131 = arith.constant 0 : index
    %250 = vector.load %arg11[%c0_130, %c0_131] : memref<32x32xbf16, #tpu.memory_space<vmem>>, vector<32x32xbf16>
    %cst_132 = arith.constant dense<0.000000e+00> : vector<32x128xf32>
    %251 = tpu.matmul %250, %1, %cst_132 {dimension_numbers = #tpu.dot_dimension_numbers<[1], [0], [0], [1], [0, 0, 1, 1], [], []>} : vector<32x32xbf16>, vector<32x128xbf16>, vector<32x128xf32> -> vector<32x128xf32>
    %c0_133 = arith.constant 0 : index
    %c0_134 = arith.constant 0 : index
    %252 = vector.load %arg12[%c0_133, %c0_134] : memref<32x1xf32, #tpu.memory_space<vmem>>, vector<32x1xf32>
    %253 = vector.broadcast %252 : vector<32x1xf32> to vector<32x128xf32>
    %254 = arith.addf %251, %253 : vector<32x128xf32>
    %255 = arith.addf %249, %254 : vector<32x128xf32>
    %cst_135 = arith.constant 0.000000e+00 : f32
    %256 = vector.broadcast %cst_135 : f32 to vector<32x128xf32>
    %257 = arith.maximumf %255, %256 : vector<32x128xf32>
    %c0_136 = arith.constant 0 : index
    %c0_137 = arith.constant 0 : index
    %258 = vector.load %arg13[%c0_136, %c0_137] : memref<32x32xbf16, #tpu.memory_space<vmem>>, vector<32x32xbf16>
    %259 = arith.truncf %257 : vector<32x128xf32> to vector<32x128xbf16>
    %cst_138 = arith.constant dense<0.000000e+00> : vector<32x128xf32>
    %260 = tpu.matmul %258, %259, %cst_138 {dimension_numbers = #tpu.dot_dimension_numbers<[1], [0], [0], [1], [0, 0, 1, 1], [], []>} : vector<32x32xbf16>, vector<32x128xbf16>, vector<32x128xf32> -> vector<32x128xf32>
    %c0_139 = arith.constant 0 : index
    %c0_140 = arith.constant 0 : index
    %261 = vector.load %arg14[%c0_139, %c0_140] : memref<32x1xf32, #tpu.memory_space<vmem>>, vector<32x1xf32>
    %262 = vector.broadcast %261 : vector<32x1xf32> to vector<32x128xf32>
    %263 = arith.addf %260, %262 : vector<32x128xf32>
    %c0_141 = arith.constant 0 : index
    %c0_142 = arith.constant 0 : index
    %264 = vector.load %arg15[%c0_141, %c0_142] : memref<32x128xf32, #tpu.memory_space<vmem>>, vector<32x128xf32>
    tpu.vector_store %arg15[%c0_141, %c0_142], %263 {strides = array<i32>} : memref<32x128xf32, #tpu.memory_space<vmem>>, vector<32x128xf32>,
    return
  }
  func.func @transform_0(%arg0: i32) -> (i32, i32, i32) {
    %c0_i32 = arith.constant 0 : i32
    %c0_i32_0 = arith.constant 0 : i32
    %c0_i32_1 = arith.constant 0 : i32
    return %c0_i32, %c0_i32_0, %arg0 : i32, i32, i32
  }
  func.func @transform_1(%arg0: i32) -> (i32, i32) {
    %c0_i32 = arith.constant 0 : i32
    %c0_i32_0 = arith.constant 0 : i32
    return %c0_i32, %arg0 : i32, i32
  }
  func.func @transform_2(%arg0: i32) -> (i32, i32) {
    %c0_i32 = arith.constant 0 : i32
    %c0_i32_0 = arith.constant 0 : i32
    return %c0_i32, %arg0 : i32, i32
  }
  func.func @transform_3(%arg0: i32) -> (i32, i32) {
    %c0_i32 = arith.constant 0 : i32
    %c0_i32_0 = arith.constant 0 : i32
    return %c0_i32, %arg0 : i32, i32
  }
  func.func @transform_4(%arg0: i32) -> (i32, i32) {
    %c0_i32 = arith.constant 0 : i32
    %c0_i32_0 = arith.constant 0 : i32
    %c0_i32_1 = arith.constant 0 : i32
    return %c0_i32, %c0_i32_0 : i32, i32
  }
  func.func @transform_5(%arg0: i32) -> (i32, i32) {
    %c0_i32 = arith.constant 0 : i32
    %c0_i32_0 = arith.constant 0 : i32
    %c0_i32_1 = arith.constant 0 : i32
    return %c0_i32, %c0_i32_0 : i32, i32
  }
  func.func @transform_6(%arg0: i32) -> (i32, i32) {
    %c0_i32 = arith.constant 0 : i32
    %c0_i32_0 = arith.constant 0 : i32
    %c0_i32_1 = arith.constant 0 : i32
    return %c0_i32, %c0_i32_0 : i32, i32
  }
  func.func @transform_7(%arg0: i32) -> (i32, i32) {
    %c0_i32 = arith.constant 0 : i32
    %c0_i32_0 = arith.constant 0 : i32
    %c0_i32_1 = arith.constant 0 : i32
    return %c0_i32, %c0_i32_0 : i32, i32
  }
  func.func @transform_8(%arg0: i32) -> (i32, i32) {
    %c0_i32 = arith.constant 0 : i32
    %c0_i32_0 = arith.constant 0 : i32
    %c0_i32_1 = arith.constant 0 : i32
    return %c0_i32, %c0_i32_0 : i32, i32
  }
  func.func @transform_9(%arg0: i32) -> (i32, i32) {
    %c0_i32 = arith.constant 0 : i32
    %c0_i32_0 = arith.constant 0 : i32
    %c0_i32_1 = arith.constant 0 : i32
    return %c0_i32, %c0_i32_0 : i32, i32
  }
  func.func @transform_10(%arg0: i32) -> (i32, i32) {
    %c0_i32 = arith.constant 0 : i32
    %c0_i32_0 = arith.constant 0 : i32
    %c0_i32_1 = arith.constant 0 : i32
    return %c0_i32, %c0_i32_0 : i32, i32
  }
  func.func @transform_11(%arg0: i32) -> (i32, i32) {
    %c0_i32 = arith.constant 0 : i32
    %c0_i32_0 = arith.constant 0 : i32
    %c0_i32_1 = arith.constant 0 : i32
    return %c0_i32, %c0_i32_0 : i32, i32
  }
  func.func @transform_12(%arg0: i32) -> (i32, i32) {
    %c0_i32 = arith.constant 0 : i32
    %c0_i32_0 = arith.constant 0 : i32
    %c0_i32_1 = arith.constant 0 : i32
    return %c0_i32, %c0_i32_0 : i32, i32
  }
  func.func @transform_13(%arg0: i32) -> (i32, i32) {
    %c0_i32 = arith.constant 0 : i32
    %c0_i32_0 = arith.constant 0 : i32
    %c0_i32_1 = arith.constant 0 : i32
    return %c0_i32, %c0_i32_0 : i32, i32
  }
  func.func @transform_14(%arg0: i32) -> (i32, i32) {
    %c0_i32 = arith.constant 0 : i32
    %c0_i32_0 = arith.constant 0 : i32
    return %c0_i32, %arg0 : i32, i32
  }
}

</mosaic_0001>

<llo_original>
// kernel: tpu_custom_call.1
$region0: #{tpu_custom_call.1}
  #allocation0 [shape = 'u32[]', space=smem, size = 0x4, offset = 0x4, fixed_abs, tag = 'smem constant byte address 0x4 - core index']
  #allocation1 [shape = 'u32[144,128]{1,0:T(1,128)}', space=vmem, size = 0x12000, scoped, tag = 'internal scratch']
  %s0 = inlined_call_operand.hbm [shape: bf16[8,32,256], index: 0, kind: input, shape index: {}]
  %s1 = inlined_call_operand.vmem [shape: bf16[32,256], index: 1, kind: input, shape index: {}]
  %s2 = inlined_call_operand.vmem [shape: f32[8,256], index: 2, kind: input, shape index: {}]
  %s3 = inlined_call_operand.vmem [shape: f32[1,256], index: 3, kind: input, shape index: {}]
  %s4 = inlined_call_operand.vmem [shape: bf16[32,32], index: 4, kind: input, shape index: {}]
  %s5 = inlined_call_operand.vmem [shape: f32[32,1], index: 5, kind: input, shape index: {}]
  %s6 = inlined_call_operand.vmem [shape: bf16[32,32], index: 6, kind: input, shape index: {}]
  %s7 = inlined_call_operand.vmem [shape: bf16[32,32], index: 7, kind: input, shape index: {}]
  %s8 = inlined_call_operand.vmem [shape: bf16[32,32], index: 8, kind: input, shape index: {}]
  %s9 = inlined_call_operand.vmem [shape: f32[32,1], index: 9, kind: input, shape index: {}]
  %s10 = inlined_call_operand.vmem [shape: bf16[32,32], index: 10, kind: input, shape index: {}]
  %s11 = inlined_call_operand.vmem [shape: f32[32,1], index: 11, kind: input, shape index: {}]
  %s12 = inlined_call_operand.vmem [shape: bf16[32,32], index: 12, kind: input, shape index: {}]
  %s13 = inlined_call_operand.vmem [shape: f32[32,1], index: 13, kind: input, shape index: {}]
  %s14 = inlined_call_operand.hbm [shape: f32[32,256], index: 14, kind: output, shape index: {}]
  %s15 = sld [smem:[#allocation0]]
  $region134: #{tpu_custom_call.1} parent=0
    _
  %s17 = ssub.s32 1, %s15
  %s18 = scalar_select 0, %s17, %s15
  $region1: #{tpu_custom_call.1} parent=0
    #allocation2 [shape = 'u8[131072]{0}', space=vmem, size = 0x20000, scoped, tag = 'input window, operand 0']
    #allocation3 [shape = 's32[2]{0}', space=sflag, size = 0x8, scoped, tag = 'scoped memory for tpu_custom_call.1']
    #allocation4 [shape = 's32[2]{0}', space=sflag, size = 0x8, scoped, tag = 'scoped memory for tpu_custom_call.1']
    #allocation5 [shape = 'u8[16384]{0}', space=vmem, size = 0x4000, scoped, tag = 'input window, operand 1']
    #allocation6 [shape = 'u8[32768]{0}', space=vmem, size = 0x8000, scoped, tag = 'output window, operand 0']
    %19 = vsyncpa [#allocation3], 0
    %s20 = scalar_lea.sflag [#allocation3], 1
    %21 = vsyncpa %s20, 0
    %22 = vsyncpa [#allocation4], 0
    %s23 = scalar_lea.sflag [#allocation4], 1
    %24 = vsyncpa %s23, 0
    loop: start=0, step=1, limit=4
    $region2: #{tpu_custom_call.1} parent=1 // loop_pre_header
      _
    $region3: #{tpu_custom_call.1} parent=1 // loop_header
      %s26 = sphi 0, %s30
      %p27 = scmp.ge.s32.totalorder %s26, 4
      %s36 = sphi 0, %s38
      %s39 = sphi 0, %s36
      %s40 = sphi 0, %s39
      %s56 = sphi 0, %s40
      %s62 = sphi 0, %s64
      %s65 = sphi 0, %s62
      %s66 = sphi 0, %s65
      %s82 = sphi 0, %s66
      %s88 = sphi 0, %s90
      %s91 = sphi 0, %s88
      %s92 = sphi 0, %s91
      %s108 = sphi 0, %s92
      %s114 = sphi 0, %s116
      %s117 = sphi 0, %s114
      %s118 = sphi 0, %s117
      %s134 = sphi 0, %s118
      %s138 = sphi 0, %s138
      %s140 = sphi 0, %s138
      %s141 = sphi 0, %s140
      %s155 = sphi 0, %s141
      %s159 = sphi 0, %s159
      %s161 = sphi 0, %s159
      %s162 = sphi 0, %s161
      %s176 = sphi 0, %s162
      %s180 = sphi 0, %s180
      %s182 = sphi 0, %s180
      %s183 = sphi 0, %s182
      %s197 = sphi 0, %s183
      %s201 = sphi 0, %s201
      %s203 = sphi 0, %s201
      %s204 = sphi 0, %s203
      %s218 = sphi 0, %s204
      %s222 = sphi 0, %s222
      %s224 = sphi 0, %s222
      %s225 = sphi 0, %s224
      %s239 = sphi 0, %s225
      %s243 = sphi 0, %s243
      %s245 = sphi 0, %s243
      %s246 = sphi 0, %s245
      %s260 = sphi 0, %s246
      %s264 = sphi 0, %s264
      %s266 = sphi 0, %s264
      %s267 = sphi 0, %s266
      %s281 = sphi 0, %s267
      %s285 = sphi 0, %s285
      %s287 = sphi 0, %s285
      %s288 = sphi 0, %s287
      %s302 = sphi 0, %s288
      %s306 = sphi 0, %s306
      %s308 = sphi 0, %s306
      %s309 = sphi 0, %s308
      %s323 = sphi 0, %s309
      %s327 = sphi 0, %s327
      %s329 = sphi 0, %s327
      %s330 = sphi 0, %s329
      %s344 = sphi 0, %s330
      %s350 = sphi 0, %s352
      %s353 = sphi 0, %s350
      %s354 = sphi 0, %s353
      %s370 = sphi 0, %s354
    $region4: #{tpu_custom_call.1} parent=1 // loop_header_branch
      %29 = sbr.rel (%p27) target = $region8
    $region5: #{tpu_custom_call.1} parent=1 // loop_body
      %s31 = ssub.s32 %s26, 1
      %s32 = ssub.s32 %s26, 2
      %s33 = sadd.s32 %s26, 1
      %s34 = ssub.s32 %s26, %s33
      %p35 = scmp.eq.s32.totalorder %s34, 0
      %s37 = sadd.s32 %s36, 1
      %s38 = scalar_select %p35, %s36, %s37
      %p41 = pneg %p35
      %p42 = scmp.eq.s32.totalorder %s26, 1
      %p43 = por %p41, %p42
      %p44 = scmp.ne.s32.totalorder %s36, %s39
      %p45 = scmp.eq.s32.totalorder %s26, 0
      %p46 = por %p44, %p45
      %p47 = scmp.ne.s32.totalorder %s36, %s39
      %p48 = scmp.eq.s32.totalorder %s31, 1
      %p49 = por %p47, %p48
      %p50 = scmp.ne.s32.totalorder %s39, %s40
      %p51 = scmp.eq.s32.totalorder %s31, 0
      %p52 = por %p50, %p51
      %p53 = scmp.ne.s32.totalorder %s39, %s40
      %p54 = scmp.eq.s32.totalorder %s32, 1
      %p55 = por %p53, %p54
      %p57 = scmp.ne.s32.totalorder %s40, %s56
      %p58 = scmp.eq.s32.totalorder %s32, 0
      %p59 = por %p57, %p58
      %s60 = ssub.s32 %s26, %s33
      %p61 = scmp.eq.s32.totalorder %s60, 0
      %s63 = sadd.s32 %s62, 1
      %s64 = scalar_select %p61, %s62, %s63
      %p67 = pneg %p61
      %p68 = scmp.eq.s32.totalorder %s26, 1
      %p69 = por %p67, %p68
      %p70 = scmp.ne.s32.totalorder %s62, %s65
      %p71 = scmp.eq.s32.totalorder %s26, 0
      %p72 = por %p70, %p71
      %p73 = scmp.ne.s32.totalorder %s62, %s65
      %p74 = scmp.eq.s32.totalorder %s31, 1
      %p75 = por %p73, %p74
      %p76 = scmp.ne.s32.totalorder %s65, %s66
      %p77 = scmp.eq.s32.totalorder %s31, 0
      %p78 = por %p76, %p77
      %p79 = scmp.ne.s32.totalorder %s65, %s66
      %p80 = scmp.eq.s32.totalorder %s32, 1
      %p81 = por %p79, %p80
      %p83 = scmp.ne.s32.totalorder %s66, %s82
      %p84 = scmp.eq.s32.totalorder %s32, 0
      %p85 = por %p83, %p84
      %s86 = ssub.s32 %s26, %s33
      %p87 = scmp.eq.s32.totalorder %s86, 0
      %s89 = sadd.s32 %s88, 1
      %s90 = scalar_select %p87, %s88, %s89
      %p93 = pneg %p87
      %p94 = scmp.eq.s32.totalorder %s26, 1
      %p95 = por %p93, %p94
      %p96 = scmp.ne.s32.totalorder %s88, %s91
      %p97 = scmp.eq.s32.totalorder %s26, 0
      %p98 = por %p96, %p97
      %p99 = scmp.ne.s32.totalorder %s88, %s91
      %p100 = scmp.eq.s32.totalorder %s31, 1
      %p101 = por %p99, %p100
      %p102 = scmp.ne.s32.totalorder %s91, %s92
      %p103 = scmp.eq.s32.totalorder %s31, 0
      %p104 = por %p102, %p103
      %p105 = scmp.ne.s32.totalorder %s91, %s92
      %p106 = scmp.eq.s32.totalorder %s32, 1
      %p107 = por %p105, %p106
      %p109 = scmp.ne.s32.totalorder %s92, %s108
      %p110 = scmp.eq.s32.totalorder %s32, 0
      %p111 = por %p109, %p110
      %s112 = ssub.s32 %s26, %s33
      %p113 = scmp.eq.s32.totalorder %s112, 0
      %s115 = sadd.s32 %s114, 1
      %s116 = scalar_select %p113, %s114, %s115
      %p119 = pneg %p113
      %p120 = scmp.eq.s32.totalorder %s26, 1
      %p121 = por %p119, %p120
      %p122 = scmp.ne.s32.totalorder %s114, %s117
      %p123 = scmp.eq.s32.totalorder %s26, 0
      %p124 = por %p122, %p123
      %p125 = scmp.ne.s32.totalorder %s114, %s117
      %p126 = scmp.eq.s32.totalorder %s31, 1
      %p127 = por %p125, %p126
      %p128 = scmp.ne.s32.totalorder %s117, %s118
      %p129 = scmp.eq.s32.totalorder %s31, 0
      %p130 = por %p128, %p129
      %p131 = scmp.ne.s32.totalorder %s117, %s118
      %p132 = scmp.eq.s32.totalorder %s32, 1
      %p133 = por %p131, %p132
      %p135 = scmp.ne.s32.totalorder %s118, %s134
      %p136 = scmp.eq.s32.totalorder %s32, 0
      %p137 = por %p135, %p136
      %s139 = sadd.s32 %s138, 1
      %p142 = scmp.eq.s32.totalorder %s26, 1
      %p143 = scmp.ne.s32.totalorder %s138, %s140
      %p144 = scmp.eq.s32.totalorder %s26, 0
      %p145 = por %p143, %p144
      %p146 = scmp.ne.s32.totalorder %s138, %s140
      %p147 = scmp.eq.s32.totalorder %s31, 1
      %p148 = por %p146, %p147
      %p149 = scmp.ne.s32.totalorder %s140, %s141
      %p150 = scmp.eq.s32.totalorder %s31, 0
      %p151 = por %p149, %p150
      %p152 = scmp.ne.s32.totalorder %s140, %s141
      %p153 = scmp.eq.s32.totalorder %s32, 1
      %p154 = por %p152, %p153
      %p156 = scmp.ne.s32.totalorder %s141, %s155
      %p157 = scmp.eq.s32.totalorder %s32, 0
      %p158 = por %p156, %p157
      %s160 = sadd.s32 %s159, 1
      %p163 = scmp.eq.s32.totalorder %s26, 1
      %p164 = scmp.ne.s32.totalorder %s159, %s161
      %p165 = scmp.eq.s32.totalorder %s26, 0
      %p166 = por %p164, %p165
      %p167 = scmp.ne.s32.totalorder %s159, %s161
      %p168 = scmp.eq.s32.totalorder %s31, 1
      %p169 = por %p167, %p168
      %p170 = scmp.ne.s32.totalorder %s161, %s162
      %p171 = scmp.eq.s32.totalorder %s31, 0
      %p172 = por %p170, %p171
      %p173 = scmp.ne.s32.totalorder %s161, %s162
      %p174 = scmp.eq.s32.totalorder %s32, 1
      %p175 = por %p173, %p174
      %p177 = scmp.ne.s32.totalorder %s162, %s176
      %p178 = scmp.eq.s32.totalorder %s32, 0
      %p179 = por %p177, %p178
      %s181 = sadd.s32 %s180, 1
      %p184 = scmp.eq.s32.totalorder %s26, 1
      %p185 = scmp.ne.s32.totalorder %s180, %s182
      %p186 = scmp.eq.s32.totalorder %s26, 0
      %p187 = por %p185, %p186
      %p188 = scmp.ne.s32.totalorder %s180, %s182
      %p189 = scmp.eq.s32.totalorder %s31, 1
      %p190 = por %p188, %p189
      %p191 = scmp.ne.s32.totalorder %s182, %s183
      %p192 = scmp.eq.s32.totalorder %s31, 0
      %p193 = por %p191, %p192
      %p194 = scmp.ne.s32.totalorder %s182, %s183
      %p195 = scmp.eq.s32.totalorder %s32, 1
      %p196 = por %p194, %p195
      %p198 = scmp.ne.s32.totalorder %s183, %s197
      %p199 = scmp.eq.s32.totalorder %s32, 0
      %p200 = por %p198, %p199
      %s202 = sadd.s32 %s201, 1
      %p205 = scmp.eq.s32.totalorder %s26, 1
      %p206 = scmp.ne.s32.totalorder %s201, %s203
      %p207 = scmp.eq.s32.totalorder %s26, 0
      %p208 = por %p206, %p207
      %p209 = scmp.ne.s32.totalorder %s201, %s203
      %p210 = scmp.eq.s32.totalorder %s31, 1
      %p211 = por %p209, %p210
      %p212 = scmp.ne.s32.totalorder %s203, %s204
      %p213 = scmp.eq.s32.totalorder %s31, 0
      %p214 = por %p212, %p213
      %p215 = scmp.ne.s32.totalorder %s203, %s204
      %p216 = scmp.eq.s32.totalorder %s32, 1
      %p217 = por %p215, %p216
      %p219 = scmp.ne.s32.totalorder %s204, %s218
      %p220 = scmp.eq.s32.totalorder %s32, 0
      %p221 = por %p219, %p220
      %s223 = sadd.s32 %s222, 1
      %p226 = scmp.eq.s32.totalorder %s26, 1
      %p227 = scmp.ne.s32.totalorder %s222, %s224
      %p228 = scmp.eq.s32.totalorder %s26, 0
      %p229 = por %p227, %p228
      %p230 = scmp.ne.s32.totalorder %s222, %s224
      %p231 = scmp.eq.s32.totalorder %s31, 1
      %p232 = por %p230, %p231
      %p233 = scmp.ne.s32.totalorder %s224, %s225
      %p234 = scmp.eq.s32.totalorder %s31, 0
      %p235 = por %p233, %p234
      %p236 = scmp.ne.s32.totalorder %s224, %s225
      %p237 = scmp.eq.s32.totalorder %s32, 1
      %p238 = por %p236, %p237
      %p240 = scmp.ne.s32.totalorder %s225, %s239
      %p241 = scmp.eq.s32.totalorder %s32, 0
      %p242 = por %p240, %p241
      %s244 = sadd.s32 %s243, 1
      %p247 = scmp.eq.s32.totalorder %s26, 1
      %p248 = scmp.ne.s32.totalorder %s243, %s245
      %p249 = scmp.eq.s32.totalorder %s26, 0
      %p250 = por %p248, %p249
      %p251 = scmp.ne.s32.totalorder %s243, %s245
      %p252 = scmp.eq.s32.totalorder %s31, 1
      %p253 = por %p251, %p252
      %p254 = scmp.ne.s32.totalorder %s245, %s246
      %p255 = scmp.eq.s32.totalorder %s31, 0
      %p256 = por %p254, %p255
      %p257 = scmp.ne.s32.totalorder %s245, %s246
      %p258 = scmp.eq.s32.totalorder %s32, 1
      %p259 = por %p257, %p258
      %p261 = scmp.ne.s32.totalorder %s246, %s260
      %p262 = scmp.eq.s32.totalorder %s32, 0
      %p263 = por %p261, %p262
      %s265 = sadd.s32 %s264, 1
      %p268 = scmp.eq.s32.totalorder %s26, 1
      %p269 = scmp.ne.s32.totalorder %s264, %s266
      %p270 = scmp.eq.s32.totalorder %s26, 0
      %p271 = por %p269, %p270
      %p272 = scmp.ne.s32.totalorder %s264, %s266
      %p273 = scmp.eq.s32.totalorder %s31, 1
      %p274 = por %p272, %p273
      %p275 = scmp.ne.s32.totalorder %s266, %s267
      %p276 = scmp.eq.s32.totalorder %s31, 0
      %p277 = por %p275, %p276
      %p278 = scmp.ne.s32.totalorder %s266, %s267
      %p279 = scmp.eq.s32.totalorder %s32, 1
      %p280 = por %p278, %p279
      %p282 = scmp.ne.s32.totalorder %s267, %s281
      %p283 = scmp.eq.s32.totalorder %s32, 0
      %p284 = por %p282, %p283
      %s286 = sadd.s32 %s285, 1
      %p289 = scmp.eq.s32.totalorder %s26, 1
      %p290 = scmp.ne.s32.totalorder %s285, %s287
      %p291 = scmp.eq.s32.totalorder %s26, 0
      %p292 = por %p290, %p291
      %p293 = scmp.ne.s32.totalorder %s285, %s287
      %p294 = scmp.eq.s32.totalorder %s31, 1
      %p295 = por %p293, %p294
      %p296 = scmp.ne.s32.totalorder %s287, %s288
      %p297 = scmp.eq.s32.totalorder %s31, 0
      %p298 = por %p296, %p297
      %p299 = scmp.ne.s32.totalorder %s287, %s288
      %p300 = scmp.eq.s32.totalorder %s32, 1
      %p301 = por %p299, %p300
      %p303 = scmp.ne.s32.totalorder %s288, %s302
      %p304 = scmp.eq.s32.totalorder %s32, 0
      %p305 = por %p303, %p304
      %s307 = sadd.s32 %s306, 1
      %p310 = scmp.eq.s32.totalorder %s26, 1
      %p311 = scmp.ne.s32.totalorder %s306, %s308
      %p312 = scmp.eq.s32.totalorder %s26, 0
      %p313 = por %p311, %p312
      %p314 = scmp.ne.s32.totalorder %s306, %s308
      %p315 = scmp.eq.s32.totalorder %s31, 1
      %p316 = por %p314, %p315
      %p317 = scmp.ne.s32.totalorder %s308, %s309
      %p318 = scmp.eq.s32.totalorder %s31, 0
      %p319 = por %p317, %p318
      %p320 = scmp.ne.s32.totalorder %s308, %s309
      %p321 = scmp.eq.s32.totalorder %s32, 1
      %p322 = por %p320, %p321
      %p324 = scmp.ne.s32.totalorder %s309, %s323
      %p325 = scmp.eq.s32.totalorder %s32, 0
      %p326 = por %p324, %p325
      %s328 = sadd.s32 %s327, 1
      %p331 = scmp.eq.s32.totalorder %s26, 1
      %p332 = scmp.ne.s32.totalorder %s327, %s329
      %p333 = scmp.eq.s32.totalorder %s26, 0
      %p334 = por %p332, %p333
      %p335 = scmp.ne.s32.totalorder %s327, %s329
      %p336 = scmp.eq.s32.totalorder %s31, 1
      %p337 = por %p335, %p336
      %p338 = scmp.ne.s32.totalorder %s329, %s330
      %p339 = scmp.eq.s32.totalorder %s31, 0
      %p340 = por %p338, %p339
      %p341 = scmp.ne.s32.totalorder %s329, %s330
      %p342 = scmp.eq.s32.totalorder %s32, 1
      %p343 = por %p341, %p342
      %p345 = scmp.ne.s32.totalorder %s330, %s344
      %p346 = scmp.eq.s32.totalorder %s32, 0
      %p347 = por %p345, %p346
      %s348 = ssub.s32 %s26, %s33
      %p349 = scmp.eq.s32.totalorder %s348, 0
      %s351 = sadd.s32 %s350, 1
      %s352 = scalar_select %p349, %s350, %s351
      %p355 = pneg %p349
      %p356 = scmp.eq.s32.totalorder %s26, 1
      %p357 = por %p355, %p356
      %p358 = scmp.ne.s32.totalorder %s350, %s353
      %p359 = scmp.eq.s32.totalorder %s26, 0
      %p360 = por %p358, %p359
      %p361 = scmp.ne.s32.totalorder %s350, %s353
      %p362 = scmp.eq.s32.totalorder %s31, 1
      %p363 = por %p361, %p362
      %p364 = scmp.ne.s32.totalorder %s353, %s354
      %p365 = scmp.eq.s32.totalorder %s31, 0
      %p366 = por %p364, %p365
      %p367 = scmp.ne.s32.totalorder %s353, %s354
      %p368 = scmp.eq.s32.totalorder %s32, 1
      %p369 = por %p367, %p368
      %p371 = scmp.ne.s32.totalorder %s354, %s370
      %p372 = scmp.eq.s32.totalorder %s32, 0
      %p373 = por %p371, %p372
      %p374 = scmp.le.s32.totalorder 1, %s26
      %p375 = scmp.lt.s32.totalorder %s26, 3
      %p376 = pnand %p374, %p375
      %p377 = pneg %p376
      // Predicated region
      $region9: #{tpu_custom_call.1} parent=5 // pred_check
        _
      $region10: #{tpu_custom_call.1} parent=5 // pred_check_branch
        %379 = sbr.rel (%p376) target = $region12
      $region11: #{tpu_custom_call.1} parent=5 // pred_region
        %s380 = ssub.s32 %s26, 1
        // Predicated region
        $region13: #{tpu_custom_call.1} parent=11 // pred_check
          %p381 = pneg %p151
        $region14: #{tpu_custom_call.1} parent=11 // pred_check_branch
          %383 = sbr.rel (%p381) target = $region16
        $region15: #{tpu_custom_call.1} parent=11 // pred_region
          _
        $region16: #{tpu_custom_call.1} parent=11 // pred_fallthru
          _
        // Predicated region
        $region17: #{tpu_custom_call.1} parent=11 // pred_check
          %p384 = pneg %p172
        $region18: #{tpu_custom_call.1} parent=11 // pred_check_branch
          %386 = sbr.rel (%p384) target = $region20
        $region19: #{tpu_custom_call.1} parent=11 // pred_region
          _
        $region20: #{tpu_custom_call.1} parent=11 // pred_fallthru
          _
        // Predicated region
        $region21: #{tpu_custom_call.1} parent=11 // pred_check
          %p387 = pneg %p193
        $region22: #{tpu_custom_call.1} parent=11 // pred_check_branch
          %389 = sbr.rel (%p387) target = $region24
        $region23: #{tpu_custom_call.1} parent=11 // pred_region
          _
        $region24: #{tpu_custom_call.1} parent=11 // pred_fallthru
          _
        // Predicated region
        $region25: #{tpu_custom_call.1} parent=11 // pred_check
          %p390 = pneg %p214
        $region26: #{tpu_custom_call.1} parent=11 // pred_check_branch
          %392 = sbr.rel (%p390) target = $region28
        $region27: #{tpu_custom_call.1} parent=11 // pred_region
          _
        $region28: #{tpu_custom_call.1} parent=11 // pred_fallthru
          _
        // Predicated region
        $region29: #{tpu_custom_call.1} parent=11 // pred_check
          %p393 = pneg %p235
        $region30: #{tpu_custom_call.1} parent=11 // pred_check_branch
          %395 = sbr.rel (%p393) target = $region32
        $region31: #{tpu_custom_call.1} parent=11 // pred_region
          _
        $region32: #{tpu_custom_call.1} parent=11 // pred_fallthru
          _
        // Predicated region
        $region33: #{tpu_custom_call.1} parent=11 // pred_check
          %p396 = pneg %p256
        $region34: #{tpu_custom_call.1} parent=11 // pred_check_branch
          %398 = sbr.rel (%p396) target = $region36
        $region35: #{tpu_custom_call.1} parent=11 // pred_region
          _
        $region36: #{tpu_custom_call.1} parent=11 // pred_fallthru
          _
        // Predicated region
        $region37: #{tpu_custom_call.1} parent=11 // pred_check
          %p399 = pneg %p277
        $region38: #{tpu_custom_call.1} parent=11 // pred_check_branch
          %401 = sbr.rel (%p399) target = $region40
        $region39: #{tpu_custom_call.1} parent=11 // pred_region
          _
        $region40: #{tpu_custom_call.1} parent=11 // pred_fallthru
          _
        // Predicated region
        $region41: #{tpu_custom_call.1} parent=11 // pred_check
          %p402 = pneg %p298
        $region42: #{tpu_custom_call.1} parent=11 // pred_check_branch
          %404 = sbr.rel (%p402) target = $region44
        $region43: #{tpu_custom_call.1} parent=11 // pred_region
          _
        $region44: #{tpu_custom_call.1} parent=11 // pred_fallthru
          _
        // Predicated region
        $region45: #{tpu_custom_call.1} parent=11 // pred_check
          %p405 = pneg %p319
        $region46: #{tpu_custom_call.1} parent=11 // pred_check_branch
          %407 = sbr.rel (%p405) target = $region48
        $region47: #{tpu_custom_call.1} parent=11 // pred_region
          _
        $region48: #{tpu_custom_call.1} parent=11 // pred_fallthru
          _
        // Predicated region
        $region49: #{tpu_custom_call.1} parent=11 // pred_check
          %p408 = pneg %p340
        $region50: #{tpu_custom_call.1} parent=11 // pred_check_branch
          %410 = sbr.rel (%p408) target = $region52
        $region51: #{tpu_custom_call.1} parent=11 // pred_region
          _
        $region52: #{tpu_custom_call.1} parent=11 // pred_fallthru
          _
      $region12: #{tpu_custom_call.1} parent=5 // pred_fallthru
        _
      %p411 = scmp.lt.s32.totalorder %s26, 2
      // Predicated region
      $region53: #{tpu_custom_call.1} parent=5 // pred_check
        %p412 = pneg %p411
      $region54: #{tpu_custom_call.1} parent=5 // pred_check_branch
        %414 = sbr.rel (%p412) target = $region56
      $region55: #{tpu_custom_call.1} parent=5 // pred_region
        // Predicated region
        $region57: #{tpu_custom_call.1} parent=55 // pred_check
          %p415 = pneg %p46
        $region58: #{tpu_custom_call.1} parent=55 // pred_check_branch
          %417 = sbr.rel (%p415) target = $region60
        $region59: #{tpu_custom_call.1} parent=55 // pred_region
          %s418 = sand.u32 %s36, 1
          %s419 = scalar_lea.sflag [#allocation3], %s418
          %s420 = sand.u32 %s36, 1
          %s421 = smul.addr %s420, 128
          %s422 = scalar_lea.vmem [#allocation2], %s421
          %s424 = ssub.s32 2048, 2048
          %425 = vsyncadd %s419, %s424
          %s426 = smul.addr %s26, 64
          %s427 = scalar_lea.hbm %s0, %s426
          %s428 = sshll.u32 %s422, 4
          %s429 = int_to_ptr.vmem [resolvable:$true] %s428
          %434 = dma.hbm_to_vmem [thread:$0]  %s427, 2048, %s429, %s419, 128, 64, 4
        $region60: #{tpu_custom_call.1} parent=55 // pred_fallthru
          _
        // Predicated region
        $region61: #{tpu_custom_call.1} parent=55 // pred_check
          %p435 = pneg %p72
        $region62: #{tpu_custom_call.1} parent=55 // pred_check_branch
          %437 = sbr.rel (%p435) target = $region64
        $region63: #{tpu_custom_call.1} parent=55 // pred_region
          %s438 = sand.u32 %s62, 1
          %s439 = sand.u32 %s62, 1
          %s440 = smul.addr %s439, 16
          %s441 = scalar_lea.vmem [#allocation5], %s440
          %s442 = smul.addr %s26, 4
          %s443 = scalar_lea.vmem %s1, %s442
          // Predicated region
          $region65: #{tpu_custom_call.1} parent=63 // pred_check
            _
          $region66: #{tpu_custom_call.1} parent=63 // pred_check_branch
            %445 = sbr.rel (0) target = $region68
          $region67: #{tpu_custom_call.1} parent=63 // pred_region
            // Predicated region
            $region69: #{tpu_custom_call.1} parent=67 // pred_check
              _
            $region70: #{tpu_custom_call.1} parent=67 // pred_check_branch
              %447 = sbr.rel target = $region72
            $region71: #{tpu_custom_call.1} parent=67 // pred_region
              // Predicated region
              $region84: #{tpu_custom_call.1} parent=71 // pred_check
                _
              $region85: #{tpu_custom_call.1} parent=71 // pred_check_branch
                %468 = sbr.rel (0) target = $region87
              $region86: #{tpu_custom_call.1} parent=71 // pred_region
                loop: start=0, step=1, limit=1
                $region88: #{tpu_custom_call.1} parent=86 // loop_pre_header
                  _
                $region89: #{tpu_custom_call.1} parent=86 // loop_header
                  %s470 = sphi 0, %s474
                  %p471 = scmp.ge.s32.totalorder %s470, 1
                  %s475 = sphi %s443, %s443
                  %s476 = sphi %s441, %s441
                $region90: #{tpu_custom_call.1} parent=86 // loop_header_branch
                  %473 = sbr.rel (%p471) target = $region94
                $region91: #{tpu_custom_call.1} parent=86 // loop_body
                  _
                $region92: #{tpu_custom_call.1} parent=86 // loop_footer
                  %s474 = sadd.s32 1, %s470
                $region93: #{tpu_custom_call.1} parent=86 // loop_footer_branch
                  %469 = sbr.rel target = $region89
                $region94: #{tpu_custom_call.1} parent=86 // loop_exit
                  _
                loop: start=0, step=1, limit=1
                $region95: #{tpu_custom_call.1} parent=86 // loop_pre_header
                  _
                $region96: #{tpu_custom_call.1} parent=86 // loop_header
                  %s479 = sphi 0, %s483
                  %p480 = scmp.ge.s32.totalorder %s479, 1
                  %s484 = sphi %s443, %s443
                  %s485 = sphi %s441, %s441
                $region97: #{tpu_custom_call.1} parent=86 // loop_header_branch
                  %482 = sbr.rel (%p480) target = $region101
                $region98: #{tpu_custom_call.1} parent=86 // loop_body
                  %v486 = vld [vmem:[%s484] sm:$0xf]
                  %487 = vst [vmem:[%s485] sm:$0xf] %v486
                  %v488 = vld [vmem:[%s484 + $0x8] sm:$0xf]
                  %489 = vst [vmem:[%s485 + $0x4] sm:$0xf] %v488
                  %v490 = vld [vmem:[%s484 + $0x10] sm:$0xf]
                  %491 = vst [vmem:[%s485 + $0x8] sm:$0xf] %v490
                  %v492 = vld [vmem:[%s484 + $0x18] sm:$0xf]
                  %493 = vst [vmem:[%s485 + $0xc] sm:$0xf] %v492
                $region99: #{tpu_custom_call.1} parent=86 // loop_footer
                  %s483 = sadd.s32 1, %s479
                $region100: #{tpu_custom_call.1} parent=86 // loop_footer_branch
                  %478 = sbr.rel target = $region96
                $region101: #{tpu_custom_call.1} parent=86 // loop_exit
                  _
              $region87: #{tpu_custom_call.1} parent=71 // pred_fallthru
                _
            $region72: #{tpu_custom_call.1} parent=67 // pred_fallthru
              _
            // Predicated region
            $region73: #{tpu_custom_call.1} parent=67 // pred_check
              _
            $region74: #{tpu_custom_call.1} parent=67 // pred_check_branch
              %449 = sbr.rel (0) target = $region76
            $region75: #{tpu_custom_call.1} parent=67 // pred_region
              loop: start=0, step=1, limit=1
              $region77: #{tpu_custom_call.1} parent=75 // loop_pre_header
                _
              $region78: #{tpu_custom_call.1} parent=75 // loop_header
                %s452 = sphi 0, %s456
                %p453 = scmp.ge.s32.totalorder %s452, 1
                %s457 = sphi %s443, %s443
                %s458 = sphi %s441, %s441
              $region79: #{tpu_custom_call.1} parent=75 // loop_header_branch
                %455 = sbr.rel (%p453) target = $region83
              $region80: #{tpu_custom_call.1} parent=75 // loop_body
                %v459 = vld [vmem:[%s457] sm:$0xf]
                %460 = vst [vmem:[%s458] sm:$0xf] %v459
                %v461 = vld [vmem:[%s457 + $0x8] sm:$0xf]
                %462 = vst [vmem:[%s458 + $0x4] sm:$0xf] %v461
                %v463 = vld [vmem:[%s457 + $0x10] sm:$0xf]
                %464 = vst [vmem:[%s458 + $0x8] sm:$0xf] %v463
                %v465 = vld [vmem:[%s457 + $0x18] sm:$0xf]
                %466 = vst [vmem:[%s458 + $0xc] sm:$0xf] %v465
              $region81: #{tpu_custom_call.1} parent=75 // loop_footer
                %s456 = sadd.s32 1, %s452
              $region82: #{tpu_custom_call.1} parent=75 // loop_footer_branch
                %451 = sbr.rel target = $region78
              $region83: #{tpu_custom_call.1} parent=75 // loop_exit
                _
            $region76: #{tpu_custom_call.1} parent=67 // pred_fallthru
              _
          $region68: #{tpu_custom_call.1} parent=63 // pred_fallthru
            _
          %494 = vnop
        $region64: #{tpu_custom_call.1} parent=55 // pred_fallthru
          _
        // Predicated region
        $region102: #{tpu_custom_call.1} parent=55 // pred_check
          %p495 = pneg %p98
        $region103: #{tpu_custom_call.1} parent=55 // pred_check_branch
          %497 = sbr.rel (%p495) target = $region105
        $region104: #{tpu_custom_call.1} parent=55 // pred_region
          %p498 = scmp.lt.s32.totalorder %s26, 1
          %s499 = scalar_select %p498, %s26, 1
          %s500 = smul.addr %s499, 8
          %s501 = scalar_lea.vmem %s2, %s500
        $region105: #{tpu_custom_call.1} parent=55 // pred_fallthru
          _
        // Predicated region
        $region106: #{tpu_custom_call.1} parent=55 // pred_check
          %p502 = pneg %p124
        $region107: #{tpu_custom_call.1} parent=55 // pred_check_branch
          %504 = sbr.rel (%p502) target = $region109
        $region108: #{tpu_custom_call.1} parent=55 // pred_region
          %p505 = scmp.lt.s32.totalorder %s26, 1
          %s506 = scalar_select %p505, %s26, 1
          %s507 = scalar_lea.vmem %s3, %s506
        $region109: #{tpu_custom_call.1} parent=55 // pred_fallthru
          _
      $region56: #{tpu_custom_call.1} parent=5 // pred_fallthru
        _
      %p508 = scmp.le.s32.totalorder 1, %s26
      %p509 = scmp.lt.s32.totalorder %s26, 3
      %p510 = pnand %p508, %p509
      %p511 = pneg %p510
      // Predicated region
      $region110: #{tpu_custom_call.1} parent=5 // pred_check
        _
      $region111: #{tpu_custom_call.1} parent=5 // pred_check_branch
        %513 = sbr.rel (%p510) target = $region113
      $region112: #{tpu_custom_call.1} parent=5 // pred_region
        %s514 = ssub.s32 %s26, 1
        %s515 = sand.u32 %s39, 1
        %s516 = scalar_lea.sflag [#allocation3], %s515
        %s517 = sand.u32 %s39, 1
        %s518 = smul.addr %s517, 128
        %s519 = scalar_lea.vmem [#allocation2], %s518
        // Predicated region
        $region114: #{tpu_custom_call.1} parent=112 // pred_check
          %p520 = pneg %p52
        $region115: #{tpu_custom_call.1} parent=112 // pred_check_branch
          %522 = sbr.rel (%p520) target = $region117
        $region116: #{tpu_custom_call.1} parent=112 // pred_region
          %523 = dma.done %s516, 2048
        $region117: #{tpu_custom_call.1} parent=112 // pred_fallthru
          _
        %s524 = sand.u32 %s65, 1
        %s525 = sand.u32 %s65, 1
        %s526 = smul.addr %s525, 16
        %s527 = scalar_lea.vmem [#allocation5], %s526
        // Predicated region
        $region118: #{tpu_custom_call.1} parent=112 // pred_check
          %p528 = pneg %p78
        $region119: #{tpu_custom_call.1} parent=112 // pred_check_branch
          %530 = sbr.rel (%p528) target = $region121
        $region120: #{tpu_custom_call.1} parent=112 // pred_region
          _
        $region121: #{tpu_custom_call.1} parent=112 // pred_fallthru
          _
        %s531 = sand.u32 %s39, 1
        %s532 = scalar_lea.sflag [#allocation3], %s531
        %s533 = sand.u32 %s39, 1
        %s534 = smul.addr %s533, 128
        %s535 = scalar_lea.vmem [#allocation2], %s534
        %p536 = pneg %p52
        %p537 = pneg %p49
        %s538 = sand.u32 %s65, 1
        %s539 = sand.u32 %s65, 1
        %s540 = smul.addr %s539, 16
        %s541 = scalar_lea.vmem [#allocation5], %s540
        %p542 = pneg %p78
        %p543 = pneg %p75
        %p544 = scmp.lt.s32.totalorder %s31, 1
        %s545 = scalar_select %p544, %s31, 1
        %s546 = smul.addr %s545, 8
        %s547 = scalar_lea.vmem %s2, %s546
        %p548 = pneg %p104
        %p549 = pneg %p101
        %p550 = scmp.lt.s32.totalorder %s31, 1
        %s551 = scalar_select %p550, %s31, 1
        %s552 = scalar_lea.vmem %s3, %s551
        %p553 = pneg %p130
        %p554 = pneg %p127
        %p555 = pneg %p151
        %p556 = pneg %p148
        %p557 = pneg %p172
        %p558 = pneg %p169
        %p559 = pneg %p193
        %p560 = pneg %p190
        %p561 = pneg %p214
        %p562 = pneg %p211
        %p563 = pneg %p235
        %p564 = pneg %p232
        %p565 = pneg %p256
        %p566 = pneg %p253
        %p567 = pneg %p277
        %p568 = pneg %p274
        %p569 = pneg %p298
        %p570 = pneg %p295
        %p571 = pneg %p319
        %p572 = pneg %p316
        %p573 = pneg %p340
        %p574 = pneg %p337
        %p575 = pneg %p366
        %p576 = pneg %p363
        %s577 = sand.u32 %s353, 1
        %s578 = scalar_lea.sflag [#allocation4], %s577
        %s579 = sand.u32 %s353, 1
        %s580 = smul.addr %s579, 32
        %s581 = scalar_lea.vmem [#allocation6], %s580
        %p582 = scmp.lt.s32.totalorder %s31, 1
        %s583 = scalar_select %p582, %s31, 1
        %s584 = smul.addr %s583, 8
        %s585 = scalar_lea.vmem %s2, %s584
        %p586 = scmp.lt.s32.totalorder %s31, 1
        %s587 = scalar_select %p586, %s31, 1
        %s588 = scalar_lea.vmem %s3, %s587
        %s590 = scalar_lea.vmem %s519, 112 [#allocation2]
        %v591 = vld [vmem:[%s590] sm:$0xf]
        %v592 = vld [vmem:[%s590 + $0x4] sm:$0xf]
        %v593 = vld [vmem:[%s590 + $0x8] sm:$0xf]
        %v594 = vld [vmem:[%s590 + $0xc] sm:$0xf]
        %v595 = vld [vmem:[%s527] sm:$0xf]
        %v596 = vld [vmem:[%s527 + $0x4] sm:$0xf]
        %v597 = vld [vmem:[%s527 + $0x8] sm:$0xf]
        %v598 = vld [vmem:[%s527 + $0xc] sm:$0xf]
        %v599 = vadd.bf16 %v591, %v595
        %v600 = vadd.bf16 %v592, %v596
        %v601 = vadd.bf16 %v593, %v597
        %v602 = vadd.bf16 %v594, %v598
        %v603 = vld [vmem:[%s4] sm:$0xf]
        %v604 = vld [vmem:[%s4 + $0x4] sm:$0xf]
        %v605 = vld [vmem:[%s4 + $0x8] sm:$0xf]
        %v606 = vld [vmem:[%s4 + $0xc] sm:$0xf]
        %v607 = vld [vmem:[%s5] sm:$0xff]
        %v608 = vld [vmem:[%s5 + $0x8] sm:$0xff]
        %v609 = vld [vmem:[%s5 + $0x10] sm:$0xff]
        %v610 = vld [vmem:[%s5 + $0x18] sm:$0xff]
        %612 = vset.pattern.permute.xlu0 0
        %613 = vperm.xlu0 %612, %v607
        %v614 = vpop.permute.xlu0 %613
        %617 = vset.pattern.permute.xlu0 0
        %618 = vperm.xlu0 %617, %v608
        %v619 = vpop.permute.xlu0 %618
        %622 = vset.pattern.permute.xlu0 0
        %623 = vperm.xlu0 %622, %v609
        %v624 = vpop.permute.xlu0 %623
        %627 = vset.pattern.permute.xlu0 0
        %628 = vperm.xlu0 %627, %v610
        %v629 = vpop.permute.xlu0 %628
        %v635 = vunpack.c.l.b16 %v603
        %v636 = vunpack.c.l.b16 %v604
        %v637 = vunpack.c.l.b16 %v605
        %v638 = vunpack.c.l.b16 %v606
        %v639 = vpack.c.b16 %v636, %v635
        %v640 = vpack.c.b16 %v638, %v637
        %v645 = vunpack.c.l.b16 %v599
        %v646 = vunpack.c.l.b16 %v600
        %v647 = vunpack.c.l.b16 %v601
        %v648 = vunpack.c.l.b16 %v602
        %v649 = vpack.c.b16 %v646, %v645
        %v650 = vpack.c.b16 %v648, %v647
        %vm653 = vcmask 261120
        %v655 = vsel %vm653, %v639, 0
        %v658 = vsel %vm653, %v640, 0
        %660 = vmatprep.subr.bf16.mxu0 0
        %661 = vmatpush1.bf16.msra.mxu0 %v649
        %662 = vmatprep.subr.bf16.mxu0 0
        %663 = vmatpush1.bf16.msra.mxu0 %v650
        %664 = vmatprep.subr.bf16.mxu0 0
        %665 = vmatpush1.bf16.msra.mxu0 0
        %666 = vmatprep.subr.bf16.mxu0 0
        %667 = vmatpush1.bf16.msra.mxu0 0
        %668 = vmatprep.subr.bf16.mxu0 0
        %669 = vmatpush1.bf16.msra.mxu0 0
        %670 = vmatprep.subr.bf16.mxu0 0
        %671 = vmatpush1.bf16.msra.mxu0 0
        %672 = vmatprep.subr.bf16.mxu0 0
        %673 = vmatpush1.bf16.msra.mxu0 0
        %674 = vmatprep.subr.bf16.mxu0 0
        %675 = vmatpush1.bf16.msra.mxu0 0
        %676 = vmatprep.subr.bf16.mxu0 0
        %677 = vmatpush1.bf16.msra.mxu0 0
        %678 = vmatprep.subr.bf16.mxu0 0
        %679 = vmatpush1.bf16.msra.mxu0 0
        %680 = vmatprep.subr.bf16.mxu0 0
        %681 = vmatpush1.bf16.msra.mxu0 0
        %682 = vmatprep.subr.bf16.mxu0 0
        %683 = vmatpush1.bf16.msra.mxu0 0
        %684 = vmatprep.subr.bf16.mxu0 0
        %685 = vmatpush1.bf16.msra.mxu0 0
        %686 = vmatprep.subr.bf16.mxu0 0
        %687 = vmatpush1.bf16.msra.mxu0 0
        %688 = vmatprep.subr.bf16.mxu0 0
        %689 = vmatpush1.bf16.msra.mxu0 0
        %690 = vmatprep.subr.bf16.mxu0 0
        %691 = vmatpush1.bf16.msra.mxu0 0
        %692 = vmatprep.mubr.bf16.mxu0 0
        %693 = vmatmul.mubr.bf16.gmra.mrb[0].mxu0 %v655
        %v694 = vpop.f32.mrb[0].mxu0
        %v695 = vadd.f32 %v614, %v694
        %v696 = vpop.f32.mrb[0].mxu0
        %v697 = vpop.f32.mrb[0].mxu0
        %v698 = vadd.f32 %v619, %v697
        %v699 = vpop.f32.mrb[0].mxu0
        %700 = vmatprep.mubr.bf16.mxu0 0
        %701 = vmatmul.mubr.bf16.gmra.mrb[0].mxu0 %v658
        %v702 = vpop.f32.mrb[0].mxu0
        %v703 = vadd.f32 %v624, %v702
        %v704 = vpop.f32.mrb[0].mxu0
        %v705 = vpop.f32.mrb[0].mxu0
        %v706 = vadd.f32 %v629, %v705
        %v707 = vpop.f32.mrb[0].mxu0
        %708 = vdwg.mxu0
        %v709 = vld [vmem:[%s585] sm:$0xff]
        %v710 = vld [vmem:[%s6] sm:$0xf]
        %v711 = vld [vmem:[%s6 + $0x4] sm:$0xf]
        %v712 = vld [vmem:[%s6 + $0x8] sm:$0xf]
        %v713 = vld [vmem:[%s6 + $0xc] sm:$0xf]
        %v714 = vld [vmem:[%s519] sm:$0xf]
        %v715 = vld [vmem:[%s519 + $0x4] sm:$0xf]
        %v716 = vld [vmem:[%s519 + $0x8] sm:$0xf]
        %v717 = vld [vmem:[%s519 + $0xc] sm:$0xf]
        %v722 = vunpack.c.l.b16 %v710
        %v723 = vunpack.c.l.b16 %v711
        %v724 = vunpack.c.l.b16 %v712
        %v725 = vunpack.c.l.b16 %v713
        %v726 = vpack.c.b16 %v723, %v722
        %v727 = vpack.c.b16 %v725, %v724
        %v732 = vunpack.c.l.b16 %v714
        %v733 = vunpack.c.l.b16 %v715
        %v734 = vunpack.c.l.b16 %v716
        %v735 = vunpack.c.l.b16 %v717
        %v736 = vpack.c.b16 %v733, %v732
        %v737 = vpack.c.b16 %v735, %v734
        %v741 = vsel %vm653, %v726, 0
        %v744 = vsel %vm653, %v727, 0
        %746 = vmatprep.subr.bf16.mxu0 0
        %747 = vmatpush1.bf16.msra.mxu0 %v736
        %748 = vmatprep.subr.bf16.mxu0 0
        %749 = vmatpush1.bf16.msra.mxu0 %v737
        %750 = vmatprep.subr.bf16.mxu0 0
        %751 = vmatpush1.bf16.msra.mxu0 0
        %752 = vmatprep.subr.bf16.mxu0 0
        %753 = vmatpush1.bf16.msra.mxu0 0
        %754 = vmatprep.subr.bf16.mxu0 0
        %755 = vmatpush1.bf16.msra.mxu0 0
        %756 = vmatprep.subr.bf16.mxu0 0
        %757 = vmatpush1.bf16.msra.mxu0 0
        %758 = vmatprep.subr.bf16.mxu0 0
        %759 = vmatpush1.bf16.msra.mxu0 0
        %760 = vmatprep.subr.bf16.mxu0 0
        %761 = vmatpush1.bf16.msra.mxu0 0
        %762 = vmatprep.subr.bf16.mxu0 0
        %763 = vmatpush1.bf16.msra.mxu0 0
        %764 = vmatprep.subr.bf16.mxu0 0
        %765 = vmatpush1.bf16.msra.mxu0 0
        %766 = vmatprep.subr.bf16.mxu0 0
        %767 = vmatpush1.bf16.msra.mxu0 0
        %768 = vmatprep.subr.bf16.mxu0 0
        %769 = vmatpush1.bf16.msra.mxu0 0
        %770 = vmatprep.subr.bf16.mxu0 0
        %771 = vmatpush1.bf16.msra.mxu0 0
        %772 = vmatprep.subr.bf16.mxu0 0
        %773 = vmatpush1.bf16.msra.mxu0 0
        %774 = vmatprep.subr.bf16.mxu0 0
        %775 = vmatpush1.bf16.msra.mxu0 0
        %776 = vmatprep.subr.bf16.mxu0 0
        %777 = vmatpush1.bf16.msra.mxu0 0
        %778 = vmatprep.mubr.bf16.mxu0 0
        %779 = vmatmul.mubr.bf16.gmra.mrb[0].mxu0 %v741
        %v780 = vpop.f32.mrb[0].mxu0
        %v781 = vadd.f32 0.0, %v780
        %v782 = vpop.f32.mrb[0].mxu0
        %v783 = vpop.f32.mrb[0].mxu0
        %v784 = vadd.f32 0.0, %v783
        %v785 = vpop.f32.mrb[0].mxu0
        %786 = vmatprep.mubr.bf16.mxu0 0
        %787 = vmatmul.mubr.bf16.gmra.mrb[0].mxu0 %v744
        %v788 = vpop.f32.mrb[0].mxu0
        %v789 = vadd.f32 0.0, %v788
        %v790 = vpop.f32.mrb[0].mxu0
        %v791 = vpop.f32.mrb[0].mxu0
        %v792 = vadd.f32 0.0, %v791
        %v793 = vpop.f32.mrb[0].mxu0
        %794 = vdwg.mxu0
        %v795 = vmul.f32 %v695, %v781
        %v796 = vmul.f32 %v698, %v784
        %v797 = vmul.f32 %v703, %v789
        %v798 = vmul.f32 %v706, %v792
        %v799 = vadd.f32 %v795, %v796
        %v800 = vrot.slane %v799, 4
        %v801 = vadd.f32 %v799, %v800
        %v802 = vrot.slane %v801, 2
        %v803 = vadd.f32 %v801, %v802
        %v804 = vrot.slane %v803, 1
        %v805 = vadd.f32 %v803, %v804
        %v806 = vadd.f32 %v797, %v798
        %v807 = vrot.slane %v806, 4
        %v808 = vadd.f32 %v806, %v807
        %v809 = vrot.slane %v808, 2
        %v810 = vadd.f32 %v808, %v809
        %v811 = vrot.slane %v810, 1
        %v812 = vadd.f32 %v810, %v811
        %s813 = scalar_lea.vmem %s519, 16 [#allocation2]
        %v814 = vld [vmem:[%s813] sm:$0xf]
        %v815 = vld [vmem:[%s813 + $0x4] sm:$0xf]
        %v816 = vld [vmem:[%s813 + $0x8] sm:$0xf]
        %v817 = vld [vmem:[%s813 + $0xc] sm:$0xf]
        %v822 = vunpack.c.l.b16 %v814
        %v823 = vunpack.c.l.b16 %v815
        %v824 = vunpack.c.l.b16 %v816
        %v825 = vunpack.c.l.b16 %v817
        %v826 = vpack.c.b16 %v823, %v822
        %v827 = vpack.c.b16 %v825, %v824
        %830 = vmatprep.subr.bf16.mxu0 0
        %831 = vmatpush1.bf16.msra.mxu0 %v826
        %832 = vmatprep.subr.bf16.mxu0 0
        %833 = vmatpush1.bf16.msra.mxu0 %v827
        %834 = vmatprep.subr.bf16.mxu0 0
        %835 = vmatpush1.bf16.msra.mxu0 0
        %836 = vmatprep.subr.bf16.mxu0 0
        %837 = vmatpush1.bf16.msra.mxu0 0
        %838 = vmatprep.subr.bf16.mxu0 0
        %839 = vmatpush1.bf16.msra.mxu0 0
        %840 = vmatprep.subr.bf16.mxu0 0
        %841 = vmatpush1.bf16.msra.mxu0 0
        %842 = vmatprep.subr.bf16.mxu0 0
        %843 = vmatpush1.bf16.msra.mxu0 0
        %844 = vmatprep.subr.bf16.mxu0 0
        %845 = vmatpush1.bf16.msra.mxu0 0
        %846 = vmatprep.subr.bf16.mxu0 0
        %847 = vmatpush1.bf16.msra.mxu0 0
        %848 = vmatprep.subr.bf16.mxu0 0
        %849 = vmatpush1.bf16.msra.mxu0 0
        %850 = vmatprep.subr.bf16.mxu0 0
        %851 = vmatpush1.bf16.msra.mxu0 0
        %852 = vmatprep.subr.bf16.mxu0 0
        %853 = vmatpush1.bf16.msra.mxu0 0
        %854 = vmatprep.subr.bf16.mxu0 0
        %855 = vmatpush1.bf16.msra.mxu0 0
        %856 = vmatprep.subr.bf16.mxu0 0
        %857 = vmatpush1.bf16.msra.mxu0 0
        %858 = vmatprep.subr.bf16.mxu0 0
        %859 = vmatpush1.bf16.msra.mxu0 0
        %860 = vmatprep.subr.bf16.mxu0 0
        %861 = vmatpush1.bf16.msra.mxu0 0
        %862 = vmatprep.mubr.bf16.mxu0 0
        %863 = vmatmul.mubr.bf16.gmra.mrb[0].mxu0 %v741
        %v864 = vpop.f32.mrb[0].mxu0
        %v865 = vadd.f32 0.0, %v864
        %v866 = vpop.f32.mrb[0].mxu0
        %v867 = vpop.f32.mrb[0].mxu0
        %v868 = vadd.f32 0.0, %v867
        %v869 = vpop.f32.mrb[0].mxu0
        %870 = vmatprep.mubr.bf16.mxu0 0
        %871 = vmatmul.mubr.bf16.gmra.mrb[0].mxu0 %v744
        %v872 = vpop.f32.mrb[0].mxu0
        %v873 = vadd.f32 0.0, %v872
        %v874 = vpop.f32.mrb[0].mxu0
        %v875 = vpop.f32.mrb[0].mxu0
        %v876 = vadd.f32 0.0, %v875
        %v877 = vpop.f32.mrb[0].mxu0
        %878 = vdwg.mxu0
        %v879 = vmul.f32 %v695, %v865
        %v880 = vmul.f32 %v698, %v868
        %v881 = vmul.f32 %v703, %v873
        %v882 = vmul.f32 %v706, %v876
        %v883 = vadd.f32 %v879, %v880
        %v884 = vrot.slane %v883, 4
        %v885 = vadd.f32 %v883, %v884
        %v886 = vrot.slane %v885, 2
        %v887 = vadd.f32 %v885, %v886
        %v888 = vrot.slane %v887, 1
        %v889 = vadd.f32 %v887, %v888
        %v890 = vadd.f32 %v881, %v882
        %v891 = vrot.slane %v890, 4
        %v892 = vadd.f32 %v890, %v891
        %v893 = vrot.slane %v892, 2
        %v894 = vadd.f32 %v892, %v893
        %v895 = vrot.slane %v894, 1
        %v896 = vadd.f32 %v894, %v895
        %s897 = scalar_lea.vmem %s519, 32 [#allocation2]
        %v898 = vld [vmem:[%s897] sm:$0xf]
        %v899 = vld [vmem:[%s897 + $0x4] sm:$0xf]
        %v900 = vld [vmem:[%s897 + $0x8] sm:$0xf]
        %v901 = vld [vmem:[%s897 + $0xc] sm:$0xf]
        %v906 = vunpack.c.l.b16 %v898
        %v907 = vunpack.c.l.b16 %v899
        %v908 = vunpack.c.l.b16 %v900
        %v909 = vunpack.c.l.b16 %v901
        %v910 = vpack.c.b16 %v907, %v906
        %v911 = vpack.c.b16 %v909, %v908
        %914 = vmatprep.subr.bf16.mxu0 0
        %915 = vmatpush1.bf16.msra.mxu0 %v910
        %916 = vmatprep.subr.bf16.mxu0 0
        %917 = vmatpush1.bf16.msra.mxu0 %v911
        %918 = vmatprep.subr.bf16.mxu0 0
        %919 = vmatpush1.bf16.msra.mxu0 0
        %920 = vmatprep.subr.bf16.mxu0 0
        %921 = vmatpush1.bf16.msra.mxu0 0
        %922 = vmatprep.subr.bf16.mxu0 0
        %923 = vmatpush1.bf16.msra.mxu0 0
        %924 = vmatprep.subr.bf16.mxu0 0
        %925 = vmatpush1.bf16.msra.mxu0 0
        %926 = vmatprep.subr.bf16.mxu0 0
        %927 = vmatpush1.bf16.msra.mxu0 0
        %928 = vmatprep.subr.bf16.mxu0 0
        %929 = vmatpush1.bf16.msra.mxu0 0
        %930 = vmatprep.subr.bf16.mxu0 0
        %931 = vmatpush1.bf16.msra.mxu0 0
        %932 = vmatprep.subr.bf16.mxu0 0
        %933 = vmatpush1.bf16.msra.mxu0 0
        %934 = vmatprep.subr.bf16.mxu0 0
        %935 = vmatpush1.bf16.msra.mxu0 0
        %936 = vmatprep.subr.bf16.mxu0 0
        %937 = vmatpush1.bf16.msra.mxu0 0
        %938 = vmatprep.subr.bf16.mxu0 0
        %939 = vmatpush1.bf16.msra.mxu0 0
        %940 = vmatprep.subr.bf16.mxu0 0
        %941 = vmatpush1.bf16.msra.mxu0 0
        %942 = vmatprep.subr.bf16.mxu0 0
        %943 = vmatpush1.bf16.msra.mxu0 0
        %944 = vmatprep.subr.bf16.mxu0 0
        %945 = vmatpush1.bf16.msra.mxu0 0
        %946 = vmatprep.mubr.bf16.mxu0 0
        %947 = vmatmul.mubr.bf16.gmra.mrb[0].mxu0 %v741
        %v948 = vpop.f32.mrb[0].mxu0
        %v949 = vadd.f32 0.0, %v948
        %v950 = vpop.f32.mrb[0].mxu0
        %v951 = vpop.f32.mrb[0].mxu0
        %v952 = vadd.f32 0.0, %v951
        %v953 = vpop.f32.mrb[0].mxu0
        %954 = vmatprep.mubr.bf16.mxu0 0
        %955 = vmatmul.mubr.bf16.gmra.mrb[0].mxu0 %v744
        %v956 = vpop.f32.mrb[0].mxu0
        %v957 = vadd.f32 0.0, %v956
        %v958 = vpop.f32.mrb[0].mxu0
        %v959 = vpop.f32.mrb[0].mxu0
        %v960 = vadd.f32 0.0, %v959
        %v961 = vpop.f32.mrb[0].mxu0
        %962 = vdwg.mxu0
        %v963 = vmul.f32 %v695, %v949
        %v964 = vmul.f32 %v698, %v952
        %v965 = vmul.f32 %v703, %v957
        %v966 = vmul.f32 %v706, %v960
        %v967 = vadd.f32 %v963, %v964
        %v968 = vrot.slane %v967, 4
        %v969 = vadd.f32 %v967, %v968
        %v970 = vrot.slane %v969, 2
        %v971 = vadd.f32 %v969, %v970
        %v972 = vrot.slane %v971, 1
        %v973 = vadd.f32 %v971, %v972
        %v974 = vadd.f32 %v965, %v966
        %v975 = vrot.slane %v974, 4
        %v976 = vadd.f32 %v974, %v975
        %v977 = vrot.slane %v976, 2
        %v978 = vadd.f32 %v976, %v977
        %v979 = vrot.slane %v978, 1
        %v980 = vadd.f32 %v978, %v979
        %s981 = scalar_lea.vmem %s519, 48 [#allocation2]
        %v982 = vld [vmem:[%s981] sm:$0xf]
        %v983 = vld [vmem:[%s981 + $0x4] sm:$0xf]
        %v984 = vld [vmem:[%s981 + $0x8] sm:$0xf]
        %v985 = vld [vmem:[%s981 + $0xc] sm:$0xf]
        %v990 = vunpack.c.l.b16 %v982
        %v991 = vunpack.c.l.b16 %v983
        %v992 = vunpack.c.l.b16 %v984
        %v993 = vunpack.c.l.b16 %v985
        %v994 = vpack.c.b16 %v991, %v990
        %v995 = vpack.c.b16 %v993, %v992
        %998 = vmatprep.subr.bf16.mxu0 0
        %999 = vmatpush1.bf16.msra.mxu0 %v994
        %1000 = vmatprep.subr.bf16.mxu0 0
        %1001 = vmatpush1.bf16.msra.mxu0 %v995
        %1002 = vmatprep.subr.bf16.mxu0 0
        %1003 = vmatpush1.bf16.msra.mxu0 0
        %1004 = vmatprep.subr.bf16.mxu0 0
        %1005 = vmatpush1.bf16.msra.mxu0 0
        %1006 = vmatprep.subr.bf16.mxu0 0
        %1007 = vmatpush1.bf16.msra.mxu0 0
        %1008 = vmatprep.subr.bf16.mxu0 0
        %1009 = vmatpush1.bf16.msra.mxu0 0
        %1010 = vmatprep.subr.bf16.mxu0 0
        %1011 = vmatpush1.bf16.msra.mxu0 0
        %1012 = vmatprep.subr.bf16.mxu0 0
        %1013 = vmatpush1.bf16.msra.mxu0 0
        %1014 = vmatprep.subr.bf16.mxu0 0
        %1015 = vmatpush1.bf16.msra.mxu0 0
        %1016 = vmatprep.subr.bf16.mxu0 0
        %1017 = vmatpush1.bf16.msra.mxu0 0
        %1018 = vmatprep.subr.bf16.mxu0 0
        %1019 = vmatpush1.bf16.msra.mxu0 0
        %1020 = vmatprep.subr.bf16.mxu0 0
        %1021 = vmatpush1.bf16.msra.mxu0 0
        %1022 = vmatprep.subr.bf16.mxu0 0
        %1023 = vmatpush1.bf16.msra.mxu0 0
        %1024 = vmatprep.subr.bf16.mxu0 0
        %1025 = vmatpush1.bf16.msra.mxu0 0
        %1026 = vmatprep.subr.bf16.mxu0 0
        %1027 = vmatpush1.bf16.msra.mxu0 0
        %1028 = vmatprep.subr.bf16.mxu0 0
        %1029 = vmatpush1.bf16.msra.mxu0 0
        %1030 = vmatprep.mubr.bf16.mxu0 0
        %1031 = vmatmul.mubr.bf16.gmra.mrb[0].mxu0 %v741
        %v1032 = vpop.f32.mrb[0].mxu0
        %v1033 = vadd.f32 0.0, %v1032
        %v1034 = vpop.f32.mrb[0].mxu0
        %v1035 = vpop.f32.mrb[0].mxu0
        %v1036 = vadd.f32 0.0, %v1035
        %v1037 = vpop.f32.mrb[0].mxu0
        %1038 = vmatprep.mubr.bf16.mxu0 0
        %1039 = vmatmul.mubr.bf16.gmra.mrb[0].mxu0 %v744
        %v1040 = vpop.f32.mrb[0].mxu0
        %v1041 = vadd.f32 0.0, %v1040
        %v1042 = vpop.f32.mrb[0].mxu0
        %v1043 = vpop.f32.mrb[0].mxu0
        %v1044 = vadd.f32 0.0, %v1043
        %v1045 = vpop.f32.mrb[0].mxu0
        %1046 = vdwg.mxu0
        %v1047 = vmul.f32 %v695, %v1033
        %v1048 = vmul.f32 %v698, %v1036
        %v1049 = vmul.f32 %v703, %v1041
        %v1050 = vmul.f32 %v706, %v1044
        %v1051 = vadd.f32 %v1047, %v1048
        %v1052 = vrot.slane %v1051, 4
        %v1053 = vadd.f32 %v1051, %v1052
        %v1054 = vrot.slane %v1053, 2
        %v1055 = vadd.f32 %v1053, %v1054
        %v1056 = vrot.slane %v1055, 1
        %v1057 = vadd.f32 %v1055, %v1056
        %v1058 = vadd.f32 %v1049, %v1050
        %v1059 = vrot.slane %v1058, 4
        %v1060 = vadd.f32 %v1058, %v1059
        %v1061 = vrot.slane %v1060, 2
        %v1062 = vadd.f32 %v1060, %v1061
        %v1063 = vrot.slane %v1062, 1
        %v1064 = vadd.f32 %v1062, %v1063
        %s1065 = scalar_lea.vmem %s519, 64 [#allocation2]
        %v1066 = vld [vmem:[%s1065] sm:$0xf]
        %v1067 = vld [vmem:[%s1065 + $0x4] sm:$0xf]
        %v1068 = vld [vmem:[%s1065 + $0x8] sm:$0xf]
        %v1069 = vld [vmem:[%s1065 + $0xc] sm:$0xf]
        %v1074 = vunpack.c.l.b16 %v1066
        %v1075 = vunpack.c.l.b16 %v1067
        %v1076 = vunpack.c.l.b16 %v1068
        %v1077 = vunpack.c.l.b16 %v1069
        %v1078 = vpack.c.b16 %v1075, %v1074
        %v1079 = vpack.c.b16 %v1077, %v1076
        %1082 = vmatprep.subr.bf16.mxu0 0
        %1083 = vmatpush1.bf16.msra.mxu0 %v1078
        %1084 = vmatprep.subr.bf16.mxu0 0
        %1085 = vmatpush1.bf16.msra.mxu0 %v1079
        %1086 = vmatprep.subr.bf16.mxu0 0
        %1087 = vmatpush1.bf16.msra.mxu0 0
        %1088 = vmatprep.subr.bf16.mxu0 0
        %1089 = vmatpush1.bf16.msra.mxu0 0
        %1090 = vmatprep.subr.bf16.mxu0 0
        %1091 = vmatpush1.bf16.msra.mxu0 0
        %1092 = vmatprep.subr.bf16.mxu0 0
        %1093 = vmatpush1.bf16.msra.mxu0 0
        %1094 = vmatprep.subr.bf16.mxu0 0
        %1095 = vmatpush1.bf16.msra.mxu0 0
        %1096 = vmatprep.subr.bf16.mxu0 0
        %1097 = vmatpush1.bf16.msra.mxu0 0
        %1098 = vmatprep.subr.bf16.mxu0 0
        %1099 = vmatpush1.bf16.msra.mxu0 0
        %1100 = vmatprep.subr.bf16.mxu0 0
        %1101 = vmatpush1.bf16.msra.mxu0 0
        %1102 = vmatprep.subr.bf16.mxu0 0
        %1103 = vmatpush1.bf16.msra.mxu0 0
        %1104 = vmatprep.subr.bf16.mxu0 0
        %1105 = vmatpush1.bf16.msra.mxu0 0
        %1106 = vmatprep.subr.bf16.mxu0 0
        %1107 = vmatpush1.bf16.msra.mxu0 0
        %1108 = vmatprep.subr.bf16.mxu0 0
        %1109 = vmatpush1.bf16.msra.mxu0 0
        %1110 = vmatprep.subr.bf16.mxu0 0
        %1111 = vmatpush1.bf16.msra.mxu0 0
        %1112 = vmatprep.subr.bf16.mxu0 0
        %1113 = vmatpush1.bf16.msra.mxu0 0
        %1114 = vmatprep.mubr.bf16.mxu0 0
        %1115 = vmatmul.mubr.bf16.gmra.mrb[0].mxu0 %v741
        %v1116 = vpop.f32.mrb[0].mxu0
        %v1117 = vadd.f32 0.0, %v1116
        %v1118 = vpop.f32.mrb[0].mxu0
        %v1119 = vpop.f32.mrb[0].mxu0
        %v1120 = vadd.f32 0.0, %v1119
        %v1121 = vpop.f32.mrb[0].mxu0
        %1122 = vmatprep.mubr.bf16.mxu0 0
        %1123 = vmatmul.mubr.bf16.gmra.mrb[0].mxu0 %v744
        %v1124 = vpop.f32.mrb[0].mxu0
        %v1125 = vadd.f32 0.0, %v1124
        %v1126 = vpop.f32.mrb[0].mxu0
        %v1127 = vpop.f32.mrb[0].mxu0
        %v1128 = vadd.f32 0.0, %v1127
        %v1129 = vpop.f32.mrb[0].mxu0
        %1130 = vdwg.mxu0
        %v1131 = vmul.f32 %v695, %v1117
        %v1132 = vmul.f32 %v698, %v1120
        %v1133 = vmul.f32 %v703, %v1125
        %v1134 = vmul.f32 %v706, %v1128
        %v1135 = vadd.f32 %v1131, %v1132
        %v1136 = vrot.slane %v1135, 4
        %v1137 = vadd.f32 %v1135, %v1136
        %v1138 = vrot.slane %v1137, 2
        %v1139 = vadd.f32 %v1137, %v1138
        %v1140 = vrot.slane %v1139, 1
        %v1141 = vadd.f32 %v1139, %v1140
        %v1142 = vadd.f32 %v1133, %v1134
        %v1143 = vrot.slane %v1142, 4
        %v1144 = vadd.f32 %v1142, %v1143
        %v1145 = vrot.slane %v1144, 2
        %v1146 = vadd.f32 %v1144, %v1145
        %v1147 = vrot.slane %v1146, 1
        %v1148 = vadd.f32 %v1146, %v1147
        %s1149 = scalar_lea.vmem %s519, 80 [#allocation2]
        %v1150 = vld [vmem:[%s1149] sm:$0xf]
        %v1151 = vld [vmem:[%s1149 + $0x4] sm:$0xf]
        %v1152 = vld [vmem:[%s1149 + $0x8] sm:$0xf]
        %v1153 = vld [vmem:[%s1149 + $0xc] sm:$0xf]
        %v1158 = vunpack.c.l.b16 %v1150
        %v1159 = vunpack.c.l.b16 %v1151
        %v1160 = vunpack.c.l.b16 %v1152
        %v1161 = vunpack.c.l.b16 %v1153
        %v1162 = vpack.c.b16 %v1159, %v1158
        %v1163 = vpack.c.b16 %v1161, %v1160
        %1166 = vmatprep.subr.bf16.mxu0 0
        %1167 = vmatpush1.bf16.msra.mxu0 %v1162
        %1168 = vmatprep.subr.bf16.mxu0 0
        %1169 = vmatpush1.bf16.msra.mxu0 %v1163
        %1170 = vmatprep.subr.bf16.mxu0 0
        %1171 = vmatpush1.bf16.msra.mxu0 0
        %1172 = vmatprep.subr.bf16.mxu0 0
        %1173 = vmatpush1.bf16.msra.mxu0 0
        %1174 = vmatprep.subr.bf16.mxu0 0
        %1175 = vmatpush1.bf16.msra.mxu0 0
        %1176 = vmatprep.subr.bf16.mxu0 0
        %1177 = vmatpush1.bf16.msra.mxu0 0
        %1178 = vmatprep.subr.bf16.mxu0 0
        %1179 = vmatpush1.bf16.msra.mxu0 0
        %1180 = vmatprep.subr.bf16.mxu0 0
        %1181 = vmatpush1.bf16.msra.mxu0 0
        %1182 = vmatprep.subr.bf16.mxu0 0
        %1183 = vmatpush1.bf16.msra.mxu0 0
        %1184 = vmatprep.subr.bf16.mxu0 0
        %1185 = vmatpush1.bf16.msra.mxu0 0
        %1186 = vmatprep.subr.bf16.mxu0 0
        %1187 = vmatpush1.bf16.msra.mxu0 0
        %1188 = vmatprep.subr.bf16.mxu0 0
        %1189 = vmatpush1.bf16.msra.mxu0 0
        %1190 = vmatprep.subr.bf16.mxu0 0
        %1191 = vmatpush1.bf16.msra.mxu0 0
        %1192 = vmatprep.subr.bf16.mxu0 0
        %1193 = vmatpush1.bf16.msra.mxu0 0
        %1194 = vmatprep.subr.bf16.mxu0 0
        %1195 = vmatpush1.bf16.msra.mxu0 0
        %1196 = vmatprep.subr.bf16.mxu0 0
        %1197 = vmatpush1.bf16.msra.mxu0 0
        %1198 = vmatprep.mubr.bf16.mxu0 0
        %1199 = vmatmul.mubr.bf16.gmra.mrb[0].mxu0 %v741
        %v1200 = vpop.f32.mrb[0].mxu0
        %v1201 = vadd.f32 0.0, %v1200
        %v1202 = vpop.f32.mrb[0].mxu0
        %v1203 = vpop.f32.mrb[0].mxu0
        %v1204 = vadd.f32 0.0, %v1203
        %v1205 = vpop.f32.mrb[0].mxu0
        %1206 = vmatprep.mubr.bf16.mxu0 0
        %1207 = vmatmul.mubr.bf16.gmra.mrb[0].mxu0 %v744
        %v1208 = vpop.f32.mrb[0].mxu0
        %v1209 = vadd.f32 0.0, %v1208
        %v1210 = vpop.f32.mrb[0].mxu0
        %v1211 = vpop.f32.mrb[0].mxu0
        %v1212 = vadd.f32 0.0, %v1211
        %v1213 = vpop.f32.mrb[0].mxu0
        %1214 = vdwg.mxu0
        %v1215 = vmul.f32 %v695, %v1201
        %v1216 = vmul.f32 %v698, %v1204
        %v1217 = vmul.f32 %v703, %v1209
        %v1218 = vmul.f32 %v706, %v1212
        %v1219 = vadd.f32 %v1215, %v1216
        %v1220 = vrot.slane %v1219, 4
        %v1221 = vadd.f32 %v1219, %v1220
        %v1222 = vrot.slane %v1221, 2
        %v1223 = vadd.f32 %v1221, %v1222
        %v1224 = vrot.slane %v1223, 1
        %v1225 = vadd.f32 %v1223, %v1224
        %v1226 = vadd.f32 %v1217, %v1218
        %v1227 = vrot.slane %v1226, 4
        %v1228 = vadd.f32 %v1226, %v1227
        %v1229 = vrot.slane %v1228, 2
        %v1230 = vadd.f32 %v1228, %v1229
        %v1231 = vrot.slane %v1230, 1
        %v1232 = vadd.f32 %v1230, %v1231
        %s1233 = scalar_lea.vmem %s519, 96 [#allocation2]
        %v1234 = vld [vmem:[%s1233] sm:$0xf]
        %v1235 = vld [vmem:[%s1233 + $0x4] sm:$0xf]
        %v1236 = vld [vmem:[%s1233 + $0x8] sm:$0xf]
        %v1237 = vld [vmem:[%s1233 + $0xc] sm:$0xf]
        %v1242 = vunpack.c.l.b16 %v1234
        %v1243 = vunpack.c.l.b16 %v1235
        %v1244 = vunpack.c.l.b16 %v1236
        %v1245 = vunpack.c.l.b16 %v1237
        %v1246 = vpack.c.b16 %v1243, %v1242
        %v1247 = vpack.c.b16 %v1245, %v1244
        %1250 = vmatprep.subr.bf16.mxu0 0
        %1251 = vmatpush1.bf16.msra.mxu0 %v1246
        %1252 = vmatprep.subr.bf16.mxu0 0
        %1253 = vmatpush1.bf16.msra.mxu0 %v1247
        %1254 = vmatprep.subr.bf16.mxu0 0
        %1255 = vmatpush1.bf16.msra.mxu0 0
        %1256 = vmatprep.subr.bf16.mxu0 0
        %1257 = vmatpush1.bf16.msra.mxu0 0
        %1258 = vmatprep.subr.bf16.mxu0 0
        %1259 = vmatpush1.bf16.msra.mxu0 0
        %1260 = vmatprep.subr.bf16.mxu0 0
        %1261 = vmatpush1.bf16.msra.mxu0 0
        %1262 = vmatprep.subr.bf16.mxu0 0
        %1263 = vmatpush1.bf16.msra.mxu0 0
        %1264 = vmatprep.subr.bf16.mxu0 0
        %1265 = vmatpush1.bf16.msra.mxu0 0
        %1266 = vmatprep.subr.bf16.mxu0 0
        %1267 = vmatpush1.bf16.msra.mxu0 0
        %1268 = vmatprep.subr.bf16.mxu0 0
        %1269 = vmatpush1.bf16.msra.mxu0 0
        %1270 = vmatprep.subr.bf16.mxu0 0
        %1271 = vmatpush1.bf16.msra.mxu0 0
        %1272 = vmatprep.subr.bf16.mxu0 0
        %1273 = vmatpush1.bf16.msra.mxu0 0
        %1274 = vmatprep.subr.bf16.mxu0 0
        %1275 = vmatpush1.bf16.msra.mxu0 0
        %1276 = vmatprep.subr.bf16.mxu0 0
        %1277 = vmatpush1.bf16.msra.mxu0 0
        %1278 = vmatprep.subr.bf16.mxu0 0
        %1279 = vmatpush1.bf16.msra.mxu0 0
        %1280 = vmatprep.subr.bf16.mxu0 0
        %1281 = vmatpush1.bf16.msra.mxu0 0
        %1282 = vmatprep.mubr.bf16.mxu0 0
        %1283 = vmatmul.mubr.bf16.gmra.mrb[0].mxu0 %v741
        %v1284 = vpop.f32.mrb[0].mxu0
        %v1285 = vadd.f32 0.0, %v1284
        %v1286 = vpop.f32.mrb[0].mxu0
        %v1287 = vpop.f32.mrb[0].mxu0
        %v1288 = vadd.f32 0.0, %v1287
        %v1289 = vpop.f32.mrb[0].mxu0
        %1290 = vmatprep.mubr.bf16.mxu0 0
        %1291 = vmatmul.mubr.bf16.gmra.mrb[0].mxu0 %v744
        %v1292 = vpop.f32.mrb[0].mxu0
        %v1293 = vadd.f32 0.0, %v1292
        %v1294 = vpop.f32.mrb[0].mxu0
        %v1295 = vpop.f32.mrb[0].mxu0
        %v1296 = vadd.f32 0.0, %v1295
        %v1297 = vpop.f32.mrb[0].mxu0
        %1298 = vdwg.mxu0
        %v1299 = vmul.f32 %v695, %v1285
        %v1300 = vmul.f32 %v698, %v1288
        %v1301 = vmul.f32 %v703, %v1293
        %v1302 = vmul.f32 %v706, %v1296
        %v1303 = vadd.f32 %v1299, %v1300
        %v1304 = vrot.slane %v1303, 4
        %v1305 = vadd.f32 %v1303, %v1304
        %v1306 = vrot.slane %v1305, 2
        %v1307 = vadd.f32 %v1305, %v1306
        %v1308 = vrot.slane %v1307, 1
        %v1309 = vadd.f32 %v1307, %v1308
        %v1310 = vadd.f32 %v1301, %v1302
        %v1311 = vrot.slane %v1310, 4
        %v1312 = vadd.f32 %v1310, %v1311
        %v1313 = vrot.slane %v1312, 2
        %v1314 = vadd.f32 %v1312, %v1313
        %v1315 = vrot.slane %v1314, 1
        %v1316 = vadd.f32 %v1314, %v1315
        %v1321 = vunpack.c.l.b16 %v591
        %v1322 = vunpack.c.l.b16 %v592
        %v1323 = vunpack.c.l.b16 %v593
        %v1324 = vunpack.c.l.b16 %v594
        %v1325 = vpack.c.b16 %v1322, %v1321
        %v1326 = vpack.c.b16 %v1324, %v1323
        %1329 = vmatprep.subr.bf16.mxu0 0
        %1330 = vmatpush1.bf16.msra.mxu0 %v1325
        %1331 = vmatprep.subr.bf16.mxu0 0
        %1332 = vmatpush1.bf16.msra.mxu0 %v1326
        %1333 = vmatprep.subr.bf16.mxu0 0
        %1334 = vmatpush1.bf16.msra.mxu0 0
        %1335 = vmatprep.subr.bf16.mxu0 0
        %1336 = vmatpush1.bf16.msra.mxu0 0
        %1337 = vmatprep.subr.bf16.mxu0 0
        %1338 = vmatpush1.bf16.msra.mxu0 0
        %1339 = vmatprep.subr.bf16.mxu0 0
        %1340 = vmatpush1.bf16.msra.mxu0 0
        %1341 = vmatprep.subr.bf16.mxu0 0
        %1342 = vmatpush1.bf16.msra.mxu0 0
        %1343 = vmatprep.subr.bf16.mxu0 0
        %1344 = vmatpush1.bf16.msra.mxu0 0
        %1345 = vmatprep.subr.bf16.mxu0 0
        %1346 = vmatpush1.bf16.msra.mxu0 0
        %1347 = vmatprep.subr.bf16.mxu0 0
        %1348 = vmatpush1.bf16.msra.mxu0 0
        %1349 = vmatprep.subr.bf16.mxu0 0
        %1350 = vmatpush1.bf16.msra.mxu0 0
        %1351 = vmatprep.subr.bf16.mxu0 0
        %1352 = vmatpush1.bf16.msra.mxu0 0
        %1353 = vmatprep.subr.bf16.mxu0 0
        %1354 = vmatpush1.bf16.msra.mxu0 0
        %1355 = vmatprep.subr.bf16.mxu0 0
        %1356 = vmatpush1.bf16.msra.mxu0 0
        %1357 = vmatprep.subr.bf16.mxu0 0
        %1358 = vmatpush1.bf16.msra.mxu0 0
        %1359 = vmatprep.subr.bf16.mxu0 0
        %1360 = vmatpush1.bf16.msra.mxu0 0
        %1361 = vmatprep.mubr.bf16.mxu0 0
        %1362 = vmatmul.mubr.bf16.gmra.mrb[0].mxu0 %v741
        %v1363 = vpop.f32.mrb[0].mxu0
        %v1364 = vadd.f32 0.0, %v1363
        %v1365 = vpop.f32.mrb[0].mxu0
        %v1366 = vpop.f32.mrb[0].mxu0
        %v1367 = vadd.f32 0.0, %v1366
        %v1368 = vpop.f32.mrb[0].mxu0
        %1369 = vmatprep.mubr.bf16.mxu0 0
        %1370 = vmatmul.mubr.bf16.gmra.mrb[0].mxu0 %v744
        %v1371 = vpop.f32.mrb[0].mxu0
        %v1372 = vadd.f32 0.0, %v1371
        %v1373 = vpop.f32.mrb[0].mxu0
        %v1374 = vpop.f32.mrb[0].mxu0
        %v1375 = vadd.f32 0.0, %v1374
        %v1376 = vpop.f32.mrb[0].mxu0
        %1377 = vdwg.mxu0
        %v1378 = vmul.f32 %v695, %v1364
        %v1379 = vmul.f32 %v698, %v1367
        %v1380 = vmul.f32 %v703, %v1372
        %v1381 = vmul.f32 %v706, %v1375
        %v1382 = vadd.f32 %v1378, %v1379
        %v1383 = vrot.slane %v1382, 4
        %v1384 = vadd.f32 %v1382, %v1383
        %v1385 = vrot.slane %v1384, 2
        %v1386 = vadd.f32 %v1384, %v1385
        %v1387 = vrot.slane %v1386, 1
        %v1388 = vadd.f32 %v1386, %v1387
        %v1389 = vadd.f32 %v1380, %v1381
        %v1390 = vrot.slane %v1389, 4
        %v1391 = vadd.f32 %v1389, %v1390
        %v1392 = vrot.slane %v1391, 2
        %v1393 = vadd.f32 %v1391, %v1392
        %v1394 = vrot.slane %v1393, 1
        %v1395 = vadd.f32 %v1393, %v1394
        %vm1396 = vcmask 1040384
        %v1397 = vsel %vm1396, %v805, %v889
        %vm1398 = vcmask 1041408
        %v1399 = vsel %vm1398, %v1397, %v973
        %vm1400 = vcmask 1042432
        %v1401 = vsel %vm1400, %v1399, %v1057
        %vm1402 = vcmask 1043456
        %v1403 = vsel %vm1402, %v1401, %v1141
        %vm1404 = vcmask 1044480
        %v1405 = vsel %vm1404, %v1403, %v1225
        %vm1406 = vcmask 1045504
        %v1407 = vsel %vm1406, %v1405, %v1309
        %vm1408 = vcmask 1046528
        %v1409 = vsel %vm1408, %v1407, %v1388
        %v1410 = vadd.f32 %v1409, %v709
        %v1411 = vrot.slane %v1410, 4
        %v1412 = vmax.f32 %v1410, %v1411
        %v1413 = vrot.slane %v1412, 2
        %v1414 = vmax.f32 %v1412, %v1413
        %v1415 = vrot.slane %v1414, 1
        %v1416 = vmax.f32 %v1414, %v1415
        %v1417 = vsub.f32 %v1410, %v1416
        %v1418 = vmul.f32 %v1417, 1.442695
        %v1419 = vpow.pop %v1418
        %v1420 = vrot.slane %v1419, 4
        %v1421 = vadd.f32 %v1419, %v1420
        %v1422 = vrot.slane %v1421, 2
        %v1423 = vadd.f32 %v1421, %v1422
        %v1424 = vrot.slane %v1423, 1
        %v1425 = vadd.f32 %v1423, %v1424
        %v1426 = vrcp.pop %v1425
        %v1427 = vmul.f32 %v1419, %v1426
        %v1428 = vsel %vm1396, %v812, %v896
        %v1429 = vsel %vm1398, %v1428, %v980
        %v1430 = vsel %vm1400, %v1429, %v1064
        %v1431 = vsel %vm1402, %v1430, %v1148
        %v1432 = vsel %vm1404, %v1431, %v1232
        %v1433 = vsel %vm1406, %v1432, %v1316
        %v1434 = vsel %vm1408, %v1433, %v1395
        %v1435 = vadd.f32 %v1434, %v709
        %v1436 = vrot.slane %v1435, 4
        %v1437 = vmax.f32 %v1435, %v1436
        %v1438 = vrot.slane %v1437, 2
        %v1439 = vmax.f32 %v1437, %v1438
        %v1440 = vrot.slane %v1439, 1
        %v1441 = vmax.f32 %v1439, %v1440
        %v1442 = vsub.f32 %v1435, %v1441
        %v1443 = vmul.f32 %v1442, 1.442695
        %v1444 = vpow.pop %v1443
        %v1445 = vrot.slane %v1444, 4
        %v1446 = vadd.f32 %v1444, %v1445
        %v1447 = vrot.slane %v1446, 2
        %v1448 = vadd.f32 %v1446, %v1447
        %v1449 = vrot.slane %v1448, 1
        %v1450 = vadd.f32 %v1448, %v1449
        %v1451 = vrcp.pop %v1450
        %v1452 = vmul.f32 %v1444, %v1451
        %v1453 = vld [vmem:[%s7] sm:$0xf]
        %v1454 = vld [vmem:[%s7 + $0x4] sm:$0xf]
        %v1455 = vld [vmem:[%s7 + $0x8] sm:$0xf]
        %v1456 = vld [vmem:[%s7 + $0xc] sm:$0xf]
        %v1461 = vunpack.c.l.b16 %v1453
        %v1462 = vunpack.c.l.b16 %v1454
        %v1463 = vunpack.c.l.b16 %v1455
        %v1464 = vunpack.c.l.b16 %v1456
        %v1465 = vpack.c.b16 %v1462, %v1461
        %v1466 = vpack.c.b16 %v1464, %v1463
        %v1468 = vsel %vm653, %v1465, 0
        %v1471 = vsel %vm653, %v1466, 0
        %1473 = vmatprep.subr.bf16.mxu0 0
        %1474 = vmatpush1.bf16.msra.mxu0 %v736
        %1475 = vmatprep.subr.bf16.mxu0 0
        %1476 = vmatpush1.bf16.msra.mxu0 %v737
        %1477 = vmatprep.subr.bf16.mxu0 0
        %1478 = vmatpush1.bf16.msra.mxu0 0
        %1479 = vmatprep.subr.bf16.mxu0 0
        %1480 = vmatpush1.bf16.msra.mxu0 0
        %1481 = vmatprep.subr.bf16.mxu0 0
        %1482 = vmatpush1.bf16.msra.mxu0 0
        %1483 = vmatprep.subr.bf16.mxu0 0
        %1484 = vmatpush1.bf16.msra.mxu0 0
        %1485 = vmatprep.subr.bf16.mxu0 0
        %1486 = vmatpush1.bf16.msra.mxu0 0
        %1487 = vmatprep.subr.bf16.mxu0 0
        %1488 = vmatpush1.bf16.msra.mxu0 0
        %1489 = vmatprep.subr.bf16.mxu0 0
        %1490 = vmatpush1.bf16.msra.mxu0 0
        %1491 = vmatprep.subr.bf16.mxu0 0
        %1492 = vmatpush1.bf16.msra.mxu0 0
        %1493 = vmatprep.subr.bf16.mxu0 0
        %1494 = vmatpush1.bf16.msra.mxu0 0
        %1495 = vmatprep.subr.bf16.mxu0 0
        %1496 = vmatpush1.bf16.msra.mxu0 0
        %1497 = vmatprep.subr.bf16.mxu0 0
        %1498 = vmatpush1.bf16.msra.mxu0 0
        %1499 = vmatprep.subr.bf16.mxu0 0
        %1500 = vmatpush1.bf16.msra.mxu0 0
        %1501 = vmatprep.subr.bf16.mxu0 0
        %1502 = vmatpush1.bf16.msra.mxu0 0
        %1503 = vmatprep.subr.bf16.mxu0 0
        %1504 = vmatpush1.bf16.msra.mxu0 0
        %1505 = vmatprep.mubr.bf16.mxu0 0
        %1506 = vmatmul.mubr.bf16.gmra.mrb[0].mxu0 %v1468
        %v1507 = vpop.f32.mrb[0].mxu0
        %v1508 = vadd.f32 0.0, %v1507
        %v1509 = vpop.f32.mrb[0].mxu0
        %v1510 = vpop.f32.mrb[0].mxu0
        %v1511 = vadd.f32 0.0, %v1510
        %v1512 = vpop.f32.mrb[0].mxu0
        %1513 = vmatprep.mubr.bf16.mxu0 0
        %1514 = vmatmul.mubr.bf16.gmra.mrb[0].mxu0 %v1471
        %v1515 = vpop.f32.mrb[0].mxu0
        %v1516 = vadd.f32 0.0, %v1515
        %v1517 = vpop.f32.mrb[0].mxu0
        %v1518 = vpop.f32.mrb[0].mxu0
        %v1519 = vadd.f32 0.0, %v1518
        %v1520 = vpop.f32.mrb[0].mxu0
        %1521 = vdwg.mxu0
        %v1522 = vlaneseq
        %v1523 = vshrl.u32 %v1522, 7
        %v1524 = vsub.s32 0, %v1523
        %v1525 = vrot.slane %v1427, %v1524
        %v1526 = vmul.f32 %v1525, %v1508
        %v1527 = vmul.f32 %v1525, %v1511
        %v1528 = vadd.f32 %v1526, 0.0
        %v1529 = vadd.f32 %v1527, 0.0
        %v1530 = vlaneseq
        %v1531 = vshrl.u32 %v1530, 7
        %v1532 = vsub.s32 0, %v1531
        %v1533 = vrot.slane %v1452, %v1532
        %v1534 = vmul.f32 %v1533, %v1516
        %v1535 = vmul.f32 %v1533, %v1519
        %v1536 = vadd.f32 %v1534, 0.0
        %v1537 = vadd.f32 %v1535, 0.0
        %1538 = vmatprep.subr.bf16.mxu0 0
        %1539 = vmatpush1.bf16.msra.mxu0 %v826
        %1540 = vmatprep.subr.bf16.mxu0 0
        %1541 = vmatpush1.bf16.msra.mxu0 %v827
        %1542 = vmatprep.subr.bf16.mxu0 0
        %1543 = vmatpush1.bf16.msra.mxu0 0
        %1544 = vmatprep.subr.bf16.mxu0 0
        %1545 = vmatpush1.bf16.msra.mxu0 0
        %1546 = vmatprep.subr.bf16.mxu0 0
        %1547 = vmatpush1.bf16.msra.mxu0 0
        %1548 = vmatprep.subr.bf16.mxu0 0
        %1549 = vmatpush1.bf16.msra.mxu0 0
        %1550 = vmatprep.subr.bf16.mxu0 0
        %1551 = vmatpush1.bf16.msra.mxu0 0
        %1552 = vmatprep.subr.bf16.mxu0 0
        %1553 = vmatpush1.bf16.msra.mxu0 0
        %1554 = vmatprep.subr.bf16.mxu0 0
        %1555 = vmatpush1.bf16.msra.mxu0 0
        %1556 = vmatprep.subr.bf16.mxu0 0
        %1557 = vmatpush1.bf16.msra.mxu0 0
        %1558 = vmatprep.subr.bf16.mxu0 0
        %1559 = vmatpush1.bf16.msra.mxu0 0
        %1560 = vmatprep.subr.bf16.mxu0 0
        %1561 = vmatpush1.bf16.msra.mxu0 0
        %1562 = vmatprep.subr.bf16.mxu0 0
        %1563 = vmatpush1.bf16.msra.mxu0 0
        %1564 = vmatprep.subr.bf16.mxu0 0
        %1565 = vmatpush1.bf16.msra.mxu0 0
        %1566 = vmatprep.subr.bf16.mxu0 0
        %1567 = vmatpush1.bf16.msra.mxu0 0
        %1568 = vmatprep.subr.bf16.mxu0 0
        %1569 = vmatpush1.bf16.msra.mxu0 0
        %1570 = vmatprep.mubr.bf16.mxu0 0
        %1571 = vmatmul.mubr.bf16.gmra.mrb[0].mxu0 %v1468
        %v1572 = vpop.f32.mrb[0].mxu0
        %v1573 = vadd.f32 0.0, %v1572
        %v1574 = vpop.f32.mrb[0].mxu0
        %v1575 = vpop.f32.mrb[0].mxu0
        %v1576 = vadd.f32 0.0, %v1575
        %v1577 = vpop.f32.mrb[0].mxu0
        %1578 = vmatprep.mubr.bf16.mxu0 0
        %1579 = vmatmul.mubr.bf16.gmra.mrb[0].mxu0 %v1471
        %v1580 = vpop.f32.mrb[0].mxu0
        %v1581 = vadd.f32 0.0, %v1580
        %v1582 = vpop.f32.mrb[0].mxu0
        %v1583 = vpop.f32.mrb[0].mxu0
        %v1584 = vadd.f32 0.0, %v1583
        %v1585 = vpop.f32.mrb[0].mxu0
        %1586 = vdwg.mxu0
        %v1587 = vlaneseq
        %v1588 = vshrl.u32 %v1587, 7
        %v1589 = vsub.s32 1, %v1588
        %v1590 = vrot.slane %v1427, %v1589
        %v1591 = vmul.f32 %v1590, %v1573
        %v1592 = vmul.f32 %v1590, %v1576
        %v1593 = vadd.f32 %v1528, %v1591
        %v1594 = vadd.f32 %v1529, %v1592
        %v1595 = vlaneseq
        %v1596 = vshrl.u32 %v1595, 7
        %v1597 = vsub.s32 1, %v1596
        %v1598 = vrot.slane %v1452, %v1597
        %v1599 = vmul.f32 %v1598, %v1581
        %v1600 = vmul.f32 %v1598, %v1584
        %v1601 = vadd.f32 %v1536, %v1599
        %v1602 = vadd.f32 %v1537, %v1600
        %1603 = vmatprep.subr.bf16.mxu0 0
        %1604 = vmatpush1.bf16.msra.mxu0 %v910
        %1605 = vmatprep.subr.bf16.mxu0 0
        %1606 = vmatpush1.bf16.msra.mxu0 %v911
        %1607 = vmatprep.subr.bf16.mxu0 0
        %1608 = vmatpush1.bf16.msra.mxu0 0
        %1609 = vmatprep.subr.bf16.mxu0 0
        %1610 = vmatpush1.bf16.msra.mxu0 0
        %1611 = vmatprep.subr.bf16.mxu0 0
        %1612 = vmatpush1.bf16.msra.mxu0 0
        %1613 = vmatprep.subr.bf16.mxu0 0
        %1614 = vmatpush1.bf16.msra.mxu0 0
        %1615 = vmatprep.subr.bf16.mxu0 0
        %1616 = vmatpush1.bf16.msra.mxu0 0
        %1617 = vmatprep.subr.bf16.mxu0 0
        %1618 = vmatpush1.bf16.msra.mxu0 0
        %1619 = vmatprep.subr.bf16.mxu0 0
        %1620 = vmatpush1.bf16.msra.mxu0 0
        %1621 = vmatprep.subr.bf16.mxu0 0
        %1622 = vmatpush1.bf16.msra.mxu0 0
        %1623 = vmatprep.subr.bf16.mxu0 0
        %1624 = vmatpush1.bf16.msra.mxu0 0
        %1625 = vmatprep.subr.bf16.mxu0 0
        %1626 = vmatpush1.bf16.msra.mxu0 0
        %1627 = vmatprep.subr.bf16.mxu0 0
        %1628 = vmatpush1.bf16.msra.mxu0 0
        %1629 = vmatprep.subr.bf16.mxu0 0
        %1630 = vmatpush1.bf16.msra.mxu0 0
        %1631 = vmatprep.subr.bf16.mxu0 0
        %1632 = vmatpush1.bf16.msra.mxu0 0
        %1633 = vmatprep.subr.bf16.mxu0 0
        %1634 = vmatpush1.bf16.msra.mxu0 0
        %1635 = vmatprep.mubr.bf16.mxu0 0
        %1636 = vmatmul.mubr.bf16.gmra.mrb[0].mxu0 %v1468
        %v1637 = vpop.f32.mrb[0].mxu0
        %v1638 = vadd.f32 0.0, %v1637
        %v1639 = vpop.f32.mrb[0].mxu0
        %v1640 = vpop.f32.mrb[0].mxu0
        %v1641 = vadd.f32 0.0, %v1640
        %v1642 = vpop.f32.mrb[0].mxu0
        %1643 = vmatprep.mubr.bf16.mxu0 0
        %1644 = vmatmul.mubr.bf16.gmra.mrb[0].mxu0 %v1471
        %v1645 = vpop.f32.mrb[0].mxu0
        %v1646 = vadd.f32 0.0, %v1645
        %v1647 = vpop.f32.mrb[0].mxu0
        %v1648 = vpop.f32.mrb[0].mxu0
        %v1649 = vadd.f32 0.0, %v1648
        %v1650 = vpop.f32.mrb[0].mxu0
        %1651 = vdwg.mxu0
        %v1652 = vlaneseq
        %v1653 = vshrl.u32 %v1652, 7
        %v1654 = vsub.s32 2, %v1653
        %v1655 = vrot.slane %v1427, %v1654
        %v1656 = vmul.f32 %v1655, %v1638
        %v1657 = vmul.f32 %v1655, %v1641
        %v1658 = vadd.f32 %v1593, %v1656
        %v1659 = vadd.f32 %v1594, %v1657
        %v1660 = vlaneseq
        %v1661 = vshrl.u32 %v1660, 7
        %v1662 = vsub.s32 2, %v1661
        %v1663 = vrot.slane %v1452, %v1662
        %v1664 = vmul.f32 %v1663, %v1646
        %v1665 = vmul.f32 %v1663, %v1649
        %v1666 = vadd.f32 %v1601, %v1664
        %v1667 = vadd.f32 %v1602, %v1665
        %1668 = vmatprep.subr.bf16.mxu0 0
        %1669 = vmatpush1.bf16.msra.mxu0 %v994
        %1670 = vmatprep.subr.bf16.mxu0 0
        %1671 = vmatpush1.bf16.msra.mxu0 %v995
        %1672 = vmatprep.subr.bf16.mxu0 0
        %1673 = vmatpush1.bf16.msra.mxu0 0
        %1674 = vmatprep.subr.bf16.mxu0 0
        %1675 = vmatpush1.bf16.msra.mxu0 0
        %1676 = vmatprep.subr.bf16.mxu0 0
        %1677 = vmatpush1.bf16.msra.mxu0 0
        %1678 = vmatprep.subr.bf16.mxu0 0
        %1679 = vmatpush1.bf16.msra.mxu0 0
        %1680 = vmatprep.subr.bf16.mxu0 0
        %1681 = vmatpush1.bf16.msra.mxu0 0
        %1682 = vmatprep.subr.bf16.mxu0 0
        %1683 = vmatpush1.bf16.msra.mxu0 0
        %1684 = vmatprep.subr.bf16.mxu0 0
        %1685 = vmatpush1.bf16.msra.mxu0 0
        %1686 = vmatprep.subr.bf16.mxu0 0
        %1687 = vmatpush1.bf16.msra.mxu0 0
        %1688 = vmatprep.subr.bf16.mxu0 0
        %1689 = vmatpush1.bf16.msra.mxu0 0
        %1690 = vmatprep.subr.bf16.mxu0 0
        %1691 = vmatpush1.bf16.msra.mxu0 0
        %1692 = vmatprep.subr.bf16.mxu0 0
        %1693 = vmatpush1.bf16.msra.mxu0 0
        %1694 = vmatprep.subr.bf16.mxu0 0
        %1695 = vmatpush1.bf16.msra.mxu0 0
        %1696 = vmatprep.subr.bf16.mxu0 0
        %1697 = vmatpush1.bf16.msra.mxu0 0
        %1698 = vmatprep.subr.bf16.mxu0 0
        %1699 = vmatpush1.bf16.msra.mxu0 0
        %1700 = vmatprep.mubr.bf16.mxu0 0
        %1701 = vmatmul.mubr.bf16.gmra.mrb[0].mxu0 %v1468
        %v1702 = vpop.f32.mrb[0].mxu0
        %v1703 = vadd.f32 0.0, %v1702
        %v1704 = vpop.f32.mrb[0].mxu0
        %v1705 = vpop.f32.mrb[0].mxu0
        %v1706 = vadd.f32 0.0, %v1705
        %v1707 = vpop.f32.mrb[0].mxu0
        %1708 = vmatprep.mubr.bf16.mxu0 0
        %1709 = vmatmul.mubr.bf16.gmra.mrb[0].mxu0 %v1471
        %v1710 = vpop.f32.mrb[0].mxu0
        %v1711 = vadd.f32 0.0, %v1710
        %v1712 = vpop.f32.mrb[0].mxu0
        %v1713 = vpop.f32.mrb[0].mxu0
        %v1714 = vadd.f32 0.0, %v1713
        %v1715 = vpop.f32.mrb[0].mxu0
        %1716 = vdwg.mxu0
        %v1717 = vlaneseq
        %v1718 = vshrl.u32 %v1717, 7
        %v1719 = vsub.s32 3, %v1718
        %v1720 = vrot.slane %v1427, %v1719
        %v1721 = vmul.f32 %v1720, %v1703
        %v1722 = vmul.f32 %v1720, %v1706
        %v1723 = vadd.f32 %v1658, %v1721
        %v1724 = vadd.f32 %v1659, %v1722
        %v1725 = vlaneseq
        %v1726 = vshrl.u32 %v1725, 7
        %v1727 = vsub.s32 3, %v1726
        %v1728 = vrot.slane %v1452, %v1727
        %v1729 = vmul.f32 %v1728, %v1711
        %v1730 = vmul.f32 %v1728, %v1714
        %v1731 = vadd.f32 %v1666, %v1729
        %v1732 = vadd.f32 %v1667, %v1730
        %1733 = vmatprep.subr.bf16.mxu0 0
        %1734 = vmatpush1.bf16.msra.mxu0 %v1078
        %1735 = vmatprep.subr.bf16.mxu0 0
        %1736 = vmatpush1.bf16.msra.mxu0 %v1079
        %1737 = vmatprep.subr.bf16.mxu0 0
        %1738 = vmatpush1.bf16.msra.mxu0 0
        %1739 = vmatprep.subr.bf16.mxu0 0
        %1740 = vmatpush1.bf16.msra.mxu0 0
        %1741 = vmatprep.subr.bf16.mxu0 0
        %1742 = vmatpush1.bf16.msra.mxu0 0
        %1743 = vmatprep.subr.bf16.mxu0 0
        %1744 = vmatpush1.bf16.msra.mxu0 0
        %1745 = vmatprep.subr.bf16.mxu0 0
        %1746 = vmatpush1.bf16.msra.mxu0 0
        %1747 = vmatprep.subr.bf16.mxu0 0
        %1748 = vmatpush1.bf16.msra.mxu0 0
        %1749 = vmatprep.subr.bf16.mxu0 0
        %1750 = vmatpush1.bf16.msra.mxu0 0
        %1751 = vmatprep.subr.bf16.mxu0 0
        %1752 = vmatpush1.bf16.msra.mxu0 0
        %1753 = vmatprep.subr.bf16.mxu0 0
        %1754 = vmatpush1.bf16.msra.mxu0 0
        %1755 = vmatprep.subr.bf16.mxu0 0
        %1756 = vmatpush1.bf16.msra.mxu0 0
        %1757 = vmatprep.subr.bf16.mxu0 0
        %1758 = vmatpush1.bf16.msra.mxu0 0
        %1759 = vmatprep.subr.bf16.mxu0 0
        %1760 = vmatpush1.bf16.msra.mxu0 0
        %1761 = vmatprep.subr.bf16.mxu0 0
        %1762 = vmatpush1.bf16.msra.mxu0 0
        %1763 = vmatprep.subr.bf16.mxu0 0
        %1764 = vmatpush1.bf16.msra.mxu0 0
        %1765 = vmatprep.mubr.bf16.mxu0 0
        %1766 = vmatmul.mubr.bf16.gmra.mrb[0].mxu0 %v1468
        %v1767 = vpop.f32.mrb[0].mxu0
        %v1768 = vadd.f32 0.0, %v1767
        %v1769 = vpop.f32.mrb[0].mxu0
        %v1770 = vpop.f32.mrb[0].mxu0
        %v1771 = vadd.f32 0.0, %v1770
        %v1772 = vpop.f32.mrb[0].mxu0
        %1773 = vmatprep.mubr.bf16.mxu0 0
        %1774 = vmatmul.mubr.bf16.gmra.mrb[0].mxu0 %v1471
        %v1775 = vpop.f32.mrb[0].mxu0
        %v1776 = vadd.f32 0.0, %v1775
        %v1777 = vpop.f32.mrb[0].mxu0
        %v1778 = vpop.f32.mrb[0].mxu0
        %v1779 = vadd.f32 0.0, %v1778
        %v1780 = vpop.f32.mrb[0].mxu0
        %1781 = vdwg.mxu0
        %v1782 = vlaneseq
        %v1783 = vshrl.u32 %v1782, 7
        %v1784 = vsub.s32 4, %v1783
        %v1785 = vrot.slane %v1427, %v1784
        %v1786 = vmul.f32 %v1785, %v1768
        %v1787 = vmul.f32 %v1785, %v1771
        %v1788 = vadd.f32 %v1723, %v1786
        %v1789 = vadd.f32 %v1724, %v1787
        %v1790 = vlaneseq
        %v1791 = vshrl.u32 %v1790, 7
        %v1792 = vsub.s32 4, %v1791
        %v1793 = vrot.slane %v1452, %v1792
        %v1794 = vmul.f32 %v1793, %v1776
        %v1795 = vmul.f32 %v1793, %v1779
        %v1796 = vadd.f32 %v1731, %v1794
        %v1797 = vadd.f32 %v1732, %v1795
        %1798 = vmatprep.subr.bf16.mxu0 0
        %1799 = vmatpush1.bf16.msra.mxu0 %v1162
        %1800 = vmatprep.subr.bf16.mxu0 0
        %1801 = vmatpush1.bf16.msra.mxu0 %v1163
        %1802 = vmatprep.subr.bf16.mxu0 0
        %1803 = vmatpush1.bf16.msra.mxu0 0
        %1804 = vmatprep.subr.bf16.mxu0 0
        %1805 = vmatpush1.bf16.msra.mxu0 0
        %1806 = vmatprep.subr.bf16.mxu0 0
        %1807 = vmatpush1.bf16.msra.mxu0 0
        %1808 = vmatprep.subr.bf16.mxu0 0
        %1809 = vmatpush1.bf16.msra.mxu0 0
        %1810 = vmatprep.subr.bf16.mxu0 0
        %1811 = vmatpush1.bf16.msra.mxu0 0
        %1812 = vmatprep.subr.bf16.mxu0 0
        %1813 = vmatpush1.bf16.msra.mxu0 0
        %1814 = vmatprep.subr.bf16.mxu0 0
        %1815 = vmatpush1.bf16.msra.mxu0 0
        %1816 = vmatprep.subr.bf16.mxu0 0
        %1817 = vmatpush1.bf16.msra.mxu0 0
        %1818 = vmatprep.subr.bf16.mxu0 0
        %1819 = vmatpush1.bf16.msra.mxu0 0
        %1820 = vmatprep.subr.bf16.mxu0 0
        %1821 = vmatpush1.bf16.msra.mxu0 0
        %1822 = vmatprep.subr.bf16.mxu0 0
        %1823 = vmatpush1.bf16.msra.mxu0 0
        %1824 = vmatprep.subr.bf16.mxu0 0
        %1825 = vmatpush1.bf16.msra.mxu0 0
        %1826 = vmatprep.subr.bf16.mxu0 0
        %1827 = vmatpush1.bf16.msra.mxu0 0
        %1828 = vmatprep.subr.bf16.mxu0 0
        %1829 = vmatpush1.bf16.msra.mxu0 0
        %1830 = vmatprep.mubr.bf16.mxu0 0
        %1831 = vmatmul.mubr.bf16.gmra.mrb[0].mxu0 %v1468
        %v1832 = vpop.f32.mrb[0].mxu0
        %v1833 = vadd.f32 0.0, %v1832
        %v1834 = vpop.f32.mrb[0].mxu0
        %v1835 = vpop.f32.mrb[0].mxu0
        %v1836 = vadd.f32 0.0, %v1835
        %v1837 = vpop.f32.mrb[0].mxu0
        %1838 = vmatprep.mubr.bf16.mxu0 0
        %1839 = vmatmul.mubr.bf16.gmra.mrb[0].mxu0 %v1471
        %v1840 = vpop.f32.mrb[0].mxu0
        %v1841 = vadd.f32 0.0, %v1840
        %v1842 = vpop.f32.mrb[0].mxu0
        %v1843 = vpop.f32.mrb[0].mxu0
        %v1844 = vadd.f32 0.0, %v1843
        %v1845 = vpop.f32.mrb[0].mxu0
        %1846 = vdwg.mxu0
        %v1847 = vlaneseq
        %v1848 = vshrl.u32 %v1847, 7
        %v1849 = vsub.s32 5, %v1848
        %v1850 = vrot.slane %v1427, %v1849
        %v1851 = vmul.f32 %v1850, %v1833
        %v1852 = vmul.f32 %v1850, %v1836
        %v1853 = vadd.f32 %v1788, %v1851
        %v1854 = vadd.f32 %v1789, %v1852
        %v1855 = vlaneseq
        %v1856 = vshrl.u32 %v1855, 7
        %v1857 = vsub.s32 5, %v1856
        %v1858 = vrot.slane %v1452, %v1857
        %v1859 = vmul.f32 %v1858, %v1841
        %v1860 = vmul.f32 %v1858, %v1844
        %v1861 = vadd.f32 %v1796, %v1859
        %v1862 = vadd.f32 %v1797, %v1860
        %1863 = vmatprep.subr.bf16.mxu0 0
        %1864 = vmatpush1.bf16.msra.mxu0 %v1246
        %1865 = vmatprep.subr.bf16.mxu0 0
        %1866 = vmatpush1.bf16.msra.mxu0 %v1247
        %1867 = vmatprep.subr.bf16.mxu0 0
        %1868 = vmatpush1.bf16.msra.mxu0 0
        %1869 = vmatprep.subr.bf16.mxu0 0
        %1870 = vmatpush1.bf16.msra.mxu0 0
        %1871 = vmatprep.subr.bf16.mxu0 0
        %1872 = vmatpush1.bf16.msra.mxu0 0
        %1873 = vmatprep.subr.bf16.mxu0 0
        %1874 = vmatpush1.bf16.msra.mxu0 0
        %1875 = vmatprep.subr.bf16.mxu0 0
        %1876 = vmatpush1.bf16.msra.mxu0 0
        %1877 = vmatprep.subr.bf16.mxu0 0
        %1878 = vmatpush1.bf16.msra.mxu0 0
        %1879 = vmatprep.subr.bf16.mxu0 0
        %1880 = vmatpush1.bf16.msra.mxu0 0
        %1881 = vmatprep.subr.bf16.mxu0 0
        %1882 = vmatpush1.bf16.msra.mxu0 0
        %1883 = vmatprep.subr.bf16.mxu0 0
        %1884 = vmatpush1.bf16.msra.mxu0 0
        %1885 = vmatprep.subr.bf16.mxu0 0
        %1886 = vmatpush1.bf16.msra.mxu0 0
        %1887 = vmatprep.subr.bf16.mxu0 0
        %1888 = vmatpush1.bf16.msra.mxu0 0
        %1889 = vmatprep.subr.bf16.mxu0 0
        %1890 = vmatpush1.bf16.msra.mxu0 0
        %1891 = vmatprep.subr.bf16.mxu0 0
        %1892 = vmatpush1.bf16.msra.mxu0 0
        %1893 = vmatprep.subr.bf16.mxu0 0
        %1894 = vmatpush1.bf16.msra.mxu0 0
        %1895 = vmatprep.mubr.bf16.mxu0 0
        %1896 = vmatmul.mubr.bf16.gmra.mrb[0].mxu0 %v1468
        %v1897 = vpop.f32.mrb[0].mxu0
        %v1898 = vadd.f32 0.0, %v1897
        %v1899 = vpop.f32.mrb[0].mxu0
        %v1900 = vpop.f32.mrb[0].mxu0
        %v1901 = vadd.f32 0.0, %v1900
        %v1902 = vpop.f32.mrb[0].mxu0
        %1903 = vmatprep.mubr.bf16.mxu0 0
        %1904 = vmatmul.mubr.bf16.gmra.mrb[0].mxu0 %v1471
        %v1905 = vpop.f32.mrb[0].mxu0
        %v1906 = vadd.f32 0.0, %v1905
        %v1907 = vpop.f32.mrb[0].mxu0
        %v1908 = vpop.f32.mrb[0].mxu0
        %v1909 = vadd.f32 0.0, %v1908
        %v1910 = vpop.f32.mrb[0].mxu0
        %1911 = vdwg.mxu0
        %v1912 = vlaneseq
        %v1913 = vshrl.u32 %v1912, 7
        %v1914 = vsub.s32 6, %v1913
        %v1915 = vrot.slane %v1427, %v1914
        %v1916 = vmul.f32 %v1915, %v1898
        %v1917 = vmul.f32 %v1915, %v1901
        %v1918 = vadd.f32 %v1853, %v1916
        %v1919 = vadd.f32 %v1854, %v1917
        %v1920 = vlaneseq
        %v1921 = vshrl.u32 %v1920, 7
        %v1922 = vsub.s32 6, %v1921
        %v1923 = vrot.slane %v1452, %v1922
        %v1924 = vmul.f32 %v1923, %v1906
        %v1925 = vmul.f32 %v1923, %v1909
        %v1926 = vadd.f32 %v1861, %v1924
        %v1927 = vadd.f32 %v1862, %v1925
        %1928 = vmatprep.subr.bf16.mxu0 0
        %1929 = vmatpush1.bf16.msra.mxu0 %v1325
        %1930 = vmatprep.subr.bf16.mxu0 0
        %1931 = vmatpush1.bf16.msra.mxu0 %v1326
        %1932 = vmatprep.subr.bf16.mxu0 0
        %1933 = vmatpush1.bf16.msra.mxu0 0
        %1934 = vmatprep.subr.bf16.mxu0 0
        %1935 = vmatpush1.bf16.msra.mxu0 0
        %1936 = vmatprep.subr.bf16.mxu0 0
        %1937 = vmatpush1.bf16.msra.mxu0 0
        %1938 = vmatprep.subr.bf16.mxu0 0
        %1939 = vmatpush1.bf16.msra.mxu0 0
        %1940 = vmatprep.subr.bf16.mxu0 0
        %1941 = vmatpush1.bf16.msra.mxu0 0
        %1942 = vmatprep.subr.bf16.mxu0 0
        %1943 = vmatpush1.bf16.msra.mxu0 0
        %1944 = vmatprep.subr.bf16.mxu0 0
        %1945 = vmatpush1.bf16.msra.mxu0 0
        %1946 = vmatprep.subr.bf16.mxu0 0
        %1947 = vmatpush1.bf16.msra.mxu0 0
        %1948 = vmatprep.subr.bf16.mxu0 0
        %1949 = vmatpush1.bf16.msra.mxu0 0
        %1950 = vmatprep.subr.bf16.mxu0 0
        %1951 = vmatpush1.bf16.msra.mxu0 0
        %1952 = vmatprep.subr.bf16.mxu0 0
        %1953 = vmatpush1.bf16.msra.mxu0 0
        %1954 = vmatprep.subr.bf16.mxu0 0
        %1955 = vmatpush1.bf16.msra.mxu0 0
        %1956 = vmatprep.subr.bf16.mxu0 0
        %1957 = vmatpush1.bf16.msra.mxu0 0
        %1958 = vmatprep.subr.bf16.mxu0 0
        %1959 = vmatpush1.bf16.msra.mxu0 0
        %1960 = vmatprep.mubr.bf16.mxu0 0
        %1961 = vmatmul.mubr.bf16.gmra.mrb[0].mxu0 %v1468
        %v1962 = vpop.f32.mrb[0].mxu0
        %v1963 = vadd.f32 0.0, %v1962
        %v1964 = vpop.f32.mrb[0].mxu0
        %v1965 = vpop.f32.mrb[0].mxu0
        %v1966 = vadd.f32 0.0, %v1965
        %v1967 = vpop.f32.mrb[0].mxu0
        %1968 = vmatprep.mubr.bf16.mxu0 0
        %1969 = vmatmul.mubr.bf16.gmra.mrb[0].mxu0 %v1471
        %v1970 = vpop.f32.mrb[0].mxu0
        %v1971 = vadd.f32 0.0, %v1970
        %v1972 = vpop.f32.mrb[0].mxu0
        %v1973 = vpop.f32.mrb[0].mxu0
        %v1974 = vadd.f32 0.0, %v1973
        %v1975 = vpop.f32.mrb[0].mxu0
        %1976 = vdwg.mxu0
        %v1977 = vlaneseq
        %v1978 = vshrl.u32 %v1977, 7
        %v1979 = vsub.s32 7, %v1978
        %v1980 = vrot.slane %v1427, %v1979
        %v1981 = vmul.f32 %v1980, %v1963
        %v1982 = vmul.f32 %v1980, %v1966
        %v1983 = vadd.f32 %v1918, %v1981
        %v1984 = vadd.f32 %v1919, %v1982
        %v1985 = vlaneseq
        %v1986 = vshrl.u32 %v1985, 7
        %v1987 = vsub.s32 7, %v1986
        %v1988 = vrot.slane %v1452, %v1987
        %v1989 = vmul.f32 %v1988, %v1971
        %v1990 = vmul.f32 %v1988, %v1974
        %v1991 = vadd.f32 %v1926, %v1989
        %v1992 = vadd.f32 %v1927, %v1990
        %v1993 = vld [vmem:[%s8] sm:$0xf]
        %v1994 = vld [vmem:[%s8 + $0x4] sm:$0xf]
        %v1995 = vld [vmem:[%s8 + $0x8] sm:$0xf]
        %v1996 = vld [vmem:[%s8 + $0xc] sm:$0xf]
        %v1997 = vpack.c.bf16 %v1984, %v1983
        %v1998 = vpack.c.bf16 %v1992, %v1991
        %v1999 = vld [vmem:[%s9] sm:$0xff]
        %v2000 = vld [vmem:[%s9 + $0x8] sm:$0xff]
        %v2001 = vld [vmem:[%s9 + $0x10] sm:$0xff]
        %v2002 = vld [vmem:[%s9 + $0x18] sm:$0xff]
        %2004 = vset.pattern.permute.xlu0 0
        %2005 = vperm.xlu0 %2004, %v1999
        %v2006 = vpop.permute.xlu0 %2005
        %2009 = vset.pattern.permute.xlu0 0
        %2010 = vperm.xlu0 %2009, %v2000
        %v2011 = vpop.permute.xlu0 %2010
        %2014 = vset.pattern.permute.xlu0 0
        %2015 = vperm.xlu0 %2014, %v2001
        %v2016 = vpop.permute.xlu0 %2015
        %2019 = vset.pattern.permute.xlu0 0
        %2020 = vperm.xlu0 %2019, %v2002
        %v2021 = vpop.permute.xlu0 %2020
        %v2027 = vunpack.c.l.b16 %v1993
        %v2028 = vunpack.c.l.b16 %v1994
        %v2029 = vunpack.c.l.b16 %v1995
        %v2030 = vunpack.c.l.b16 %v1996
        %v2031 = vpack.c.b16 %v2028, %v2027
        %v2032 = vpack.c.b16 %v2030, %v2029
        %v2034 = vsel %vm653, %v2031, 0
        %v2037 = vsel %vm653, %v2032, 0
        %2039 = vmatprep.subr.bf16.mxu0 0
        %2040 = vmatpush1.bf16.msra.mxu0 %v1997
        %2041 = vmatprep.subr.bf16.mxu0 0
        %2042 = vmatpush1.bf16.msra.mxu0 %v1998
        %2043 = vmatprep.subr.bf16.mxu0 0
        %2044 = vmatpush1.bf16.msra.mxu0 0
        %2045 = vmatprep.subr.bf16.mxu0 0
        %2046 = vmatpush1.bf16.msra.mxu0 0
        %2047 = vmatprep.subr.bf16.mxu0 0
        %2048 = vmatpush1.bf16.msra.mxu0 0
        %2049 = vmatprep.subr.bf16.mxu0 0
        %2050 = vmatpush1.bf16.msra.mxu0 0
        %2051 = vmatprep.subr.bf16.mxu0 0
        %2052 = vmatpush1.bf16.msra.mxu0 0
        %2053 = vmatprep.subr.bf16.mxu0 0
        %2054 = vmatpush1.bf16.msra.mxu0 0
        %2055 = vmatprep.subr.bf16.mxu0 0
        %2056 = vmatpush1.bf16.msra.mxu0 0
        %2057 = vmatprep.subr.bf16.mxu0 0
        %2058 = vmatpush1.bf16.msra.mxu0 0
        %2059 = vmatprep.subr.bf16.mxu0 0
        %2060 = vmatpush1.bf16.msra.mxu0 0
        %2061 = vmatprep.subr.bf16.mxu0 0
        %2062 = vmatpush1.bf16.msra.mxu0 0
        %2063 = vmatprep.subr.bf16.mxu0 0
        %2064 = vmatpush1.bf16.msra.mxu0 0
        %2065 = vmatprep.subr.bf16.mxu0 0
        %2066 = vmatpush1.bf16.msra.mxu0 0
        %2067 = vmatprep.subr.bf16.mxu0 0
        %2068 = vmatpush1.bf16.msra.mxu0 0
        %2069 = vmatprep.subr.bf16.mxu0 0
        %2070 = vmatpush1.bf16.msra.mxu0 0
        %2071 = vmatprep.mubr.bf16.mxu0 0
        %2072 = vmatmul.mubr.bf16.gmra.mrb[0].mxu0 %v2034
        %v2073 = vpop.f32.mrb[0].mxu0
        %v2074 = vadd.f32 %v2006, %v2073
        %v2075 = vpop.f32.mrb[0].mxu0
        %v2076 = vpop.f32.mrb[0].mxu0
        %v2077 = vadd.f32 %v2011, %v2076
        %v2078 = vpop.f32.mrb[0].mxu0
        %2079 = vmatprep.mubr.bf16.mxu0 0
        %2080 = vmatmul.mubr.bf16.gmra.mrb[0].mxu0 %v2037
        %v2081 = vpop.f32.mrb[0].mxu0
        %v2082 = vadd.f32 %v2016, %v2081
        %v2083 = vpop.f32.mrb[0].mxu0
        %v2084 = vpop.f32.mrb[0].mxu0
        %v2085 = vadd.f32 %v2021, %v2084
        %v2086 = vpop.f32.mrb[0].mxu0
        %2087 = vdwg.mxu0
        %v2088 = vld [vmem:[%s588] sm:$0x1]
        %vm2089 = vcmp.gt.f32.partialorder %v2088, 0.5
        %v2090 = vsel %vm2089, 1, 0
        %v2091 = vlaneseq
        %v2092 = vshrl.u32 %v2091, 7
        %v2093 = vsub.s32 0, %v2092
        %v2094 = vrot.slane %v2090, %v2093
        %vm2095 = vcmp.eq.s32.totalorder %v2094, 1
        %v2096 = vsel %vm2095, 0.0, %v2074
        %v2097 = vsel %vm2095, 0.0, %v2077
        %v2098 = vsel %vm2095, 0.0, %v2082
        %v2099 = vsel %vm2095, 0.0, %v2085
        %v2100 = vld [vmem:[%s10] sm:$0xf]
        %v2101 = vld [vmem:[%s10 + $0x4] sm:$0xf]
        %v2102 = vld [vmem:[%s10 + $0x8] sm:$0xf]
        %v2103 = vld [vmem:[%s10 + $0xc] sm:$0xf]
        %v2104 = vld [vmem:[%s11] sm:$0xff]
        %v2105 = vld [vmem:[%s11 + $0x8] sm:$0xff]
        %v2106 = vld [vmem:[%s11 + $0x10] sm:$0xff]
        %v2107 = vld [vmem:[%s11 + $0x18] sm:$0xff]
        %2109 = vset.pattern.permute.xlu0 0
        %2110 = vperm.xlu0 %2109, %v2104
        %v2111 = vpop.permute.xlu0 %2110
        %2114 = vset.pattern.permute.xlu0 0
        %2115 = vperm.xlu0 %2114, %v2105
        %v2116 = vpop.permute.xlu0 %2115
        %2119 = vset.pattern.permute.xlu0 0
        %2120 = vperm.xlu0 %2119, %v2106
        %v2121 = vpop.permute.xlu0 %2120
        %2124 = vset.pattern.permute.xlu0 0
        %2125 = vperm.xlu0 %2124, %v2107
        %v2126 = vpop.permute.xlu0 %2125
        %v2132 = vunpack.c.l.b16 %v2100
        %v2133 = vunpack.c.l.b16 %v2101
        %v2134 = vunpack.c.l.b16 %v2102
        %v2135 = vunpack.c.l.b16 %v2103
        %v2136 = vpack.c.b16 %v2133, %v2132
        %v2137 = vpack.c.b16 %v2135, %v2134
        %v2139 = vsel %vm653, %v2136, 0
        %v2142 = vsel %vm653, %v2137, 0
        %2144 = vmatprep.subr.bf16.mxu0 0
        %2145 = vmatpush1.bf16.msra.mxu0 %v1325
        %2146 = vmatprep.subr.bf16.mxu0 0
        %2147 = vmatpush1.bf16.msra.mxu0 %v1326
        %2148 = vmatprep.subr.bf16.mxu0 0
        %2149 = vmatpush1.bf16.msra.mxu0 0
        %2150 = vmatprep.subr.bf16.mxu0 0
        %2151 = vmatpush1.bf16.msra.mxu0 0
        %2152 = vmatprep.subr.bf16.mxu0 0
        %2153 = vmatpush1.bf16.msra.mxu0 0
        %2154 = vmatprep.subr.bf16.mxu0 0
        %2155 = vmatpush1.bf16.msra.mxu0 0
        %2156 = vmatprep.subr.bf16.mxu0 0
        %2157 = vmatpush1.bf16.msra.mxu0 0
        %2158 = vmatprep.subr.bf16.mxu0 0
        %2159 = vmatpush1.bf16.msra.mxu0 0
        %2160 = vmatprep.subr.bf16.mxu0 0
        %2161 = vmatpush1.bf16.msra.mxu0 0
        %2162 = vmatprep.subr.bf16.mxu0 0
        %2163 = vmatpush1.bf16.msra.mxu0 0
        %2164 = vmatprep.subr.bf16.mxu0 0
        %2165 = vmatpush1.bf16.msra.mxu0 0
        %2166 = vmatprep.subr.bf16.mxu0 0
        %2167 = vmatpush1.bf16.msra.mxu0 0
        %2168 = vmatprep.subr.bf16.mxu0 0
        %2169 = vmatpush1.bf16.msra.mxu0 0
        %2170 = vmatprep.subr.bf16.mxu0 0
        %2171 = vmatpush1.bf16.msra.mxu0 0
        %2172 = vmatprep.subr.bf16.mxu0 0
        %2173 = vmatpush1.bf16.msra.mxu0 0
        %2174 = vmatprep.subr.bf16.mxu0 0
        %2175 = vmatpush1.bf16.msra.mxu0 0
        %2176 = vmatprep.mubr.bf16.mxu0 0
        %2177 = vmatmul.mubr.bf16.gmra.mrb[0].mxu0 %v2139
        %v2178 = vpop.f32.mrb[0].mxu0
        %v2179 = vadd.f32 %v2111, %v2178
        %v2180 = vpop.f32.mrb[0].mxu0
        %v2181 = vpop.f32.mrb[0].mxu0
        %v2182 = vadd.f32 %v2116, %v2181
        %v2183 = vpop.f32.mrb[0].mxu0
        %2184 = vmatprep.mubr.bf16.mxu0 0
        %2185 = vmatmul.mubr.bf16.gmra.mrb[0].mxu0 %v2142
        %v2186 = vpop.f32.mrb[0].mxu0
        %v2187 = vadd.f32 %v2121, %v2186
        %v2188 = vpop.f32.mrb[0].mxu0
        %v2189 = vpop.f32.mrb[0].mxu0
        %v2190 = vadd.f32 %v2126, %v2189
        %v2191 = vpop.f32.mrb[0].mxu0
        %2192 = vdwg.mxu0
        %v2193 = vadd.f32 %v2096, %v2179
        %v2194 = vadd.f32 %v2097, %v2182
        %v2195 = vadd.f32 %v2098, %v2187
        %v2196 = vadd.f32 %v2099, %v2190
        %v2197 = vmax.f32 %v2193, 0.0
        %v2198 = vmax.f32 %v2194, 0.0
        %v2199 = vmax.f32 %v2195, 0.0
        %v2200 = vmax.f32 %v2196, 0.0
        %v2201 = vld [vmem:[%s12] sm:$0xf]
        %v2202 = vld [vmem:[%s12 + $0x4] sm:$0xf]
        %v2203 = vld [vmem:[%s12 + $0x8] sm:$0xf]
        %v2204 = vld [vmem:[%s12 + $0xc] sm:$0xf]
        %v2205 = vpack.c.bf16 %v2198, %v2197
        %v2206 = vpack.c.bf16 %v2200, %v2199
        %v2207 = vld [vmem:[%s13] sm:$0xff]
        %v2208 = vld [vmem:[%s13 + $0x8] sm:$0xff]
        %v2209 = vld [vmem:[%s13 + $0x10] sm:$0xff]
        %v2210 = vld [vmem:[%s13 + $0x18] sm:$0xff]
        %2212 = vset.pattern.permute.xlu0 0
        %2213 = vperm.xlu0 %2212, %v2207
        %v2214 = vpop.permute.xlu0 %2213
        %2217 = vset.pattern.permute.xlu0 0
        %2218 = vperm.xlu0 %2217, %v2208
        %v2219 = vpop.permute.xlu0 %2218
        %2222 = vset.pattern.permute.xlu0 0
        %2223 = vperm.xlu0 %2222, %v2209
        %v2224 = vpop.permute.xlu0 %2223
        %2227 = vset.pattern.permute.xlu0 0
        %2228 = vperm.xlu0 %2227, %v2210
        %v2229 = vpop.permute.xlu0 %2228
        %v2235 = vunpack.c.l.b16 %v2201
        %v2236 = vunpack.c.l.b16 %v2202
        %v2237 = vunpack.c.l.b16 %v2203
        %v2238 = vunpack.c.l.b16 %v2204
        %v2239 = vpack.c.b16 %v2236, %v2235
        %v2240 = vpack.c.b16 %v2238, %v2237
        %v2242 = vsel %vm653, %v2239, 0
        %v2245 = vsel %vm653, %v2240, 0
        %2247 = vmatprep.subr.bf16.mxu0 0
        %2248 = vmatpush1.bf16.msra.mxu0 %v2205
        %2249 = vmatprep.subr.bf16.mxu0 0
        %2250 = vmatpush1.bf16.msra.mxu0 %v2206
        %2251 = vmatprep.subr.bf16.mxu0 0
        %2252 = vmatpush1.bf16.msra.mxu0 0
        %2253 = vmatprep.subr.bf16.mxu0 0
        %2254 = vmatpush1.bf16.msra.mxu0 0
        %2255 = vmatprep.subr.bf16.mxu0 0
        %2256 = vmatpush1.bf16.msra.mxu0 0
        %2257 = vmatprep.subr.bf16.mxu0 0
        %2258 = vmatpush1.bf16.msra.mxu0 0
        %2259 = vmatprep.subr.bf16.mxu0 0
        %2260 = vmatpush1.bf16.msra.mxu0 0
        %2261 = vmatprep.subr.bf16.mxu0 0
        %2262 = vmatpush1.bf16.msra.mxu0 0
        %2263 = vmatprep.subr.bf16.mxu0 0
        %2264 = vmatpush1.bf16.msra.mxu0 0
        %2265 = vmatprep.subr.bf16.mxu0 0
        %2266 = vmatpush1.bf16.msra.mxu0 0
        %2267 = vmatprep.subr.bf16.mxu0 0
        %2268 = vmatpush1.bf16.msra.mxu0 0
        %2269 = vmatprep.subr.bf16.mxu0 0
        %2270 = vmatpush1.bf16.msra.mxu0 0
        %2271 = vmatprep.subr.bf16.mxu0 0
        %2272 = vmatpush1.bf16.msra.mxu0 0
        %2273 = vmatprep.subr.bf16.mxu0 0
        %2274 = vmatpush1.bf16.msra.mxu0 0
        %2275 = vmatprep.subr.bf16.mxu0 0
        %2276 = vmatpush1.bf16.msra.mxu0 0
        %2277 = vmatprep.subr.bf16.mxu0 0
        %2278 = vmatpush1.bf16.msra.mxu0 0
        %2279 = vmatprep.mubr.bf16.mxu0 0
        %2280 = vmatmul.mubr.bf16.gmra.mrb[0].mxu0 %v2242
        %v2281 = vpop.f32.mrb[0].mxu0
        %v2282 = vadd.f32 %v2214, %v2281
        %v2283 = vpop.f32.mrb[0].mxu0
        %v2284 = vpop.f32.mrb[0].mxu0
        %v2285 = vadd.f32 %v2219, %v2284
        %v2286 = vpop.f32.mrb[0].mxu0
        %2287 = vmatprep.mubr.bf16.mxu0 0
        %2288 = vmatmul.mubr.bf16.gmra.mrb[0].mxu0 %v2245
        %v2289 = vpop.f32.mrb[0].mxu0
        %v2290 = vadd.f32 %v2224, %v2289
        %v2291 = vpop.f32.mrb[0].mxu0
        %v2292 = vpop.f32.mrb[0].mxu0
        %v2293 = vadd.f32 %v2229, %v2292
        %v2294 = vpop.f32.mrb[0].mxu0
        %2295 = vdwg.mxu0
        %2296 = vst [vmem:[%s581] sm:$0xff] %v2282
        %2297 = vst [vmem:[%s581 + $0x8] sm:$0xff] %v2285
        %2298 = vst [vmem:[%s581 + $0x10] sm:$0xff] %v2290
        %2299 = vst [vmem:[%s581 + $0x18] sm:$0xff] %v2293
        %s2300 = sand.u32 %s353, 1
        %s2301 = scalar_lea.sflag [#allocation4], %s2300
        %s2302 = sand.u32 %s353, 1
        %s2303 = smul.addr %s2302, 32
        %s2304 = scalar_lea.vmem [#allocation6], %s2303
        // Predicated region
        $region122: #{tpu_custom_call.1} parent=112 // pred_check
          %p2305 = pneg %p363
        $region123: #{tpu_custom_call.1} parent=112 // pred_check_branch
          %2307 = sbr.rel (%p2305) target = $region125
        $region124: #{tpu_custom_call.1} parent=112 // pred_region
          %s2309 = ssub.s32 512, 512
          %2310 = vsyncadd %s2301, %s2309
          %s2311 = smul.addr %s31, 128
          %s2312 = scalar_lea.hbm %s14, %s2311
          %s2313 = sshll.u32 %s2304, 4
          %s2314 = int_to_ptr.vmem [resolvable:$true] %s2313
          %2319 = dma.vmem_to_hbm [thread:$0]  %s2314, 512, %s2312, %s2301, 128, 256, 8
        $region125: #{tpu_custom_call.1} parent=112 // pred_fallthru
          _
      $region113: #{tpu_custom_call.1} parent=5 // pred_fallthru
        _
      %p2320 = scmp.le.s32.totalorder 2, %s26
      // Predicated region
      $region126: #{tpu_custom_call.1} parent=5 // pred_check
        %p2321 = pneg %p2320
      $region127: #{tpu_custom_call.1} parent=5 // pred_check_branch
        %2323 = sbr.rel (%p2321) target = $region129
      $region128: #{tpu_custom_call.1} parent=5 // pred_region
        %s2324 = ssub.s32 %s26, 2
        // Predicated region
        $region130: #{tpu_custom_call.1} parent=128 // pred_check
          %p2325 = pneg %p369
        $region131: #{tpu_custom_call.1} parent=128 // pred_check_branch
          %2327 = sbr.rel (%p2325) target = $region133
        $region132: #{tpu_custom_call.1} parent=128 // pred_region
          %s2328 = sand.u32 %s354, 1
          %s2329 = scalar_lea.sflag [#allocation4], %s2328
          %s2330 = sand.u32 %s354, 1
          %s2331 = smul.addr %s2330, 32
          %s2332 = scalar_lea.vmem [#allocation6], %s2331
          %2333 = dma.done %s2329, 512
        $region133: #{tpu_custom_call.1} parent=128 // pred_fallthru
          _
      $region129: #{tpu_custom_call.1} parent=5 // pred_fallthru
        _
    $region6: #{tpu_custom_call.1} parent=1 // loop_footer
      %s30 = sadd.s32 1, %s26
    $region7: #{tpu_custom_call.1} parent=1 // loop_footer_branch
      %25 = sbr.rel target = $region3
    $region8: #{tpu_custom_call.1} parent=1 // loop_exit
      _
    %2334 = vsyncpa [#allocation3], 1
    %s2335 = scalar_lea.sflag [#allocation3], 1
    %2336 = vsyncpa %s2335, 1
    %2337 = vsyncpa [#allocation4], 1
    %s2338 = scalar_lea.sflag [#allocation4], 1
    %2339 = vsyncpa %s2338, 1

</llo_original>
